<compile_context>
chip_gen: v5e
topology: v5e:2x2
jax: 0.10.0
libtpu: 0.0.40
codegen_flags: <defaults>
</compile_context>

<pallas_src>
import functools

import jax
import jax.numpy as jnp
import numpy as np
from jax import lax
from jax.experimental import pallas as pl
from jax.experimental.pallas import tpu as pltpu

NEG_SLOPE = 0.01  # F.leaky_relu default negative_slope


# ----------------------------------------------------------------------------
# Fused kernel: conv1+pool -> conv2+pool -> fc1 -> fc2 -> fc3 for TB images
# ----------------------------------------------------------------------------
def _lenet_kernel(x_ref, t1_ref, b1_ref, t2_ref, b2_ref, u1_ref, bf1_ref,
                  w2_ref, bf2_ref, w3_ref, bf3_ref, o_ref,
                  act1_ref, act2_ref, *, tb):
    # ---- conv1: 5 banded row-tap matmuls + bias + leaky_relu + 2x2/2 pool ---
    # x lanes: 3*w_in + c (w_in<32, c<3); output lanes: 128*(w%2)+8*(w//2)+o.
    acc = jnp.zeros((tb * 28, 256), jnp.float32)
    for i in range(5):
        xi = x_ref[:, i:i + 28, :].reshape(tb * 28, 128).astype(jnp.bfloat16)
        acc += jnp.dot(xi, t1_ref[i], preferred_element_type=jnp.float32)
    acc += b1_ref[...]
    acc = jnp.where(acc > 0, acc, NEG_SLOPE * acc)
    acc = acc.reshape(tb, 14, 2, 256).max(axis=2)                 # pool over h
    act1_ref[...] = jnp.maximum(acc[:, :, :128], acc[:, :, 128:])  # pool over w
    # act1 lanes: 8*w' + o  (w'<14, o<6), unused lanes exactly 0.

    # ---- conv2: same scheme on the VMEM-resident pooled activation ----------
    acc = jnp.zeros((tb * 10, 256), jnp.float32)
    for i in range(5):
        yi = act1_ref[:, i:i + 10, :].reshape(tb * 10, 128).astype(jnp.bfloat16)
        acc += jnp.dot(yi, t2_ref[i], preferred_element_type=jnp.float32)
    acc += b2_ref[...]
    acc = jnp.where(acc > 0, acc, NEG_SLOPE * acc)
    acc = acc.reshape(tb, 5, 2, 256).max(axis=2)                  # pool over h
    act2_ref[...] = jnp.maximum(acc[:, :, :128], acc[:, :, 128:])  # pool over w
    # act2 lanes: 16*w3 + p  (w3<5, p<16).

    # ---- fc1 (torch.flatten ordering folded into u1) -> fc2 -> fc3 ----------
    h = jnp.zeros((tb, 128), jnp.float32)
    for r in range(5):                                   # r = pooled h3 row
        hr = act2_ref[:, r, :].astype(jnp.bfloat16)
        h += jnp.dot(hr, u1_ref[r], preferred_element_type=jnp.float32)
    h += bf1_ref[...]
    h = jnp.where(h > 0, h, NEG_SLOPE * h)
    h = jnp.dot(h.astype(jnp.bfloat16), w2_ref[...],
                preferred_element_type=jnp.float32) + bf2_ref[...]
    h = jnp.where(h > 0, h, NEG_SLOPE * h)
    h = jnp.dot(h.astype(jnp.bfloat16), w3_ref[...],
                preferred_element_type=jnp.float32) + bf3_ref[...]
    o_ref[0] = h                                          # (tb, 128) f32


# ----------------------------------------------------------------------------
# Wrapper
# ----------------------------------------------------------------------------
def _pick_tile(batch):
    if batch <= 1:
        return 1
    # >= 2 grid steps (feeds both v7x TensorCores), cap TB for VMEM headroom.
    return max(1, min(32, batch // 2))


def pack_input(x_nchw):
    """NCHW f32 -> (B, 32, 128) with lane = 3*w + c (zero-padded 96->128)."""
    x = jnp.transpose(x_nchw, (0, 2, 3, 1))               # (B, 32, 32, 3)
    b, h, w, c = x.shape
    x = x.reshape(b, h, w * c)
    x = jnp.pad(x, ((0, 0), (0, 0), (0, 128 - w * c)))
    return x.astype(jnp.float32)


def cnn_lerelu_forward(x_nchw, pp):
    B = x_nchw.shape[0]
    assert x_nchw.shape[1:] == (3, 32, 32), "LeNet geometry needs 3x32x32 input"
    xp = pack_input(x_nchw)                               # (B, 32, 128)
    tb = _pick_tile(B)
    nsteps = pl.cdiv(B, tb)
    bp = nsteps * tb
    if bp != B:
        xp = jnp.pad(xp, ((0, bp - B), (0, 0), (0, 0)))

    kernel = functools.partial(_lenet_kernel, tb=tb)
    out = pl.pallas_call(
        kernel,
        out_shape=jax.ShapeDtypeStruct((nsteps, tb, 128), jnp.float32),
        grid=(nsteps,),
        in_specs=[
            pl.BlockSpec((tb, 32, 128), lambda b: (b, 0, 0)),   # image tile
            pl.BlockSpec((5, 128, 256), lambda b: (0, 0, 0)),   # conv1 taps
            pl.BlockSpec((1, 256), lambda b: (0, 0)),           # conv1 bias
            pl.BlockSpec((5, 128, 256), lambda b: (0, 0, 0)),   # conv2 taps
            pl.BlockSpec((1, 256), lambda b: (0, 0)),           # conv2 bias
            pl.BlockSpec((5, 128, 128), lambda b: (0, 0, 0)),   # fc1 slices
            pl.BlockSpec((1, 128), lambda b: (0, 0)),           # fc1 bias
            pl.BlockSpec((128, 128), lambda b: (0, 0)),         # fc2 weight
            pl.BlockSpec((1, 128), lambda b: (0, 0)),           # fc2 bias
            pl.BlockSpec((128, 128), lambda b: (0, 0)),         # fc3 weight
            pl.BlockSpec((1, 128), lambda b: (0, 0)),           # fc3 bias
        ],
        out_specs=pl.BlockSpec((1, tb, 128), lambda b: (b, 0, 0)),
        scratch_shapes=[
            pltpu.VMEM((tb, 14, 128), jnp.float32),   # pooled conv1 activation
            pltpu.VMEM((tb, 5, 128), jnp.float32),    # pooled conv2 activation
        ],
        compiler_params=pltpu.CompilerParams(
            dimension_semantics=("parallel",),
            vmem_limit_bytes=32 * 1024 * 1024,
        ),
    )(xp, pp["t1"], pp["b1"], pp["t2"], pp["b2"], pp["u1"], pp["bf1"],
      pp["w2fc"], pp["bf2"], pp["w3fc"], pp["bf3"])
    return out.reshape(bp, 128)[:B, :10]


# ----------------------------------------------------------------------------
# Parameter preparation (done ONCE, outside jit): banded Toeplitz weights
# ----------------------------------------------------------------------------
def prepare_params(p):
    W1 = np.asarray(p["conv1_w"], np.float32)   # (6, 3, 5, 5)
    b1 = np.asarray(p["conv1_b"], np.float32)
    W2 = np.asarray(p["conv2_w"], np.float32)   # (16, 6, 5, 5)
    b2 = np.asarray(p["conv2_b"], np.float32)
    F1 = np.asarray(p["fc1_w"], np.float32)     # (120, 400)
    F2 = np.asarray(p["fc2_w"], np.float32)     # (84, 120)
    F3 = np.asarray(p["fc3_w"], np.float32)     # (10, 84)

    # conv1: input lane 3*w_in + c; output lane 128*(w%2) + 8*(w//2) + o.
    t1 = np.zeros((5, 128, 256), np.float32)
    b1l = np.zeros((1, 256), np.float32)
    for w in range(28):
        lam = 128 * (w % 2) + 8 * (w // 2)
        b1l[0, lam:lam + 6] = b1
        for i in range(5):
            for j in range(5):
                for c in range(3):
                    t1[i, 3 * (w + j) + c, lam:lam + 6] = W1[:, c, i, j]

    # conv2: input lane 8*w1 + o; output lane 128*(w2%2) + 16*(w2//2) + p.
    t2 = np.zeros((5, 128, 256), np.float32)
    b2l = np.zeros((1, 256), np.float32)
    for w2 in range(10):
        nu = 128 * (w2 % 2) + 16 * (w2 // 2)
        b2l[0, nu:nu + 16] = b2
        for i in range(5):
            for j in range(5):
                for o in range(6):
                    t2[i, 8 * (w2 + j) + o, nu:nu + 16] = W2[:, o, i, j]

    # fc1: act2 lane 16*w3 + p ; torch.flatten feature index p*25 + h3*5 + w3.
    u1 = np.zeros((5, 128, 128), np.float32)
    for h3 in range(5):
        for w3 in range(5):
            for ch in range(16):
                u1[h3, 16 * w3 + ch, :120] = F1[:, ch * 25 + h3 * 5 + w3]

    w2fc = np.zeros((128, 128), np.float32)
    w2fc[:120, :84] = F2.T
    w3fc = np.zeros((128, 128), np.float32)
    w3fc[:84, :10] = F3.T

    def padb(bias):
        out = np.zeros((1, 128), np.float32)
        out[0, :bias.shape[0]] = bias
        return out

    return {
        "t1": jnp.asarray(t1, jnp.bfloat16), "b1": jnp.asarray(b1l),
        "t2": jnp.asarray(t2, jnp.bfloat16), "b2": jnp.asarray(b2l),
        "u1": jnp.asarray(u1, jnp.bfloat16),
        "bf1": jnp.asarray(padb(np.asarray(p["fc1_b"], np.float32))),
        "w2fc": jnp.asarray(w2fc, jnp.bfloat16),
        "bf2": jnp.asarray(padb(np.asarray(p["fc2_b"], np.float32))),
        "w3fc": jnp.asarray(w3fc, jnp.bfloat16),
        "bf3": jnp.asarray(padb(np.asarray(p["fc3_b"], np.float32))),
    }


# ----------------------------------------------------------------------------
# Reference (pure JAX, PyTorch layout) + params
# ----------------------------------------------------------------------------
def ref_forward(x, p):
    def lrelu(t):
        return jnp.where(t > 0, t, NEG_SLOPE * t)

    def conv(t, w, b):
        y = lax.conv_general_dilated(t, w, (1, 1), "VALID",
                                     dimension_numbers=("NCHW", "OIHW", "NCHW"))
        return y + b[None, :, None, None]

    def pool(t):
        return lax.reduce_window(t, -jnp.inf, lax.max,
                                 (1, 1, 2, 2), (1, 1, 2, 2), "VALID")

    x = pool(lrelu(conv(x, p["conv1_w"], p["conv1_b"])))
    x = pool(lrelu(conv(x, p["conv2_w"], p["conv2_b"])))
    x = x.reshape(x.shape[0], -1)
    x = lrelu(x @ p["fc1_w"].T + p["fc1_b"])
    x = lrelu(x @ p["fc2_w"].T + p["fc2_b"])
    return x @ p["fc3_w"].T + p["fc3_b"]


def init_params(key):
    ks = jax.random.split(key, 10)
    scale = 0.1
    return {
        "conv1_w": scale * jax.random.normal(ks[0], (6, 3, 5, 5), jnp.float32),
        "conv1_b": scale * jax.random.normal(ks[1], (6,), jnp.float32),
        "conv2_w": scale * jax.random.normal(ks[2], (16, 6, 5, 5), jnp.float32),
        "conv2_b": scale * jax.random.normal(ks[3], (16,), jnp.float32),
        "fc1_w": scale * jax.random.normal(ks[4], (120, 400), jnp.float32),
        "fc1_b": scale * jax.random.normal(ks[5], (120,), jnp.float32),
        "fc2_w": scale * jax.random.normal(ks[6], (84, 120), jnp.float32),
        "fc2_b": scale * jax.random.normal(ks[7], (84,), jnp.float32),
        "fc3_w": scale * jax.random.normal(ks[8], (10, 84), jnp.float32),
        "fc3_b": scale * jax.random.normal(ks[9], (10,), jnp.float32),
    }


if __name__ == "__main__":
    key = jax.random.PRNGKey(0)
    k_x, k_p = jax.random.split(key)
    # LeNet geometry requires 32x32 spatial input (-> 16*5*5 = 400 before fc1).
    x = jax.random.normal(k_x, (2, 3, 32, 32), jnp.float32)
    raw_params = init_params(k_p)
    params = prepare_params(raw_params)      # one-time fold/pad, outside jit

    fwd = jax.jit(cnn_lerelu_forward)
    out = fwd(x, params)
    jax.block_until_ready(out)
    assert out.shape == (2, 10), out.shape

    # Correctness vs pure-JAX f32 reference (kernel matmuls use bf16 operands
    # with f32 accumulation, hence the loose tolerance).
    ref = jax.jit(ref_forward)(x, raw_params)
    np.testing.assert_allclose(np.asarray(out), np.asarray(ref),
                               rtol=0.1, atol=0.2)
    print("KERNEL_OK")
</pallas_src>

<mosaic_0001>
module attributes {stable_mosaic.version = 11 : i64} {
  func.func @_lenet_kernel(%arg0: i32, %arg1: memref<1x32x128xf32, #tpu.memory_space<vmem>>, %arg2: memref<5x128x256xbf16, #tpu.memory_space<vmem>>, %arg3: memref<1x256xf32, #tpu.memory_space<vmem>>, %arg4: memref<5x128x256xbf16, #tpu.memory_space<vmem>>, %arg5: memref<1x256xf32, #tpu.memory_space<vmem>>, %arg6: memref<5x128x128xbf16, #tpu.memory_space<vmem>>, %arg7: memref<1x128xf32, #tpu.memory_space<vmem>>, %arg8: memref<128x128xbf16, #tpu.memory_space<vmem>>, %arg9: memref<1x128xf32, #tpu.memory_space<vmem>>, %arg10: memref<128x128xbf16, #tpu.memory_space<vmem>>, %arg11: memref<1x128xf32, #tpu.memory_space<vmem>>, %arg12: memref<1x1x128xf32, #tpu.memory_space<vmem>>, %arg13: memref<1x14x128xf32, #tpu.memory_space<vmem>>, %arg14: memref<1x5x128xf32, #tpu.memory_space<vmem>>) attributes {dimension_semantics = [#tpu.dimension_semantics<parallel>], iteration_bounds = array<i64: 2>, scalar_prefetch = 0 : i64, scratch_operands = 2 : i64, tpu.core_type = #tpu.core_type<tc>, window_params = [{transform_indices = @transform_0, window_bounds = array<i64: 1, 32, 128>}, {pipeline_mode = #tpu.pipeline_mode<synchronous>, transform_indices = @transform_1, window_bounds = array<i64: 5, 128, 256>}, {pipeline_mode = #tpu.pipeline_mode<synchronous>, transform_indices = @transform_2, window_bounds = array<i64: 1, 256>}, {pipeline_mode = #tpu.pipeline_mode<synchronous>, transform_indices = @transform_3, window_bounds = array<i64: 5, 128, 256>}, {pipeline_mode = #tpu.pipeline_mode<synchronous>, transform_indices = @transform_4, window_bounds = array<i64: 1, 256>}, {pipeline_mode = #tpu.pipeline_mode<synchronous>, transform_indices = @transform_5, window_bounds = array<i64: 5, 128, 128>}, {pipeline_mode = #tpu.pipeline_mode<synchronous>, transform_indices = @transform_6, window_bounds = array<i64: 1, 128>}, {pipeline_mode = #tpu.pipeline_mode<synchronous>, transform_indices = @transform_7, window_bounds = array<i64: 128, 128>}, {pipeline_mode = #tpu.pipeline_mode<synchronous>, transform_indices = @transform_8, window_bounds = array<i64: 1, 128>}, {pipeline_mode = #tpu.pipeline_mode<synchronous>, transform_indices = @transform_9, window_bounds = array<i64: 128, 128>}, {pipeline_mode = #tpu.pipeline_mode<synchronous>, transform_indices = @transform_10, window_bounds = array<i64: 1, 128>}, {transform_indices = @transform_11, window_bounds = array<i64: 1, 1, 128>}]} {
    %cst = arith.constant 0.000000e+00 : f32
    %0 = vector.broadcast %cst : f32 to vector<28x256xf32>
    %c0 = arith.constant 0 : index
    %c0_0 = arith.constant 0 : index
    %c0_1 = arith.constant 0 : index
    %1 = vector.load %arg1[%c0, %c0_0, %c0_1] : memref<1x32x128xf32, #tpu.memory_space<vmem>>, vector<1x28x128xf32>
    %2 = vector.shape_cast %1 : vector<1x28x128xf32> to vector<28x128xf32>
    %3 = arith.truncf %2 : vector<28x128xf32> to vector<28x128xbf16>
    %c0_2 = arith.constant 0 : index
    %c0_3 = arith.constant 0 : index
    %c0_4 = arith.constant 0 : index
    %4 = vector.load %arg2[%c0_2, %c0_3, %c0_4] : memref<5x128x256xbf16, #tpu.memory_space<vmem>>, vector<1x128x256xbf16>
    %5 = vector.shape_cast %4 : vector<1x128x256xbf16> to vector<128x256xbf16>
    %cst_5 = arith.constant dense<0.000000e+00> : vector<28x256xf32>
    %6 = tpu.matmul %3, %5, %cst_5 {dimension_numbers = #tpu.dot_dimension_numbers<[1], [0], [0], [1], [0, 0, 1, 1], [], []>} : vector<28x128xbf16>, vector<128x256xbf16>, vector<28x256xf32> -> vector<28x256xf32>
    %7 = arith.addf %0, %6 : vector<28x256xf32>
    %c0_6 = arith.constant 0 : index
    %c1 = arith.constant 1 : index
    %c0_7 = arith.constant 0 : index
    %8 = vector.load %arg1[%c0_6, %c1, %c0_7] : memref<1x32x128xf32, #tpu.memory_space<vmem>>, vector<1x28x128xf32>
    %9 = vector.shape_cast %8 : vector<1x28x128xf32> to vector<28x128xf32>
    %10 = arith.truncf %9 : vector<28x128xf32> to vector<28x128xbf16>
    %c1_8 = arith.constant 1 : index
    %c0_9 = arith.constant 0 : index
    %c0_10 = arith.constant 0 : index
    %11 = vector.load %arg2[%c1_8, %c0_9, %c0_10] : memref<5x128x256xbf16, #tpu.memory_space<vmem>>, vector<1x128x256xbf16>
    %12 = vector.shape_cast %11 : vector<1x128x256xbf16> to vector<128x256xbf16>
    %cst_11 = arith.constant dense<0.000000e+00> : vector<28x256xf32>
    %13 = tpu.matmul %10, %12, %cst_11 {dimension_numbers = #tpu.dot_dimension_numbers<[1], [0], [0], [1], [0, 0, 1, 1], [], []>} : vector<28x128xbf16>, vector<128x256xbf16>, vector<28x256xf32> -> vector<28x256xf32>
    %14 = arith.addf %7, %13 : vector<28x256xf32>
    %c0_12 = arith.constant 0 : index
    %c2 = arith.constant 2 : index
    %c0_13 = arith.constant 0 : index
    %15 = vector.load %arg1[%c0_12, %c2, %c0_13] : memref<1x32x128xf32, #tpu.memory_space<vmem>>, vector<1x28x128xf32>
    %16 = vector.shape_cast %15 : vector<1x28x128xf32> to vector<28x128xf32>
    %17 = arith.truncf %16 : vector<28x128xf32> to vector<28x128xbf16>
    %c2_14 = arith.constant 2 : index
    %c0_15 = arith.constant 0 : index
    %c0_16 = arith.constant 0 : index
    %18 = vector.load %arg2[%c2_14, %c0_15, %c0_16] : memref<5x128x256xbf16, #tpu.memory_space<vmem>>, vector<1x128x256xbf16>
    %19 = vector.shape_cast %18 : vector<1x128x256xbf16> to vector<128x256xbf16>
    %cst_17 = arith.constant dense<0.000000e+00> : vector<28x256xf32>
    %20 = tpu.matmul %17, %19, %cst_17 {dimension_numbers = #tpu.dot_dimension_numbers<[1], [0], [0], [1], [0, 0, 1, 1], [], []>} : vector<28x128xbf16>, vector<128x256xbf16>, vector<28x256xf32> -> vector<28x256xf32>
    %21 = arith.addf %14, %20 : vector<28x256xf32>
    %c0_18 = arith.constant 0 : index
    %c3 = arith.constant 3 : index
    %c0_19 = arith.constant 0 : index
    %22 = vector.load %arg1[%c0_18, %c3, %c0_19] : memref<1x32x128xf32, #tpu.memory_space<vmem>>, vector<1x28x128xf32>
    %23 = vector.shape_cast %22 : vector<1x28x128xf32> to vector<28x128xf32>
    %24 = arith.truncf %23 : vector<28x128xf32> to vector<28x128xbf16>
    %c3_20 = arith.constant 3 : index
    %c0_21 = arith.constant 0 : index
    %c0_22 = arith.constant 0 : index
    %25 = vector.load %arg2[%c3_20, %c0_21, %c0_22] : memref<5x128x256xbf16, #tpu.memory_space<vmem>>, vector<1x128x256xbf16>
    %26 = vector.shape_cast %25 : vector<1x128x256xbf16> to vector<128x256xbf16>
    %cst_23 = arith.constant dense<0.000000e+00> : vector<28x256xf32>
    %27 = tpu.matmul %24, %26, %cst_23 {dimension_numbers = #tpu.dot_dimension_numbers<[1], [0], [0], [1], [0, 0, 1, 1], [], []>} : vector<28x128xbf16>, vector<128x256xbf16>, vector<28x256xf32> -> vector<28x256xf32>
    %28 = arith.addf %21, %27 : vector<28x256xf32>
    %c0_24 = arith.constant 0 : index
    %c4 = arith.constant 4 : index
    %c0_25 = arith.constant 0 : index
    %29 = vector.load %arg1[%c0_24, %c4, %c0_25] : memref<1x32x128xf32, #tpu.memory_space<vmem>>, vector<1x28x128xf32>
    %30 = vector.shape_cast %29 : vector<1x28x128xf32> to vector<28x128xf32>
    %31 = arith.truncf %30 : vector<28x128xf32> to vector<28x128xbf16>
    %c4_26 = arith.constant 4 : index
    %c0_27 = arith.constant 0 : index
    %c0_28 = arith.constant 0 : index
    %32 = vector.load %arg2[%c4_26, %c0_27, %c0_28] : memref<5x128x256xbf16, #tpu.memory_space<vmem>>, vector<1x128x256xbf16>
    %33 = vector.shape_cast %32 : vector<1x128x256xbf16> to vector<128x256xbf16>
    %cst_29 = arith.constant dense<0.000000e+00> : vector<28x256xf32>
    %34 = tpu.matmul %31, %33, %cst_29 {dimension_numbers = #tpu.dot_dimension_numbers<[1], [0], [0], [1], [0, 0, 1, 1], [], []>} : vector<28x128xbf16>, vector<128x256xbf16>, vector<28x256xf32> -> vector<28x256xf32>
    %35 = arith.addf %28, %34 : vector<28x256xf32>
    %c0_30 = arith.constant 0 : index
    %c0_31 = arith.constant 0 : index
    %36 = vector.load %arg3[%c0_30, %c0_31] : memref<1x256xf32, #tpu.memory_space<vmem>>, vector<1x256xf32>
    %37 = vector.broadcast %36 : vector<1x256xf32> to vector<28x256xf32>
    %38 = arith.addf %35, %37 : vector<28x256xf32>
    %cst_32 = arith.constant 0.000000e+00 : f32
    %39 = vector.broadcast %cst_32 : f32 to vector<28x256xf32>
    %40 = arith.cmpf ogt, %38, %39 : vector<28x256xf32>
    %cst_33 = arith.constant 0.00999999977 : f32
    %41 = vector.broadcast %cst_33 : f32 to vector<28x256xf32>
    %42 = arith.mulf %41, %38 : vector<28x256xf32>
    %43 = arith.select %40, %38, %42 : vector<28x256xi1>, vector<28x256xf32>
    %44 = vector.shape_cast %43 : vector<28x256xf32> to vector<1x14x2x256xf32>
    %cst_34 = arith.constant dense<0xFF800000> : vector<1x14x256xf32>
    %45 = vector.multi_reduction <maximumf>, %44, %cst_34 [2] : vector<1x14x2x256xf32> to vector<1x14x256xf32>
    %46 = vector.extract_strided_slice %45 {offsets = [0, 0, 0], sizes = [1, 14, 128], strides = [1, 1, 1]} : vector<1x14x256xf32> to vector<1x14x128xf32>
    %47 = vector.extract_strided_slice %45 {offsets = [0, 0, 128], sizes = [1, 14, 128], strides = [1, 1, 1]} : vector<1x14x256xf32> to vector<1x14x128xf32>
    %48 = arith.maximumf %46, %47 : vector<1x14x128xf32>
    %c0_35 = arith.constant 0 : index
    %c0_36 = arith.constant 0 : index
    %c0_37 = arith.constant 0 : index
    %49 = vector.load %arg13[%c0_35, %c0_36, %c0_37] : memref<1x14x128xf32, #tpu.memory_space<vmem>>, vector<1x14x128xf32>
    tpu.vector_store %arg13[%c0_35, %c0_36, %c0_37], %48 {strides = array<i32>} : memref<1x14x128xf32, #tpu.memory_space<vmem>>, vector<1x14x128xf32>,
    %cst_38 = arith.constant 0.000000e+00 : f32
    %50 = vector.broadcast %cst_38 : f32 to vector<10x256xf32>
    %c0_39 = arith.constant 0 : index
    %c0_40 = arith.constant 0 : index
    %c0_41 = arith.constant 0 : index
    %51 = vector.load %arg13[%c0_39, %c0_40, %c0_41] : memref<1x14x128xf32, #tpu.memory_space<vmem>>, vector<1x10x128xf32>
    %52 = vector.shape_cast %51 : vector<1x10x128xf32> to vector<10x128xf32>
    %53 = arith.truncf %52 : vector<10x128xf32> to vector<10x128xbf16>
    %c0_42 = arith.constant 0 : index
    %c0_43 = arith.constant 0 : index
    %c0_44 = arith.constant 0 : index
    %54 = vector.load %arg4[%c0_42, %c0_43, %c0_44] : memref<5x128x256xbf16, #tpu.memory_space<vmem>>, vector<1x128x256xbf16>
    %55 = vector.shape_cast %54 : vector<1x128x256xbf16> to vector<128x256xbf16>
    %cst_45 = arith.constant dense<0.000000e+00> : vector<10x256xf32>
    %56 = tpu.matmul %53, %55, %cst_45 {dimension_numbers = #tpu.dot_dimension_numbers<[1], [0], [0], [1], [0, 0, 1, 1], [], []>} : vector<10x128xbf16>, vector<128x256xbf16>, vector<10x256xf32> -> vector<10x256xf32>
    %57 = arith.addf %50, %56 : vector<10x256xf32>
    %c0_46 = arith.constant 0 : index
    %c1_47 = arith.constant 1 : index
    %c0_48 = arith.constant 0 : index
    %58 = vector.load %arg13[%c0_46, %c1_47, %c0_48] : memref<1x14x128xf32, #tpu.memory_space<vmem>>, vector<1x10x128xf32>
    %59 = vector.shape_cast %58 : vector<1x10x128xf32> to vector<10x128xf32>
    %60 = arith.truncf %59 : vector<10x128xf32> to vector<10x128xbf16>
    %c1_49 = arith.constant 1 : index
    %c0_50 = arith.constant 0 : index
    %c0_51 = arith.constant 0 : index
    %61 = vector.load %arg4[%c1_49, %c0_50, %c0_51] : memref<5x128x256xbf16, #tpu.memory_space<vmem>>, vector<1x128x256xbf16>
    %62 = vector.shape_cast %61 : vector<1x128x256xbf16> to vector<128x256xbf16>
    %cst_52 = arith.constant dense<0.000000e+00> : vector<10x256xf32>
    %63 = tpu.matmul %60, %62, %cst_52 {dimension_numbers = #tpu.dot_dimension_numbers<[1], [0], [0], [1], [0, 0, 1, 1], [], []>} : vector<10x128xbf16>, vector<128x256xbf16>, vector<10x256xf32> -> vector<10x256xf32>
    %64 = arith.addf %57, %63 : vector<10x256xf32>
    %c0_53 = arith.constant 0 : index
    %c2_54 = arith.constant 2 : index
    %c0_55 = arith.constant 0 : index
    %65 = vector.load %arg13[%c0_53, %c2_54, %c0_55] : memref<1x14x128xf32, #tpu.memory_space<vmem>>, vector<1x10x128xf32>
    %66 = vector.shape_cast %65 : vector<1x10x128xf32> to vector<10x128xf32>
    %67 = arith.truncf %66 : vector<10x128xf32> to vector<10x128xbf16>
    %c2_56 = arith.constant 2 : index
    %c0_57 = arith.constant 0 : index
    %c0_58 = arith.constant 0 : index
    %68 = vector.load %arg4[%c2_56, %c0_57, %c0_58] : memref<5x128x256xbf16, #tpu.memory_space<vmem>>, vector<1x128x256xbf16>
    %69 = vector.shape_cast %68 : vector<1x128x256xbf16> to vector<128x256xbf16>
    %cst_59 = arith.constant dense<0.000000e+00> : vector<10x256xf32>
    %70 = tpu.matmul %67, %69, %cst_59 {dimension_numbers = #tpu.dot_dimension_numbers<[1], [0], [0], [1], [0, 0, 1, 1], [], []>} : vector<10x128xbf16>, vector<128x256xbf16>, vector<10x256xf32> -> vector<10x256xf32>
    %71 = arith.addf %64, %70 : vector<10x256xf32>
    %c0_60 = arith.constant 0 : index
    %c3_61 = arith.constant 3 : index
    %c0_62 = arith.constant 0 : index
    %72 = vector.load %arg13[%c0_60, %c3_61, %c0_62] : memref<1x14x128xf32, #tpu.memory_space<vmem>>, vector<1x10x128xf32>
    %73 = vector.shape_cast %72 : vector<1x10x128xf32> to vector<10x128xf32>
    %74 = arith.truncf %73 : vector<10x128xf32> to vector<10x128xbf16>
    %c3_63 = arith.constant 3 : index
    %c0_64 = arith.constant 0 : index
    %c0_65 = arith.constant 0 : index
    %75 = vector.load %arg4[%c3_63, %c0_64, %c0_65] : memref<5x128x256xbf16, #tpu.memory_space<vmem>>, vector<1x128x256xbf16>
    %76 = vector.shape_cast %75 : vector<1x128x256xbf16> to vector<128x256xbf16>
    %cst_66 = arith.constant dense<0.000000e+00> : vector<10x256xf32>
    %77 = tpu.matmul %74, %76, %cst_66 {dimension_numbers = #tpu.dot_dimension_numbers<[1], [0], [0], [1], [0, 0, 1, 1], [], []>} : vector<10x128xbf16>, vector<128x256xbf16>, vector<10x256xf32> -> vector<10x256xf32>
    %78 = arith.addf %71, %77 : vector<10x256xf32>
    %c0_67 = arith.constant 0 : index
    %c4_68 = arith.constant 4 : index
    %c0_69 = arith.constant 0 : index
    %79 = vector.load %arg13[%c0_67, %c4_68, %c0_69] : memref<1x14x128xf32, #tpu.memory_space<vmem>>, vector<1x10x128xf32>
    %80 = vector.shape_cast %79 : vector<1x10x128xf32> to vector<10x128xf32>
    %81 = arith.truncf %80 : vector<10x128xf32> to vector<10x128xbf16>
    %c4_70 = arith.constant 4 : index
    %c0_71 = arith.constant 0 : index
    %c0_72 = arith.constant 0 : index
    %82 = vector.load %arg4[%c4_70, %c0_71, %c0_72] : memref<5x128x256xbf16, #tpu.memory_space<vmem>>, vector<1x128x256xbf16>
    %83 = vector.shape_cast %82 : vector<1x128x256xbf16> to vector<128x256xbf16>
    %cst_73 = arith.constant dense<0.000000e+00> : vector<10x256xf32>
    %84 = tpu.matmul %81, %83, %cst_73 {dimension_numbers = #tpu.dot_dimension_numbers<[1], [0], [0], [1], [0, 0, 1, 1], [], []>} : vector<10x128xbf16>, vector<128x256xbf16>, vector<10x256xf32> -> vector<10x256xf32>
    %85 = arith.addf %78, %84 : vector<10x256xf32>
    %c0_74 = arith.constant 0 : index
    %c0_75 = arith.constant 0 : index
    %86 = vector.load %arg5[%c0_74, %c0_75] : memref<1x256xf32, #tpu.memory_space<vmem>>, vector<1x256xf32>
    %87 = vector.broadcast %86 : vector<1x256xf32> to vector<10x256xf32>
    %88 = arith.addf %85, %87 : vector<10x256xf32>
    %cst_76 = arith.constant 0.000000e+00 : f32
    %89 = vector.broadcast %cst_76 : f32 to vector<10x256xf32>
    %90 = arith.cmpf ogt, %88, %89 : vector<10x256xf32>
    %cst_77 = arith.constant 0.00999999977 : f32
    %91 = vector.broadcast %cst_77 : f32 to vector<10x256xf32>
    %92 = arith.mulf %91, %88 : vector<10x256xf32>
    %93 = arith.select %90, %88, %92 : vector<10x256xi1>, vector<10x256xf32>
    %94 = vector.shape_cast %93 : vector<10x256xf32> to vector<1x5x2x256xf32>
    %cst_78 = arith.constant dense<0xFF800000> : vector<1x5x256xf32>
    %95 = vector.multi_reduction <maximumf>, %94, %cst_78 [2] : vector<1x5x2x256xf32> to vector<1x5x256xf32>
    %96 = vector.extract_strided_slice %95 {offsets = [0, 0, 0], sizes = [1, 5, 128], strides = [1, 1, 1]} : vector<1x5x256xf32> to vector<1x5x128xf32>
    %97 = vector.extract_strided_slice %95 {offsets = [0, 0, 128], sizes = [1, 5, 128], strides = [1, 1, 1]} : vector<1x5x256xf32> to vector<1x5x128xf32>
    %98 = arith.maximumf %96, %97 : vector<1x5x128xf32>
    %c0_79 = arith.constant 0 : index
    %c0_80 = arith.constant 0 : index
    %c0_81 = arith.constant 0 : index
    %99 = vector.load %arg14[%c0_79, %c0_80, %c0_81] : memref<1x5x128xf32, #tpu.memory_space<vmem>>, vector<1x5x128xf32>
    tpu.vector_store %arg14[%c0_79, %c0_80, %c0_81], %98 {strides = array<i32>} : memref<1x5x128xf32, #tpu.memory_space<vmem>>, vector<1x5x128xf32>,
    %cst_82 = arith.constant 0.000000e+00 : f32
    %100 = vector.broadcast %cst_82 : f32 to vector<1x128xf32>
    %c0_83 = arith.constant 0 : index
    %c0_84 = arith.constant 0 : index
    %c0_85 = arith.constant 0 : index
    %101 = vector.load %arg14[%c0_83, %c0_84, %c0_85] : memref<1x5x128xf32, #tpu.memory_space<vmem>>, vector<1x1x128xf32>
    %102 = vector.shape_cast %101 : vector<1x1x128xf32> to vector<1x128xf32>
    %103 = arith.truncf %102 : vector<1x128xf32> to vector<1x128xbf16>
    %c0_86 = arith.constant 0 : index
    %c0_87 = arith.constant 0 : index
    %c0_88 = arith.constant 0 : index
    %104 = vector.load %arg6[%c0_86, %c0_87, %c0_88] : memref<5x128x128xbf16, #tpu.memory_space<vmem>>, vector<1x128x128xbf16>
    %105 = vector.shape_cast %104 : vector<1x128x128xbf16> to vector<128x128xbf16>
    %cst_89 = arith.constant dense<0.000000e+00> : vector<1x128xf32>
    %106 = tpu.matmul %103, %105, %cst_89 {dimension_numbers = #tpu.dot_dimension_numbers<[1], [0], [0], [1], [0, 0, 1, 1], [], []>} : vector<1x128xbf16>, vector<128x128xbf16>, vector<1x128xf32> -> vector<1x128xf32>
    %107 = arith.addf %100, %106 : vector<1x128xf32>
    %c0_90 = arith.constant 0 : index
    %c1_91 = arith.constant 1 : index
    %c0_92 = arith.constant 0 : index
    %108 = vector.load %arg14[%c0_90, %c1_91, %c0_92] : memref<1x5x128xf32, #tpu.memory_space<vmem>>, vector<1x1x128xf32>
    %109 = vector.shape_cast %108 : vector<1x1x128xf32> to vector<1x128xf32>
    %110 = arith.truncf %109 : vector<1x128xf32> to vector<1x128xbf16>
    %c1_93 = arith.constant 1 : index
    %c0_94 = arith.constant 0 : index
    %c0_95 = arith.constant 0 : index
    %111 = vector.load %arg6[%c1_93, %c0_94, %c0_95] : memref<5x128x128xbf16, #tpu.memory_space<vmem>>, vector<1x128x128xbf16>
    %112 = vector.shape_cast %111 : vector<1x128x128xbf16> to vector<128x128xbf16>
    %cst_96 = arith.constant dense<0.000000e+00> : vector<1x128xf32>
    %113 = tpu.matmul %110, %112, %cst_96 {dimension_numbers = #tpu.dot_dimension_numbers<[1], [0], [0], [1], [0, 0, 1, 1], [], []>} : vector<1x128xbf16>, vector<128x128xbf16>, vector<1x128xf32> -> vector<1x128xf32>
    %114 = arith.addf %107, %113 : vector<1x128xf32>
    %c0_97 = arith.constant 0 : index
    %c2_98 = arith.constant 2 : index
    %c0_99 = arith.constant 0 : index
    %115 = vector.load %arg14[%c0_97, %c2_98, %c0_99] : memref<1x5x128xf32, #tpu.memory_space<vmem>>, vector<1x1x128xf32>
    %116 = vector.shape_cast %115 : vector<1x1x128xf32> to vector<1x128xf32>
    %117 = arith.truncf %116 : vector<1x128xf32> to vector<1x128xbf16>
    %c2_100 = arith.constant 2 : index
    %c0_101 = arith.constant 0 : index
    %c0_102 = arith.constant 0 : index
    %118 = vector.load %arg6[%c2_100, %c0_101, %c0_102] : memref<5x128x128xbf16, #tpu.memory_space<vmem>>, vector<1x128x128xbf16>
    %119 = vector.shape_cast %118 : vector<1x128x128xbf16> to vector<128x128xbf16>
    %cst_103 = arith.constant dense<0.000000e+00> : vector<1x128xf32>
    %120 = tpu.matmul %117, %119, %cst_103 {dimension_numbers = #tpu.dot_dimension_numbers<[1], [0], [0], [1], [0, 0, 1, 1], [], []>} : vector<1x128xbf16>, vector<128x128xbf16>, vector<1x128xf32> -> vector<1x128xf32>
    %121 = arith.addf %114, %120 : vector<1x128xf32>
    %c0_104 = arith.constant 0 : index
    %c3_105 = arith.constant 3 : index
    %c0_106 = arith.constant 0 : index
    %122 = vector.load %arg14[%c0_104, %c3_105, %c0_106] : memref<1x5x128xf32, #tpu.memory_space<vmem>>, vector<1x1x128xf32>
    %123 = vector.shape_cast %122 : vector<1x1x128xf32> to vector<1x128xf32>
    %124 = arith.truncf %123 : vector<1x128xf32> to vector<1x128xbf16>
    %c3_107 = arith.constant 3 : index
    %c0_108 = arith.constant 0 : index
    %c0_109 = arith.constant 0 : index
    %125 = vector.load %arg6[%c3_107, %c0_108, %c0_109] : memref<5x128x128xbf16, #tpu.memory_space<vmem>>, vector<1x128x128xbf16>
    %126 = vector.shape_cast %125 : vector<1x128x128xbf16> to vector<128x128xbf16>
    %cst_110 = arith.constant dense<0.000000e+00> : vector<1x128xf32>
    %127 = tpu.matmul %124, %126, %cst_110 {dimension_numbers = #tpu.dot_dimension_numbers<[1], [0], [0], [1], [0, 0, 1, 1], [], []>} : vector<1x128xbf16>, vector<128x128xbf16>, vector<1x128xf32> -> vector<1x128xf32>
    %128 = arith.addf %121, %127 : vector<1x128xf32>
    %c0_111 = arith.constant 0 : index
    %c4_112 = arith.constant 4 : index
    %c0_113 = arith.constant 0 : index
    %129 = vector.load %arg14[%c0_111, %c4_112, %c0_113] : memref<1x5x128xf32, #tpu.memory_space<vmem>>, vector<1x1x128xf32>
    %130 = vector.shape_cast %129 : vector<1x1x128xf32> to vector<1x128xf32>
    %131 = arith.truncf %130 : vector<1x128xf32> to vector<1x128xbf16>
    %c4_114 = arith.constant 4 : index
    %c0_115 = arith.constant 0 : index
    %c0_116 = arith.constant 0 : index
    %132 = vector.load %arg6[%c4_114, %c0_115, %c0_116] : memref<5x128x128xbf16, #tpu.memory_space<vmem>>, vector<1x128x128xbf16>
    %133 = vector.shape_cast %132 : vector<1x128x128xbf16> to vector<128x128xbf16>
    %cst_117 = arith.constant dense<0.000000e+00> : vector<1x128xf32>
    %134 = tpu.matmul %131, %133, %cst_117 {dimension_numbers = #tpu.dot_dimension_numbers<[1], [0], [0], [1], [0, 0, 1, 1], [], []>} : vector<1x128xbf16>, vector<128x128xbf16>, vector<1x128xf32> -> vector<1x128xf32>
    %135 = arith.addf %128, %134 : vector<1x128xf32>
    %c0_118 = arith.constant 0 : index
    %c0_119 = arith.constant 0 : index
    %136 = vector.load %arg7[%c0_118, %c0_119] : memref<1x128xf32, #tpu.memory_space<vmem>>, vector<1x128xf32>
    %137 = arith.addf %135, %136 : vector<1x128xf32>
    %cst_120 = arith.constant 0.000000e+00 : f32
    %138 = vector.broadcast %cst_120 : f32 to vector<1x128xf32>
    %139 = arith.cmpf ogt, %137, %138 : vector<1x128xf32>
    %cst_121 = arith.constant 0.00999999977 : f32
    %140 = vector.broadcast %cst_121 : f32 to vector<1x128xf32>
    %141 = arith.mulf %140, %137 : vector<1x128xf32>
    %142 = arith.select %139, %137, %141 : vector<1x128xi1>, vector<1x128xf32>
    %143 = arith.truncf %142 : vector<1x128xf32> to vector<1x128xbf16>
    %c0_122 = arith.constant 0 : index
    %c0_123 = arith.constant 0 : index
    %144 = vector.load %arg8[%c0_122, %c0_123] : memref<128x128xbf16, #tpu.memory_space<vmem>>, vector<128x128xbf16>
    %cst_124 = arith.constant dense<0.000000e+00> : vector<1x128xf32>
    %145 = tpu.matmul %143, %144, %cst_124 {dimension_numbers = #tpu.dot_dimension_numbers<[1], [0], [0], [1], [0, 0, 1, 1], [], []>} : vector<1x128xbf16>, vector<128x128xbf16>, vector<1x128xf32> -> vector<1x128xf32>
    %c0_125 = arith.constant 0 : index
    %c0_126 = arith.constant 0 : index
    %146 = vector.load %arg9[%c0_125, %c0_126] : memref<1x128xf32, #tpu.memory_space<vmem>>, vector<1x128xf32>
    %147 = arith.addf %145, %146 : vector<1x128xf32>
    %cst_127 = arith.constant 0.000000e+00 : f32
    %148 = vector.broadcast %cst_127 : f32 to vector<1x128xf32>
    %149 = arith.cmpf ogt, %147, %148 : vector<1x128xf32>
    %cst_128 = arith.constant 0.00999999977 : f32
    %150 = vector.broadcast %cst_128 : f32 to vector<1x128xf32>
    %151 = arith.mulf %150, %147 : vector<1x128xf32>
    %152 = arith.select %149, %147, %151 : vector<1x128xi1>, vector<1x128xf32>
    %153 = arith.truncf %152 : vector<1x128xf32> to vector<1x128xbf16>
    %c0_129 = arith.constant 0 : index
    %c0_130 = arith.constant 0 : index
    %154 = vector.load %arg10[%c0_129, %c0_130] : memref<128x128xbf16, #tpu.memory_space<vmem>>, vector<128x128xbf16>
    %cst_131 = arith.constant dense<0.000000e+00> : vector<1x128xf32>
    %155 = tpu.matmul %153, %154, %cst_131 {dimension_numbers = #tpu.dot_dimension_numbers<[1], [0], [0], [1], [0, 0, 1, 1], [], []>} : vector<1x128xbf16>, vector<128x128xbf16>, vector<1x128xf32> -> vector<1x128xf32>
    %c0_132 = arith.constant 0 : index
    %c0_133 = arith.constant 0 : index
    %156 = vector.load %arg11[%c0_132, %c0_133] : memref<1x128xf32, #tpu.memory_space<vmem>>, vector<1x128xf32>
    %157 = arith.addf %155, %156 : vector<1x128xf32>
    %c0_134 = arith.constant 0 : index
    %c0_135 = arith.constant 0 : index
    %c0_136 = arith.constant 0 : index
    %158 = vector.load %arg12[%c0_134, %c0_135, %c0_136] : memref<1x1x128xf32, #tpu.memory_space<vmem>>, vector<1x1x128xf32>
    %159 = vector.shape_cast %158 : vector<1x1x128xf32> to vector<1x128xf32>
    %160 = vector.shape_cast %157 : vector<1x128xf32> to vector<1x1x128xf32>
    tpu.vector_store %arg12[%c0_134, %c0_135, %c0_136], %160 {strides = array<i32>} : memref<1x1x128xf32, #tpu.memory_space<vmem>>, vector<1x1x128xf32>,
    return
  }
  func.func @transform_0(%arg0: i32) -> (i32, i32, i32) {
    %c0_i32 = arith.constant 0 : i32
    %c0_i32_0 = arith.constant 0 : i32
    %c0_i32_1 = arith.constant 0 : i32
    return %arg0, %c0_i32, %c0_i32_0 : i32, i32, i32
  }
  func.func @transform_1(%arg0: i32) -> (i32, i32, i32) {
    %c0_i32 = arith.constant 0 : i32
    %c0_i32_0 = arith.constant 0 : i32
    %c0_i32_1 = arith.constant 0 : i32
    %c0_i32_2 = arith.constant 0 : i32
    return %c0_i32, %c0_i32_0, %c0_i32_1 : i32, i32, i32
  }
  func.func @transform_2(%arg0: i32) -> (i32, i32) {
    %c0_i32 = arith.constant 0 : i32
    %c0_i32_0 = arith.constant 0 : i32
    %c0_i32_1 = arith.constant 0 : i32
    return %c0_i32, %c0_i32_0 : i32, i32
  }
  func.func @transform_3(%arg0: i32) -> (i32, i32, i32) {
    %c0_i32 = arith.constant 0 : i32
    %c0_i32_0 = arith.constant 0 : i32
    %c0_i32_1 = arith.constant 0 : i32
    %c0_i32_2 = arith.constant 0 : i32
    return %c0_i32, %c0_i32_0, %c0_i32_1 : i32, i32, i32
  }
  func.func @transform_4(%arg0: i32) -> (i32, i32) {
    %c0_i32 = arith.constant 0 : i32
    %c0_i32_0 = arith.constant 0 : i32
    %c0_i32_1 = arith.constant 0 : i32
    return %c0_i32, %c0_i32_0 : i32, i32
  }
  func.func @transform_5(%arg0: i32) -> (i32, i32, i32) {
    %c0_i32 = arith.constant 0 : i32
    %c0_i32_0 = arith.constant 0 : i32
    %c0_i32_1 = arith.constant 0 : i32
    %c0_i32_2 = arith.constant 0 : i32
    return %c0_i32, %c0_i32_0, %c0_i32_1 : i32, i32, i32
  }
  func.func @transform_6(%arg0: i32) -> (i32, i32) {
    %c0_i32 = arith.constant 0 : i32
    %c0_i32_0 = arith.constant 0 : i32
    %c0_i32_1 = arith.constant 0 : i32
    return %c0_i32, %c0_i32_0 : i32, i32
  }
  func.func @transform_7(%arg0: i32) -> (i32, i32) {
    %c0_i32 = arith.constant 0 : i32
    %c0_i32_0 = arith.constant 0 : i32
    %c0_i32_1 = arith.constant 0 : i32
    return %c0_i32, %c0_i32_0 : i32, i32
  }
  func.func @transform_8(%arg0: i32) -> (i32, i32) {
    %c0_i32 = arith.constant 0 : i32
    %c0_i32_0 = arith.constant 0 : i32
    %c0_i32_1 = arith.constant 0 : i32
    return %c0_i32, %c0_i32_0 : i32, i32
  }
  func.func @transform_9(%arg0: i32) -> (i32, i32) {
    %c0_i32 = arith.constant 0 : i32
    %c0_i32_0 = arith.constant 0 : i32
    %c0_i32_1 = arith.constant 0 : i32
    return %c0_i32, %c0_i32_0 : i32, i32
  }
  func.func @transform_10(%arg0: i32) -> (i32, i32) {
    %c0_i32 = arith.constant 0 : i32
    %c0_i32_0 = arith.constant 0 : i32
    %c0_i32_1 = arith.constant 0 : i32
    return %c0_i32, %c0_i32_0 : i32, i32
  }
  func.func @transform_11(%arg0: i32) -> (i32, i32, i32) {
    %c0_i32 = arith.constant 0 : i32
    %c0_i32_0 = arith.constant 0 : i32
    %c0_i32_1 = arith.constant 0 : i32
    return %arg0, %c0_i32, %c0_i32_0 : i32, i32, i32
  }
}

</mosaic_0001>

<llo_original>
// kernel: cnn_lerelu_forward.1
$region0: #{cnn_lerelu_forward.1}
  #allocation0 [shape = 'u32[]', space=smem, size = 0x4, offset = 0x4, fixed_abs, tag = 'smem constant byte address 0x4 - core index']
  #allocation1 [shape = 'u32[72,128]{1,0:T(1,128)}', space=vmem, size = 0x9000, scoped, tag = 'internal scratch']
  #allocation2 [shape = 'f32[1,14,128]{2,1,0:T(8,128)}', space=vmem, size = 0x2000, scoped, tag = 'scratch operand']
  #allocation3 [shape = 'f32[1,5,128]{2,1,0:T(8,128)}', space=vmem, size = 0x1000, scoped, tag = 'scratch operand']
  %s0 = inlined_call_operand.vmem [shape: f32[2,32,128], index: 0, kind: input, shape index: {}]
  %s1 = inlined_call_operand.vmem [shape: bf16[5,128,256], index: 1, kind: input, shape index: {}]
  %s2 = inlined_call_operand.vmem [shape: f32[1,256], index: 2, kind: input, shape index: {}]
  %s3 = inlined_call_operand.hbm [shape: bf16[5,128,256], index: 3, kind: input, shape index: {}]
  %s4 = inlined_call_operand.vmem [shape: f32[1,256], index: 4, kind: input, shape index: {}]
  %s5 = inlined_call_operand.hbm [shape: bf16[5,128,128], index: 5, kind: input, shape index: {}]
  %s6 = inlined_call_operand.vmem [shape: f32[1,128], index: 6, kind: input, shape index: {}]
  %s7 = inlined_call_operand.vmem [shape: bf16[128,128], index: 7, kind: input, shape index: {}]
  %s8 = inlined_call_operand.vmem [shape: f32[1,128], index: 8, kind: input, shape index: {}]
  %s9 = inlined_call_operand.vmem [shape: bf16[128,128], index: 9, kind: input, shape index: {}]
  %s10 = inlined_call_operand.vmem [shape: f32[1,128], index: 10, kind: input, shape index: {}]
  %s11 = inlined_call_operand.hbm [shape: f32[2,1,128], index: 11, kind: output, shape index: {}]
  %s12 = sld [smem:[#allocation0]]
  $region85: #{cnn_lerelu_forward.1} parent=0
    _
  %s14 = ssub.s32 1, %s12
  %s15 = scalar_select 0, %s14, %s12
  $region1: #{cnn_lerelu_forward.1} parent=0
    #allocation4 [shape = 'u8[327680]{0}', space=vmem, size = 0x50000, scoped, tag = 'input window, operand 3, single buffered']
    #allocation5 [shape = 's32[2]{0}', space=sflag, size = 0x8, scoped, tag = 'scoped memory for cnn_lerelu_forward.1']
    #allocation6 [shape = 's32[2]{0}', space=sflag, size = 0x8, scoped, tag = 'scoped memory for cnn_lerelu_forward.1']
    #allocation7 [shape = 'u8[163840]{0}', space=vmem, size = 0x28000, scoped, tag = 'input window, operand 5, single buffered']
    #allocation8 [shape = 's32[1]{0}', space=sflag, size = 0x4, scoped, tag = 'scoped memory for cnn_lerelu_forward.1']
    #allocation9 [shape = 'u8[1024]{0}', space=vmem, size = 0x400, scoped, tag = 'output window, operand 0']
    %16 = vsyncpa [#allocation5], 0
    %17 = vsyncpa [#allocation8], 0
    %18 = vsyncpa [#allocation6], 0
    %s19 = scalar_lea.sflag [#allocation6], 1
    %20 = vsyncpa %s19, 0
    loop: start=0, step=1, limit=4
    $region2: #{cnn_lerelu_forward.1} parent=1 // loop_pre_header
      _
    $region3: #{cnn_lerelu_forward.1} parent=1 // loop_header
      %s22 = sphi 0, %s26
      %p23 = scmp.ge.s32.totalorder %s22, 4
      %s32 = sphi 0, %s34
      %s35 = sphi 0, %s32
      %s36 = sphi 0, %s35
      %s52 = sphi 0, %s36
      %s56 = sphi 0, %s56
      %s58 = sphi 0, %s56
      %s59 = sphi 0, %s58
      %s73 = sphi 0, %s59
      %s77 = sphi 0, %s77
      %s79 = sphi 0, %s77
      %s80 = sphi 0, %s79
      %s94 = sphi 0, %s80
      %s98 = sphi 0, %s98
      %s100 = sphi 0, %s98
      %s101 = sphi 0, %s100
      %s115 = sphi 0, %s101
      %s119 = sphi 0, %s119
      %s121 = sphi 0, %s119
      %s122 = sphi 0, %s121
      %s136 = sphi 0, %s122
      %s140 = sphi 0, %s140
      %s142 = sphi 0, %s140
      %s143 = sphi 0, %s142
      %s157 = sphi 0, %s143
      %s161 = sphi 0, %s161
      %s163 = sphi 0, %s161
      %s164 = sphi 0, %s163
      %s178 = sphi 0, %s164
      %s182 = sphi 0, %s182
      %s184 = sphi 0, %s182
      %s185 = sphi 0, %s184
      %s199 = sphi 0, %s185
      %s203 = sphi 0, %s203
      %s205 = sphi 0, %s203
      %s206 = sphi 0, %s205
      %s220 = sphi 0, %s206
      %s224 = sphi 0, %s224
      %s226 = sphi 0, %s224
      %s227 = sphi 0, %s226
      %s241 = sphi 0, %s227
      %s245 = sphi 0, %s245
      %s247 = sphi 0, %s245
      %s248 = sphi 0, %s247
      %s262 = sphi 0, %s248
      %s268 = sphi 0, %s270
      %s271 = sphi 0, %s268
      %s272 = sphi 0, %s271
      %s288 = sphi 0, %s272
    $region4: #{cnn_lerelu_forward.1} parent=1 // loop_header_branch
      %25 = sbr.rel (%p23) target = $region8
    $region5: #{cnn_lerelu_forward.1} parent=1 // loop_body
      %s27 = ssub.s32 %s22, 1
      %s28 = ssub.s32 %s22, 2
      %s29 = sadd.s32 %s22, 1
      %s30 = ssub.s32 %s22, %s29
      %p31 = scmp.eq.s32.totalorder %s30, 0
      %s33 = sadd.s32 %s32, 1
      %s34 = scalar_select %p31, %s32, %s33
      %p37 = pneg %p31
      %p38 = scmp.eq.s32.totalorder %s22, 1
      %p39 = por %p37, %p38
      %p40 = scmp.ne.s32.totalorder %s32, %s35
      %p41 = scmp.eq.s32.totalorder %s22, 0
      %p42 = por %p40, %p41
      %p43 = scmp.ne.s32.totalorder %s32, %s35
      %p44 = scmp.eq.s32.totalorder %s27, 1
      %p45 = por %p43, %p44
      %p46 = scmp.ne.s32.totalorder %s35, %s36
      %p47 = scmp.eq.s32.totalorder %s27, 0
      %p48 = por %p46, %p47
      %p49 = scmp.ne.s32.totalorder %s35, %s36
      %p50 = scmp.eq.s32.totalorder %s28, 1
      %p51 = por %p49, %p50
      %p53 = scmp.ne.s32.totalorder %s36, %s52
      %p54 = scmp.eq.s32.totalorder %s28, 0
      %p55 = por %p53, %p54
      %s57 = sadd.s32 %s56, 1
      %p60 = scmp.eq.s32.totalorder %s22, 1
      %p61 = scmp.ne.s32.totalorder %s56, %s58
      %p62 = scmp.eq.s32.totalorder %s22, 0
      %p63 = por %p61, %p62
      %p64 = scmp.ne.s32.totalorder %s56, %s58
      %p65 = scmp.eq.s32.totalorder %s27, 1
      %p66 = por %p64, %p65
      %p67 = scmp.ne.s32.totalorder %s58, %s59
      %p68 = scmp.eq.s32.totalorder %s27, 0
      %p69 = por %p67, %p68
      %p70 = scmp.ne.s32.totalorder %s58, %s59
      %p71 = scmp.eq.s32.totalorder %s28, 1
      %p72 = por %p70, %p71
      %p74 = scmp.ne.s32.totalorder %s59, %s73
      %p75 = scmp.eq.s32.totalorder %s28, 0
      %p76 = por %p74, %p75
      %s78 = sadd.s32 %s77, 1
      %p81 = scmp.eq.s32.totalorder %s22, 1
      %p82 = scmp.ne.s32.totalorder %s77, %s79
      %p83 = scmp.eq.s32.totalorder %s22, 0
      %p84 = por %p82, %p83
      %p85 = scmp.ne.s32.totalorder %s77, %s79
      %p86 = scmp.eq.s32.totalorder %s27, 1
      %p87 = por %p85, %p86
      %p88 = scmp.ne.s32.totalorder %s79, %s80
      %p89 = scmp.eq.s32.totalorder %s27, 0
      %p90 = por %p88, %p89
      %p91 = scmp.ne.s32.totalorder %s79, %s80
      %p92 = scmp.eq.s32.totalorder %s28, 1
      %p93 = por %p91, %p92
      %p95 = scmp.ne.s32.totalorder %s80, %s94
      %p96 = scmp.eq.s32.totalorder %s28, 0
      %p97 = por %p95, %p96
      %s99 = sadd.s32 %s98, 1
      %p102 = scmp.eq.s32.totalorder %s22, 1
      %p103 = scmp.ne.s32.totalorder %s98, %s100
      %p104 = scmp.eq.s32.totalorder %s22, 0
      %p105 = por %p103, %p104
      %p106 = scmp.ne.s32.totalorder %s98, %s100
      %p107 = scmp.eq.s32.totalorder %s27, 1
      %p108 = por %p106, %p107
      %p109 = scmp.ne.s32.totalorder %s100, %s101
      %p110 = scmp.eq.s32.totalorder %s27, 0
      %p111 = por %p109, %p110
      %p112 = scmp.ne.s32.totalorder %s100, %s101
      %p113 = scmp.eq.s32.totalorder %s28, 1
      %p114 = por %p112, %p113
      %p116 = scmp.ne.s32.totalorder %s101, %s115
      %p117 = scmp.eq.s32.totalorder %s28, 0
      %p118 = por %p116, %p117
      %s120 = sadd.s32 %s119, 1
      %p123 = scmp.eq.s32.totalorder %s22, 1
      %p124 = scmp.ne.s32.totalorder %s119, %s121
      %p125 = scmp.eq.s32.totalorder %s22, 0
      %p126 = por %p124, %p125
      %p127 = scmp.ne.s32.totalorder %s119, %s121
      %p128 = scmp.eq.s32.totalorder %s27, 1
      %p129 = por %p127, %p128
      %p130 = scmp.ne.s32.totalorder %s121, %s122
      %p131 = scmp.eq.s32.totalorder %s27, 0
      %p132 = por %p130, %p131
      %p133 = scmp.ne.s32.totalorder %s121, %s122
      %p134 = scmp.eq.s32.totalorder %s28, 1
      %p135 = por %p133, %p134
      %p137 = scmp.ne.s32.totalorder %s122, %s136
      %p138 = scmp.eq.s32.totalorder %s28, 0
      %p139 = por %p137, %p138
      %s141 = sadd.s32 %s140, 1
      %p144 = scmp.eq.s32.totalorder %s22, 1
      %p145 = scmp.ne.s32.totalorder %s140, %s142
      %p146 = scmp.eq.s32.totalorder %s22, 0
      %p147 = por %p145, %p146
      %p148 = scmp.ne.s32.totalorder %s140, %s142
      %p149 = scmp.eq.s32.totalorder %s27, 1
      %p150 = por %p148, %p149
      %p151 = scmp.ne.s32.totalorder %s142, %s143
      %p152 = scmp.eq.s32.totalorder %s27, 0
      %p153 = por %p151, %p152
      %p154 = scmp.ne.s32.totalorder %s142, %s143
      %p155 = scmp.eq.s32.totalorder %s28, 1
      %p156 = por %p154, %p155
      %p158 = scmp.ne.s32.totalorder %s143, %s157
      %p159 = scmp.eq.s32.totalorder %s28, 0
      %p160 = por %p158, %p159
      %s162 = sadd.s32 %s161, 1
      %p165 = scmp.eq.s32.totalorder %s22, 1
      %p166 = scmp.ne.s32.totalorder %s161, %s163
      %p167 = scmp.eq.s32.totalorder %s22, 0
      %p168 = por %p166, %p167
      %p169 = scmp.ne.s32.totalorder %s161, %s163
      %p170 = scmp.eq.s32.totalorder %s27, 1
      %p171 = por %p169, %p170
      %p172 = scmp.ne.s32.totalorder %s163, %s164
      %p173 = scmp.eq.s32.totalorder %s27, 0
      %p174 = por %p172, %p173
      %p175 = scmp.ne.s32.totalorder %s163, %s164
      %p176 = scmp.eq.s32.totalorder %s28, 1
      %p177 = por %p175, %p176
      %p179 = scmp.ne.s32.totalorder %s164, %s178
      %p180 = scmp.eq.s32.totalorder %s28, 0
      %p181 = por %p179, %p180
      %s183 = sadd.s32 %s182, 1
      %p186 = scmp.eq.s32.totalorder %s22, 1
      %p187 = scmp.ne.s32.totalorder %s182, %s184
      %p188 = scmp.eq.s32.totalorder %s22, 0
      %p189 = por %p187, %p188
      %p190 = scmp.ne.s32.totalorder %s182, %s184
      %p191 = scmp.eq.s32.totalorder %s27, 1
      %p192 = por %p190, %p191
      %p193 = scmp.ne.s32.totalorder %s184, %s185
      %p194 = scmp.eq.s32.totalorder %s27, 0
      %p195 = por %p193, %p194
      %p196 = scmp.ne.s32.totalorder %s184, %s185
      %p197 = scmp.eq.s32.totalorder %s28, 1
      %p198 = por %p196, %p197
      %p200 = scmp.ne.s32.totalorder %s185, %s199
      %p201 = scmp.eq.s32.totalorder %s28, 0
      %p202 = por %p200, %p201
      %s204 = sadd.s32 %s203, 1
      %p207 = scmp.eq.s32.totalorder %s22, 1
      %p208 = scmp.ne.s32.totalorder %s203, %s205
      %p209 = scmp.eq.s32.totalorder %s22, 0
      %p210 = por %p208, %p209
      %p211 = scmp.ne.s32.totalorder %s203, %s205
      %p212 = scmp.eq.s32.totalorder %s27, 1
      %p213 = por %p211, %p212
      %p214 = scmp.ne.s32.totalorder %s205, %s206
      %p215 = scmp.eq.s32.totalorder %s27, 0
      %p216 = por %p214, %p215
      %p217 = scmp.ne.s32.totalorder %s205, %s206
      %p218 = scmp.eq.s32.totalorder %s28, 1
      %p219 = por %p217, %p218
      %p221 = scmp.ne.s32.totalorder %s206, %s220
      %p222 = scmp.eq.s32.totalorder %s28, 0
      %p223 = por %p221, %p222
      %s225 = sadd.s32 %s224, 1
      %p228 = scmp.eq.s32.totalorder %s22, 1
      %p229 = scmp.ne.s32.totalorder %s224, %s226
      %p230 = scmp.eq.s32.totalorder %s22, 0
      %p231 = por %p229, %p230
      %p232 = scmp.ne.s32.totalorder %s224, %s226
      %p233 = scmp.eq.s32.totalorder %s27, 1
      %p234 = por %p232, %p233
      %p235 = scmp.ne.s32.totalorder %s226, %s227
      %p236 = scmp.eq.s32.totalorder %s27, 0
      %p237 = por %p235, %p236
      %p238 = scmp.ne.s32.totalorder %s226, %s227
      %p239 = scmp.eq.s32.totalorder %s28, 1
      %p240 = por %p238, %p239
      %p242 = scmp.ne.s32.totalorder %s227, %s241
      %p243 = scmp.eq.s32.totalorder %s28, 0
      %p244 = por %p242, %p243
      %s246 = sadd.s32 %s245, 1
      %p249 = scmp.eq.s32.totalorder %s22, 1
      %p250 = scmp.ne.s32.totalorder %s245, %s247
      %p251 = scmp.eq.s32.totalorder %s22, 0
      %p252 = por %p250, %p251
      %p253 = scmp.ne.s32.totalorder %s245, %s247
      %p254 = scmp.eq.s32.totalorder %s27, 1
      %p255 = por %p253, %p254
      %p256 = scmp.ne.s32.totalorder %s247, %s248
      %p257 = scmp.eq.s32.totalorder %s27, 0
      %p258 = por %p256, %p257
      %p259 = scmp.ne.s32.totalorder %s247, %s248
      %p260 = scmp.eq.s32.totalorder %s28, 1
      %p261 = por %p259, %p260
      %p263 = scmp.ne.s32.totalorder %s248, %s262
      %p264 = scmp.eq.s32.totalorder %s28, 0
      %p265 = por %p263, %p264
      %s266 = ssub.s32 %s22, %s29
      %p267 = scmp.eq.s32.totalorder %s266, 0
      %s269 = sadd.s32 %s268, 1
      %s270 = scalar_select %p267, %s268, %s269
      %p273 = pneg %p267
      %p274 = scmp.eq.s32.totalorder %s22, 1
      %p275 = por %p273, %p274
      %p276 = scmp.ne.s32.totalorder %s268, %s271
      %p277 = scmp.eq.s32.totalorder %s22, 0
      %p278 = por %p276, %p277
      %p279 = scmp.ne.s32.totalorder %s268, %s271
      %p280 = scmp.eq.s32.totalorder %s27, 1
      %p281 = por %p279, %p280
      %p282 = scmp.ne.s32.totalorder %s271, %s272
      %p283 = scmp.eq.s32.totalorder %s27, 0
      %p284 = por %p282, %p283
      %p285 = scmp.ne.s32.totalorder %s271, %s272
      %p286 = scmp.eq.s32.totalorder %s28, 1
      %p287 = por %p285, %p286
      %p289 = scmp.ne.s32.totalorder %s272, %s288
      %p290 = scmp.eq.s32.totalorder %s28, 0
      %p291 = por %p289, %p290
      %p292 = scmp.le.s32.totalorder 1, %s22
      %p293 = scmp.lt.s32.totalorder %s22, 3
      %p294 = pnand %p292, %p293
      %p295 = pneg %p294
      // Predicated region
      $region9: #{cnn_lerelu_forward.1} parent=5 // pred_check
        _
      $region10: #{cnn_lerelu_forward.1} parent=5 // pred_check_branch
        %297 = sbr.rel (%p294) target = $region12
      $region11: #{cnn_lerelu_forward.1} parent=5 // pred_region
        %s298 = ssub.s32 %s22, 1
        // Predicated region
        $region13: #{cnn_lerelu_forward.1} parent=11 // pred_check
          %p299 = pneg %p69
        $region14: #{cnn_lerelu_forward.1} parent=11 // pred_check_branch
          %301 = sbr.rel (%p299) target = $region16
        $region15: #{cnn_lerelu_forward.1} parent=11 // pred_region
          _
        $region16: #{cnn_lerelu_forward.1} parent=11 // pred_fallthru
          _
        // Predicated region
        $region17: #{cnn_lerelu_forward.1} parent=11 // pred_check
          %p302 = pneg %p90
        $region18: #{cnn_lerelu_forward.1} parent=11 // pred_check_branch
          %304 = sbr.rel (%p302) target = $region20
        $region19: #{cnn_lerelu_forward.1} parent=11 // pred_region
          _
        $region20: #{cnn_lerelu_forward.1} parent=11 // pred_fallthru
          _
        // Predicated region
        $region21: #{cnn_lerelu_forward.1} parent=11 // pred_check
          %p305 = pneg %p111
        $region22: #{cnn_lerelu_forward.1} parent=11 // pred_check_branch
          %307 = sbr.rel (%p305) target = $region24
        $region23: #{cnn_lerelu_forward.1} parent=11 // pred_region
          %309 = vsyncadd [#allocation5], 0
          %s310 = sshll.u32 %s3, 4
          %s311 = int_to_ptr.hbm [resolvable:$true] %s310
          %s312 = sshll.u32 [#allocation4], 4
          %s313 = int_to_ptr.vmem [resolvable:$true] %s312
          %318 = dma.hbm_to_vmem [thread:$0]  %s311, 10240, %s313, [#allocation5], 128, 128, 8
        $region24: #{cnn_lerelu_forward.1} parent=11 // pred_fallthru
          _
        // Predicated region
        $region25: #{cnn_lerelu_forward.1} parent=11 // pred_check
          %p319 = pneg %p132
        $region26: #{cnn_lerelu_forward.1} parent=11 // pred_check_branch
          %321 = sbr.rel (%p319) target = $region28
        $region27: #{cnn_lerelu_forward.1} parent=11 // pred_region
          _
        $region28: #{cnn_lerelu_forward.1} parent=11 // pred_fallthru
          _
        // Predicated region
        $region29: #{cnn_lerelu_forward.1} parent=11 // pred_check
          %p322 = pneg %p153
        $region30: #{cnn_lerelu_forward.1} parent=11 // pred_check_branch
          %324 = sbr.rel (%p322) target = $region32
        $region31: #{cnn_lerelu_forward.1} parent=11 // pred_region
          %326 = vsyncadd [#allocation8], 0
          %s327 = sshll.u32 %s5, 4
          %s328 = int_to_ptr.hbm [resolvable:$true] %s327
          %s329 = sshll.u32 [#allocation7], 4
          %s330 = int_to_ptr.vmem [resolvable:$true] %s329
          %335 = dma.hbm_to_vmem [thread:$0]  %s328, 5120, %s330, [#allocation8], 64, 64, 4
        $region32: #{cnn_lerelu_forward.1} parent=11 // pred_fallthru
          _
        // Predicated region
        $region33: #{cnn_lerelu_forward.1} parent=11 // pred_check
          %p336 = pneg %p174
        $region34: #{cnn_lerelu_forward.1} parent=11 // pred_check_branch
          %338 = sbr.rel (%p336) target = $region36
        $region35: #{cnn_lerelu_forward.1} parent=11 // pred_region
          _
        $region36: #{cnn_lerelu_forward.1} parent=11 // pred_fallthru
          _
        // Predicated region
        $region37: #{cnn_lerelu_forward.1} parent=11 // pred_check
          %p339 = pneg %p195
        $region38: #{cnn_lerelu_forward.1} parent=11 // pred_check_branch
          %341 = sbr.rel (%p339) target = $region40
        $region39: #{cnn_lerelu_forward.1} parent=11 // pred_region
          _
        $region40: #{cnn_lerelu_forward.1} parent=11 // pred_fallthru
          _
        // Predicated region
        $region41: #{cnn_lerelu_forward.1} parent=11 // pred_check
          %p342 = pneg %p216
        $region42: #{cnn_lerelu_forward.1} parent=11 // pred_check_branch
          %344 = sbr.rel (%p342) target = $region44
        $region43: #{cnn_lerelu_forward.1} parent=11 // pred_region
          _
        $region44: #{cnn_lerelu_forward.1} parent=11 // pred_fallthru
          _
        // Predicated region
        $region45: #{cnn_lerelu_forward.1} parent=11 // pred_check
          %p345 = pneg %p237
        $region46: #{cnn_lerelu_forward.1} parent=11 // pred_check_branch
          %347 = sbr.rel (%p345) target = $region48
        $region47: #{cnn_lerelu_forward.1} parent=11 // pred_region
          _
        $region48: #{cnn_lerelu_forward.1} parent=11 // pred_fallthru
          _
        // Predicated region
        $region49: #{cnn_lerelu_forward.1} parent=11 // pred_check
          %p348 = pneg %p258
        $region50: #{cnn_lerelu_forward.1} parent=11 // pred_check_branch
          %350 = sbr.rel (%p348) target = $region52
        $region51: #{cnn_lerelu_forward.1} parent=11 // pred_region
          _
        $region52: #{cnn_lerelu_forward.1} parent=11 // pred_fallthru
          _
      $region12: #{cnn_lerelu_forward.1} parent=5 // pred_fallthru
        _
      %p351 = scmp.lt.s32.totalorder %s22, 2
      // Predicated region
      $region53: #{cnn_lerelu_forward.1} parent=5 // pred_check
        %p352 = pneg %p351
      $region54: #{cnn_lerelu_forward.1} parent=5 // pred_check_branch
        %354 = sbr.rel (%p352) target = $region56
      $region55: #{cnn_lerelu_forward.1} parent=5 // pred_region
        // Predicated region
        $region57: #{cnn_lerelu_forward.1} parent=55 // pred_check
          %p355 = pneg %p42
        $region58: #{cnn_lerelu_forward.1} parent=55 // pred_check_branch
          %357 = sbr.rel (%p355) target = $region60
        $region59: #{cnn_lerelu_forward.1} parent=55 // pred_region
          %p358 = scmp.lt.s32.totalorder %s22, 1
          %s359 = scalar_select %p358, %s22, 1
          %s360 = smul.addr %s359, 4
          %s361 = smul.addr %s360, 8
          %s362 = scalar_lea.vmem %s0, %s361
        $region60: #{cnn_lerelu_forward.1} parent=55 // pred_fallthru
          _
      $region56: #{cnn_lerelu_forward.1} parent=5 // pred_fallthru
        _
      %p363 = scmp.le.s32.totalorder 1, %s22
      %p364 = scmp.lt.s32.totalorder %s22, 3
      %p365 = pnand %p363, %p364
      %p366 = pneg %p365
      // Predicated region
      $region61: #{cnn_lerelu_forward.1} parent=5 // pred_check
        _
      $region62: #{cnn_lerelu_forward.1} parent=5 // pred_check_branch
        %368 = sbr.rel (%p365) target = $region64
      $region63: #{cnn_lerelu_forward.1} parent=5 // pred_region
        %s369 = ssub.s32 %s22, 1
        // Predicated region
        $region65: #{cnn_lerelu_forward.1} parent=63 // pred_check
          %p370 = pneg %p111
        $region66: #{cnn_lerelu_forward.1} parent=63 // pred_check_branch
          %372 = sbr.rel (%p370) target = $region68
        $region67: #{cnn_lerelu_forward.1} parent=63 // pred_region
          %374 = dma.done [#allocation5], 10240
        $region68: #{cnn_lerelu_forward.1} parent=63 // pred_fallthru
          _
        // Predicated region
        $region69: #{cnn_lerelu_forward.1} parent=63 // pred_check
          %p375 = pneg %p153
        $region70: #{cnn_lerelu_forward.1} parent=63 // pred_check_branch
          %377 = sbr.rel (%p375) target = $region72
        $region71: #{cnn_lerelu_forward.1} parent=63 // pred_region
          %379 = dma.done [#allocation8], 5120
        $region72: #{cnn_lerelu_forward.1} parent=63 // pred_fallthru
          _
        %p380 = scmp.lt.s32.totalorder %s27, 1
        %s381 = scalar_select %p380, %s27, 1
        %s382 = smul.addr %s381, 4
        %s383 = smul.addr %s382, 8
        %s384 = scalar_lea.vmem %s0, %s383
        %p385 = pneg %p48
        %p386 = pneg %p45
        %p387 = pneg %p69
        %p388 = pneg %p66
        %p389 = pneg %p90
        %p390 = pneg %p87
        %p391 = pneg %p111
        %p392 = pneg %p108
        %p393 = pneg %p132
        %p394 = pneg %p129
        %p395 = pneg %p153
        %p396 = pneg %p150
        %p397 = pneg %p174
        %p398 = pneg %p171
        %p399 = pneg %p195
        %p400 = pneg %p192
        %p401 = pneg %p216
        %p402 = pneg %p213
        %p403 = pneg %p237
        %p404 = pneg %p234
        %p405 = pneg %p258
        %p406 = pneg %p255
        %p407 = pneg %p284
        %p408 = pneg %p281
        %s409 = sand.u32 %s271, 1
        %s410 = scalar_lea.sflag [#allocation6], %s409
        %s411 = sand.u32 %s271, 1
        %s412 = scalar_lea.vmem [#allocation9], %s411
        %p413 = scmp.lt.s32.totalorder %s27, 1
        %s414 = scalar_select %p413, %s27, 1
        %s415 = smul.addr %s414, 4
        %s416 = smul.addr %s415, 8
        %s417 = scalar_lea.vmem %s0, %s416
        %v418 = vld [vmem:[%s417] sm:$0xff]
        %v419 = vld [vmem:[%s417 + $0x8] sm:$0xff]
        %v420 = vld [vmem:[%s417 + $0x10] sm:$0xff]
        %v421 = vld [vmem:[%s417 + $0x18] sm:$0xf]
        %v422 = vpack.c.bf16 %v419, %v418
        %v423 = vpack.c.bf16 %v421, %v420
        %v424 = vld [vmem:[%s1] sm:$0xff]
        %v425 = vld [vmem:[%s1 + $0x8] sm:$0xff]
        %v426 = vld [vmem:[%s1 + $0x10] sm:$0xff]
        %v427 = vld [vmem:[%s1 + $0x18] sm:$0xff]
        %v428 = vld [vmem:[%s1 + $0x20] sm:$0xff]
        %v429 = vld [vmem:[%s1 + $0x28] sm:$0xff]
        %v430 = vld [vmem:[%s1 + $0x30] sm:$0xff]
        %v431 = vld [vmem:[%s1 + $0x38] sm:$0xff]
        %v432 = vld [vmem:[%s1 + $0x40] sm:$0xff]
        %v433 = vld [vmem:[%s1 + $0x48] sm:$0xff]
        %v434 = vld [vmem:[%s1 + $0x50] sm:$0xff]
        %v435 = vld [vmem:[%s1 + $0x58] sm:$0xff]
        %v436 = vld [vmem:[%s1 + $0x60] sm:$0xff]
        %v437 = vld [vmem:[%s1 + $0x68] sm:$0xff]
        %v438 = vld [vmem:[%s1 + $0x70] sm:$0xff]
        %v439 = vld [vmem:[%s1 + $0x78] sm:$0xff]
        %v440 = vld [vmem:[%s417 + $0x1] sm:$0xff]
        %v441 = vld [vmem:[%s417 + $0x9] sm:$0xff]
        %v442 = vld [vmem:[%s417 + $0x11] sm:$0xff]
        %v443 = vld [vmem:[%s417 + $0x19] sm:$0xf]
        %v444 = vpack.c.bf16 %v441, %v440
        %v445 = vpack.c.bf16 %v443, %v442
        %s446 = scalar_lea.vmem %s1, 128
        %v447 = vld [vmem:[%s446] sm:$0xff]
        %v448 = vld [vmem:[%s446 + $0x8] sm:$0xff]
        %v449 = vld [vmem:[%s446 + $0x10] sm:$0xff]
        %v450 = vld [vmem:[%s446 + $0x18] sm:$0xff]
        %v451 = vld [vmem:[%s446 + $0x20] sm:$0xff]
        %v452 = vld [vmem:[%s446 + $0x28] sm:$0xff]
        %v453 = vld [vmem:[%s446 + $0x30] sm:$0xff]
        %v454 = vld [vmem:[%s446 + $0x38] sm:$0xff]
        %v455 = vld [vmem:[%s446 + $0x40] sm:$0xff]
        %v456 = vld [vmem:[%s446 + $0x48] sm:$0xff]
        %v457 = vld [vmem:[%s446 + $0x50] sm:$0xff]
        %v458 = vld [vmem:[%s446 + $0x58] sm:$0xff]
        %v459 = vld [vmem:[%s446 + $0x60] sm:$0xff]
        %v460 = vld [vmem:[%s446 + $0x68] sm:$0xff]
        %v461 = vld [vmem:[%s446 + $0x70] sm:$0xff]
        %v462 = vld [vmem:[%s446 + $0x78] sm:$0xff]
        %v479 = vunpack.c.l.b16 %v447
        %v480 = vunpack.c.h.b16 %v447
        %v481 = vunpack.c.l.b16 %v448
        %v482 = vunpack.c.h.b16 %v448
        %v483 = vunpack.c.l.b16 %v449
        %v484 = vunpack.c.h.b16 %v449
        %v485 = vunpack.c.l.b16 %v450
        %v486 = vunpack.c.h.b16 %v450
        %v487 = vunpack.c.l.b16 %v451
        %v488 = vunpack.c.h.b16 %v451
        %v489 = vunpack.c.l.b16 %v452
        %v490 = vunpack.c.h.b16 %v452
        %v491 = vunpack.c.l.b16 %v453
        %v492 = vunpack.c.h.b16 %v453
        %v493 = vunpack.c.l.b16 %v454
        %v494 = vunpack.c.h.b16 %v454
        %v495 = vunpack.c.l.b16 %v455
        %v496 = vunpack.c.h.b16 %v455
        %v497 = vunpack.c.l.b16 %v456
        %v498 = vunpack.c.h.b16 %v456
        %v499 = vunpack.c.l.b16 %v457
        %v500 = vunpack.c.h.b16 %v457
        %v501 = vunpack.c.l.b16 %v458
        %v502 = vunpack.c.h.b16 %v458
        %v503 = vunpack.c.l.b16 %v459
        %v504 = vunpack.c.h.b16 %v459
        %v505 = vunpack.c.l.b16 %v460
        %v506 = vunpack.c.h.b16 %v460
        %v507 = vunpack.c.l.b16 %v461
        %v508 = vunpack.c.h.b16 %v461
        %v509 = vunpack.c.l.b16 %v462
        %v510 = vunpack.c.h.b16 %v462
        %v511 = vpack.c.b16 %v481, %v479
        %v512 = vpack.c.b16 %v482, %v480
        %v513 = vpack.c.b16 %v485, %v483
        %v514 = vpack.c.b16 %v486, %v484
        %v515 = vpack.c.b16 %v489, %v487
        %v516 = vpack.c.b16 %v490, %v488
        %v517 = vpack.c.b16 %v493, %v491
        %v518 = vpack.c.b16 %v494, %v492
        %v519 = vpack.c.b16 %v497, %v495
        %v520 = vpack.c.b16 %v498, %v496
        %v521 = vpack.c.b16 %v501, %v499
        %v522 = vpack.c.b16 %v502, %v500
        %v523 = vpack.c.b16 %v505, %v503
        %v524 = vpack.c.b16 %v506, %v504
        %v525 = vpack.c.b16 %v509, %v507
        %v526 = vpack.c.b16 %v510, %v508
        %543 = vmatpush.bf16.msra.mxu0 %v525
        %544 = vmatpush.bf16.msra.mxu0 %v523
        %545 = vmatpush.bf16.msra.mxu0 %v521
        %546 = vmatpush.bf16.msra.mxu0 %v519
        %547 = vmatpush.bf16.msra.mxu0 %v517
        %548 = vmatpush.bf16.msra.mxu0 %v515
        %549 = vmatpush.bf16.msra.mxu0 %v513
        %550 = vmatpush.bf16.msra.mxu0 %v511
        %551 = vmatmul.bf16.gmra.mxu0 %v444
        %v552 = vpop.f32.mrf.mxu0
        %v553 = vadd.f32 0.0, %v552
        %v554 = vpop.f32.mrf.mxu0
        %v555 = vadd.f32 0.0, %v554
        %556 = vmatmul.bf16.gmra.mxu0 %v445
        %v557 = vpop.f32.mrf.mxu0
        %v558 = vadd.f32 0.0, %v557
        %v559 = vpop.f32.mrf.mxu0
        %v560 = vadd.f32 0.0, %v559
        %561 = vdwg.mxu0
        %562 = vmatpush.bf16.msra.mxu0 %v526
        %563 = vmatpush.bf16.msra.mxu0 %v524
        %564 = vmatpush.bf16.msra.mxu0 %v522
        %565 = vmatpush.bf16.msra.mxu0 %v520
        %566 = vmatpush.bf16.msra.mxu0 %v518
        %567 = vmatpush.bf16.msra.mxu0 %v516
        %568 = vmatpush.bf16.msra.mxu0 %v514
        %569 = vmatpush.bf16.msra.mxu0 %v512
        %570 = vmatmul.bf16.gmra.mxu0 %v444
        %v571 = vpop.f32.mrf.mxu0
        %v572 = vadd.f32 0.0, %v571
        %v573 = vpop.f32.mrf.mxu0
        %v574 = vadd.f32 0.0, %v573
        %575 = vmatmul.bf16.gmra.mxu0 %v445
        %v576 = vpop.f32.mrf.mxu0
        %v577 = vadd.f32 0.0, %v576
        %v578 = vpop.f32.mrf.mxu0
        %v579 = vadd.f32 0.0, %v578
        %580 = vdwg.mxu0
        %v597 = vunpack.c.l.b16 %v424
        %v598 = vunpack.c.h.b16 %v424
        %v599 = vunpack.c.l.b16 %v425
        %v600 = vunpack.c.h.b16 %v425
        %v601 = vunpack.c.l.b16 %v426
        %v602 = vunpack.c.h.b16 %v426
        %v603 = vunpack.c.l.b16 %v427
        %v604 = vunpack.c.h.b16 %v427
        %v605 = vunpack.c.l.b16 %v428
        %v606 = vunpack.c.h.b16 %v428
        %v607 = vunpack.c.l.b16 %v429
        %v608 = vunpack.c.h.b16 %v429
        %v609 = vunpack.c.l.b16 %v430
        %v610 = vunpack.c.h.b16 %v430
        %v611 = vunpack.c.l.b16 %v431
        %v612 = vunpack.c.h.b16 %v431
        %v613 = vunpack.c.l.b16 %v432
        %v614 = vunpack.c.h.b16 %v432
        %v615 = vunpack.c.l.b16 %v433
        %v616 = vunpack.c.h.b16 %v433
        %v617 = vunpack.c.l.b16 %v434
        %v618 = vunpack.c.h.b16 %v434
        %v619 = vunpack.c.l.b16 %v435
        %v620 = vunpack.c.h.b16 %v435
        %v621 = vunpack.c.l.b16 %v436
        %v622 = vunpack.c.h.b16 %v436
        %v623 = vunpack.c.l.b16 %v437
        %v624 = vunpack.c.h.b16 %v437
        %v625 = vunpack.c.l.b16 %v438
        %v626 = vunpack.c.h.b16 %v438
        %v627 = vunpack.c.l.b16 %v439
        %v628 = vunpack.c.h.b16 %v439
        %v629 = vpack.c.b16 %v599, %v597
        %v630 = vpack.c.b16 %v600, %v598
        %v631 = vpack.c.b16 %v603, %v601
        %v632 = vpack.c.b16 %v604, %v602
        %v633 = vpack.c.b16 %v607, %v605
        %v634 = vpack.c.b16 %v608, %v606
        %v635 = vpack.c.b16 %v611, %v609
        %v636 = vpack.c.b16 %v612, %v610
        %v637 = vpack.c.b16 %v615, %v613
        %v638 = vpack.c.b16 %v616, %v614
        %v639 = vpack.c.b16 %v619, %v617
        %v640 = vpack.c.b16 %v620, %v618
        %v641 = vpack.c.b16 %v623, %v621
        %v642 = vpack.c.b16 %v624, %v622
        %v643 = vpack.c.b16 %v627, %v625
        %v644 = vpack.c.b16 %v628, %v626
        %661 = vmatpush.bf16.msra.mxu0 %v643
        %662 = vmatpush.bf16.msra.mxu0 %v641
        %663 = vmatpush.bf16.msra.mxu0 %v639
        %664 = vmatpush.bf16.msra.mxu0 %v637
        %665 = vmatpush.bf16.msra.mxu0 %v635
        %666 = vmatpush.bf16.msra.mxu0 %v633
        %667 = vmatpush.bf16.msra.mxu0 %v631
        %668 = vmatpush.bf16.msra.mxu0 %v629
        %669 = vmatmul.bf16.gmra.mxu0 %v422
        %v670 = vpop.f32.mrf.mxu0
        %v671 = vadd.f32 %v553, %v670
        %v672 = vpop.f32.mrf.mxu0
        %v673 = vadd.f32 %v555, %v672
        %674 = vmatmul.bf16.gmra.mxu0 %v423
        %v675 = vpop.f32.mrf.mxu0
        %v676 = vadd.f32 %v558, %v675
        %v677 = vpop.f32.mrf.mxu0
        %v678 = vadd.f32 %v560, %v677
        %679 = vdwg.mxu0
        %680 = vmatpush.bf16.msra.mxu0 %v644
        %681 = vmatpush.bf16.msra.mxu0 %v642
        %682 = vmatpush.bf16.msra.mxu0 %v640
        %683 = vmatpush.bf16.msra.mxu0 %v638
        %684 = vmatpush.bf16.msra.mxu0 %v636
        %685 = vmatpush.bf16.msra.mxu0 %v634
        %686 = vmatpush.bf16.msra.mxu0 %v632
        %687 = vmatpush.bf16.msra.mxu0 %v630
        %688 = vmatmul.bf16.gmra.mxu0 %v422
        %v689 = vpop.f32.mrf.mxu0
        %v690 = vadd.f32 %v572, %v689
        %v691 = vpop.f32.mrf.mxu0
        %v692 = vadd.f32 %v574, %v691
        %693 = vmatmul.bf16.gmra.mxu0 %v423
        %v694 = vpop.f32.mrf.mxu0
        %v695 = vadd.f32 %v577, %v694
        %v696 = vpop.f32.mrf.mxu0
        %v697 = vadd.f32 %v579, %v696
        %698 = vdwg.mxu0
        %v699 = vld [vmem:[%s417 + $0x2] sm:$0xff]
        %v700 = vld [vmem:[%s417 + $0xa] sm:$0xff]
        %v701 = vld [vmem:[%s417 + $0x12] sm:$0xff]
        %v702 = vld [vmem:[%s417 + $0x1a] sm:$0xf]
        %v703 = vpack.c.bf16 %v700, %v699
        %v704 = vpack.c.bf16 %v702, %v701
        %s705 = scalar_lea.vmem %s1, 256
        %v706 = vld [vmem:[%s705] sm:$0xff]
        %v707 = vld [vmem:[%s705 + $0x8] sm:$0xff]
        %v708 = vld [vmem:[%s705 + $0x10] sm:$0xff]
        %v709 = vld [vmem:[%s705 + $0x18] sm:$0xff]
        %v710 = vld [vmem:[%s705 + $0x20] sm:$0xff]
        %v711 = vld [vmem:[%s705 + $0x28] sm:$0xff]
        %v712 = vld [vmem:[%s705 + $0x30] sm:$0xff]
        %v713 = vld [vmem:[%s705 + $0x38] sm:$0xff]
        %v714 = vld [vmem:[%s705 + $0x40] sm:$0xff]
        %v715 = vld [vmem:[%s705 + $0x48] sm:$0xff]
        %v716 = vld [vmem:[%s705 + $0x50] sm:$0xff]
        %v717 = vld [vmem:[%s705 + $0x58] sm:$0xff]
        %v718 = vld [vmem:[%s705 + $0x60] sm:$0xff]
        %v719 = vld [vmem:[%s705 + $0x68] sm:$0xff]
        %v720 = vld [vmem:[%s705 + $0x70] sm:$0xff]
        %v721 = vld [vmem:[%s705 + $0x78] sm:$0xff]
        %v738 = vunpack.c.l.b16 %v706
        %v739 = vunpack.c.h.b16 %v706
        %v740 = vunpack.c.l.b16 %v707
        %v741 = vunpack.c.h.b16 %v707
        %v742 = vunpack.c.l.b16 %v708
        %v743 = vunpack.c.h.b16 %v708
        %v744 = vunpack.c.l.b16 %v709
        %v745 = vunpack.c.h.b16 %v709
        %v746 = vunpack.c.l.b16 %v710
        %v747 = vunpack.c.h.b16 %v710
        %v748 = vunpack.c.l.b16 %v711
        %v749 = vunpack.c.h.b16 %v711
        %v750 = vunpack.c.l.b16 %v712
        %v751 = vunpack.c.h.b16 %v712
        %v752 = vunpack.c.l.b16 %v713
        %v753 = vunpack.c.h.b16 %v713
        %v754 = vunpack.c.l.b16 %v714
        %v755 = vunpack.c.h.b16 %v714
        %v756 = vunpack.c.l.b16 %v715
        %v757 = vunpack.c.h.b16 %v715
        %v758 = vunpack.c.l.b16 %v716
        %v759 = vunpack.c.h.b16 %v716
        %v760 = vunpack.c.l.b16 %v717
        %v761 = vunpack.c.h.b16 %v717
        %v762 = vunpack.c.l.b16 %v718
        %v763 = vunpack.c.h.b16 %v718
        %v764 = vunpack.c.l.b16 %v719
        %v765 = vunpack.c.h.b16 %v719
        %v766 = vunpack.c.l.b16 %v720
        %v767 = vunpack.c.h.b16 %v720
        %v768 = vunpack.c.l.b16 %v721
        %v769 = vunpack.c.h.b16 %v721
        %v770 = vpack.c.b16 %v740, %v738
        %v771 = vpack.c.b16 %v741, %v739
        %v772 = vpack.c.b16 %v744, %v742
        %v773 = vpack.c.b16 %v745, %v743
        %v774 = vpack.c.b16 %v748, %v746
        %v775 = vpack.c.b16 %v749, %v747
        %v776 = vpack.c.b16 %v752, %v750
        %v777 = vpack.c.b16 %v753, %v751
        %v778 = vpack.c.b16 %v756, %v754
        %v779 = vpack.c.b16 %v757, %v755
        %v780 = vpack.c.b16 %v760, %v758
        %v781 = vpack.c.b16 %v761, %v759
        %v782 = vpack.c.b16 %v764, %v762
        %v783 = vpack.c.b16 %v765, %v763
        %v784 = vpack.c.b16 %v768, %v766
        %v785 = vpack.c.b16 %v769, %v767
        %802 = vmatpush.bf16.msra.mxu0 %v784
        %803 = vmatpush.bf16.msra.mxu0 %v782
        %804 = vmatpush.bf16.msra.mxu0 %v780
        %805 = vmatpush.bf16.msra.mxu0 %v778
        %806 = vmatpush.bf16.msra.mxu0 %v776
        %807 = vmatpush.bf16.msra.mxu0 %v774
        %808 = vmatpush.bf16.msra.mxu0 %v772
        %809 = vmatpush.bf16.msra.mxu0 %v770
        %810 = vmatmul.bf16.gmra.mxu0 %v703
        %v811 = vpop.f32.mrf.mxu0
        %v812 = vadd.f32 0.0, %v811
        %v813 = vpop.f32.mrf.mxu0
        %v814 = vadd.f32 0.0, %v813
        %815 = vmatmul.bf16.gmra.mxu0 %v704
        %v816 = vpop.f32.mrf.mxu0
        %v817 = vadd.f32 0.0, %v816
        %v818 = vpop.f32.mrf.mxu0
        %v819 = vadd.f32 0.0, %v818
        %820 = vdwg.mxu0
        %821 = vmatpush.bf16.msra.mxu0 %v785
        %822 = vmatpush.bf16.msra.mxu0 %v783
        %823 = vmatpush.bf16.msra.mxu0 %v781
        %824 = vmatpush.bf16.msra.mxu0 %v779
        %825 = vmatpush.bf16.msra.mxu0 %v777
        %826 = vmatpush.bf16.msra.mxu0 %v775
        %827 = vmatpush.bf16.msra.mxu0 %v773
        %828 = vmatpush.bf16.msra.mxu0 %v771
        %829 = vmatmul.bf16.gmra.mxu0 %v703
        %v830 = vpop.f32.mrf.mxu0
        %v831 = vadd.f32 0.0, %v830
        %v832 = vpop.f32.mrf.mxu0
        %v833 = vadd.f32 0.0, %v832
        %834 = vmatmul.bf16.gmra.mxu0 %v704
        %v835 = vpop.f32.mrf.mxu0
        %v836 = vadd.f32 0.0, %v835
        %v837 = vpop.f32.mrf.mxu0
        %v838 = vadd.f32 0.0, %v837
        %839 = vdwg.mxu0
        %v840 = vadd.f32 %v671, %v812
        %v841 = vadd.f32 %v690, %v831
        %v842 = vadd.f32 %v673, %v814
        %v843 = vadd.f32 %v692, %v833
        %v844 = vadd.f32 %v676, %v817
        %v845 = vadd.f32 %v695, %v836
        %v846 = vadd.f32 %v678, %v819
        %v847 = vadd.f32 %v697, %v838
        %v848 = vld [vmem:[%s417 + $0x3] sm:$0xff]
        %v849 = vld [vmem:[%s417 + $0xb] sm:$0xff]
        %v850 = vld [vmem:[%s417 + $0x13] sm:$0xff]
        %v851 = vld [vmem:[%s417 + $0x1b] sm:$0xf]
        %v852 = vpack.c.bf16 %v849, %v848
        %v853 = vpack.c.bf16 %v851, %v850
        %s854 = scalar_lea.vmem %s1, 384
        %v855 = vld [vmem:[%s854] sm:$0xff]
        %v856 = vld [vmem:[%s854 + $0x8] sm:$0xff]
        %v857 = vld [vmem:[%s854 + $0x10] sm:$0xff]
        %v858 = vld [vmem:[%s854 + $0x18] sm:$0xff]
        %v859 = vld [vmem:[%s854 + $0x20] sm:$0xff]
        %v860 = vld [vmem:[%s854 + $0x28] sm:$0xff]
        %v861 = vld [vmem:[%s854 + $0x30] sm:$0xff]
        %v862 = vld [vmem:[%s854 + $0x38] sm:$0xff]
        %v863 = vld [vmem:[%s854 + $0x40] sm:$0xff]
        %v864 = vld [vmem:[%s854 + $0x48] sm:$0xff]
        %v865 = vld [vmem:[%s854 + $0x50] sm:$0xff]
        %v866 = vld [vmem:[%s854 + $0x58] sm:$0xff]
        %v867 = vld [vmem:[%s854 + $0x60] sm:$0xff]
        %v868 = vld [vmem:[%s854 + $0x68] sm:$0xff]
        %v869 = vld [vmem:[%s854 + $0x70] sm:$0xff]
        %v870 = vld [vmem:[%s854 + $0x78] sm:$0xff]
        %v887 = vunpack.c.l.b16 %v855
        %v888 = vunpack.c.h.b16 %v855
        %v889 = vunpack.c.l.b16 %v856
        %v890 = vunpack.c.h.b16 %v856
        %v891 = vunpack.c.l.b16 %v857
        %v892 = vunpack.c.h.b16 %v857
        %v893 = vunpack.c.l.b16 %v858
        %v894 = vunpack.c.h.b16 %v858
        %v895 = vunpack.c.l.b16 %v859
        %v896 = vunpack.c.h.b16 %v859
        %v897 = vunpack.c.l.b16 %v860
        %v898 = vunpack.c.h.b16 %v860
        %v899 = vunpack.c.l.b16 %v861
        %v900 = vunpack.c.h.b16 %v861
        %v901 = vunpack.c.l.b16 %v862
        %v902 = vunpack.c.h.b16 %v862
        %v903 = vunpack.c.l.b16 %v863
        %v904 = vunpack.c.h.b16 %v863
        %v905 = vunpack.c.l.b16 %v864
        %v906 = vunpack.c.h.b16 %v864
        %v907 = vunpack.c.l.b16 %v865
        %v908 = vunpack.c.h.b16 %v865
        %v909 = vunpack.c.l.b16 %v866
        %v910 = vunpack.c.h.b16 %v866
        %v911 = vunpack.c.l.b16 %v867
        %v912 = vunpack.c.h.b16 %v867
        %v913 = vunpack.c.l.b16 %v868
        %v914 = vunpack.c.h.b16 %v868
        %v915 = vunpack.c.l.b16 %v869
        %v916 = vunpack.c.h.b16 %v869
        %v917 = vunpack.c.l.b16 %v870
        %v918 = vunpack.c.h.b16 %v870
        %v919 = vpack.c.b16 %v889, %v887
        %v920 = vpack.c.b16 %v890, %v888
        %v921 = vpack.c.b16 %v893, %v891
        %v922 = vpack.c.b16 %v894, %v892
        %v923 = vpack.c.b16 %v897, %v895
        %v924 = vpack.c.b16 %v898, %v896
        %v925 = vpack.c.b16 %v901, %v899
        %v926 = vpack.c.b16 %v902, %v900
        %v927 = vpack.c.b16 %v905, %v903
        %v928 = vpack.c.b16 %v906, %v904
        %v929 = vpack.c.b16 %v909, %v907
        %v930 = vpack.c.b16 %v910, %v908
        %v931 = vpack.c.b16 %v913, %v911
        %v932 = vpack.c.b16 %v914, %v912
        %v933 = vpack.c.b16 %v917, %v915
        %v934 = vpack.c.b16 %v918, %v916
        %951 = vmatpush.bf16.msra.mxu0 %v933
        %952 = vmatpush.bf16.msra.mxu0 %v931
        %953 = vmatpush.bf16.msra.mxu0 %v929
        %954 = vmatpush.bf16.msra.mxu0 %v927
        %955 = vmatpush.bf16.msra.mxu0 %v925
        %956 = vmatpush.bf16.msra.mxu0 %v923
        %957 = vmatpush.bf16.msra.mxu0 %v921
        %958 = vmatpush.bf16.msra.mxu0 %v919
        %959 = vmatmul.bf16.gmra.mxu0 %v852
        %v960 = vpop.f32.mrf.mxu0
        %v961 = vadd.f32 0.0, %v960
        %v962 = vpop.f32.mrf.mxu0
        %v963 = vadd.f32 0.0, %v962
        %964 = vmatmul.bf16.gmra.mxu0 %v853
        %v965 = vpop.f32.mrf.mxu0
        %v966 = vadd.f32 0.0, %v965
        %v967 = vpop.f32.mrf.mxu0
        %v968 = vadd.f32 0.0, %v967
        %969 = vdwg.mxu0
        %970 = vmatpush.bf16.msra.mxu0 %v934
        %971 = vmatpush.bf16.msra.mxu0 %v932
        %972 = vmatpush.bf16.msra.mxu0 %v930
        %973 = vmatpush.bf16.msra.mxu0 %v928
        %974 = vmatpush.bf16.msra.mxu0 %v926
        %975 = vmatpush.bf16.msra.mxu0 %v924
        %976 = vmatpush.bf16.msra.mxu0 %v922
        %977 = vmatpush.bf16.msra.mxu0 %v920
        %978 = vmatmul.bf16.gmra.mxu0 %v852
        %v979 = vpop.f32.mrf.mxu0
        %v980 = vadd.f32 0.0, %v979
        %v981 = vpop.f32.mrf.mxu0
        %v982 = vadd.f32 0.0, %v981
        %983 = vmatmul.bf16.gmra.mxu0 %v853
        %v984 = vpop.f32.mrf.mxu0
        %v985 = vadd.f32 0.0, %v984
        %v986 = vpop.f32.mrf.mxu0
        %v987 = vadd.f32 0.0, %v986
        %988 = vdwg.mxu0
        %v989 = vadd.f32 %v840, %v961
        %v990 = vadd.f32 %v841, %v980
        %v991 = vadd.f32 %v842, %v963
        %v992 = vadd.f32 %v843, %v982
        %v993 = vadd.f32 %v844, %v966
        %v994 = vadd.f32 %v845, %v985
        %v995 = vadd.f32 %v846, %v968
        %v996 = vadd.f32 %v847, %v987
        %v997 = vld [vmem:[%s417 + $0x4] sm:$0xff]
        %v998 = vld [vmem:[%s417 + $0xc] sm:$0xff]
        %v999 = vld [vmem:[%s417 + $0x14] sm:$0xff]
        %v1000 = vld [vmem:[%s417 + $0x1c] sm:$0xf]
        %v1001 = vpack.c.bf16 %v998, %v997
        %v1002 = vpack.c.bf16 %v1000, %v999
        %s1003 = scalar_lea.vmem %s1, 512
        %v1004 = vld [vmem:[%s1003] sm:$0xff]
        %v1005 = vld [vmem:[%s1003 + $0x8] sm:$0xff]
        %v1006 = vld [vmem:[%s1003 + $0x10] sm:$0xff]
        %v1007 = vld [vmem:[%s1003 + $0x18] sm:$0xff]
        %v1008 = vld [vmem:[%s1003 + $0x20] sm:$0xff]
        %v1009 = vld [vmem:[%s1003 + $0x28] sm:$0xff]
        %v1010 = vld [vmem:[%s1003 + $0x30] sm:$0xff]
        %v1011 = vld [vmem:[%s1003 + $0x38] sm:$0xff]
        %v1012 = vld [vmem:[%s1003 + $0x40] sm:$0xff]
        %v1013 = vld [vmem:[%s1003 + $0x48] sm:$0xff]
        %v1014 = vld [vmem:[%s1003 + $0x50] sm:$0xff]
        %v1015 = vld [vmem:[%s1003 + $0x58] sm:$0xff]
        %v1016 = vld [vmem:[%s1003 + $0x60] sm:$0xff]
        %v1017 = vld [vmem:[%s1003 + $0x68] sm:$0xff]
        %v1018 = vld [vmem:[%s1003 + $0x70] sm:$0xff]
        %v1019 = vld [vmem:[%s1003 + $0x78] sm:$0xff]
        %v1036 = vunpack.c.l.b16 %v1004
        %v1037 = vunpack.c.h.b16 %v1004
        %v1038 = vunpack.c.l.b16 %v1005
        %v1039 = vunpack.c.h.b16 %v1005
        %v1040 = vunpack.c.l.b16 %v1006
        %v1041 = vunpack.c.h.b16 %v1006
        %v1042 = vunpack.c.l.b16 %v1007
        %v1043 = vunpack.c.h.b16 %v1007
        %v1044 = vunpack.c.l.b16 %v1008
        %v1045 = vunpack.c.h.b16 %v1008
        %v1046 = vunpack.c.l.b16 %v1009
        %v1047 = vunpack.c.h.b16 %v1009
        %v1048 = vunpack.c.l.b16 %v1010
        %v1049 = vunpack.c.h.b16 %v1010
        %v1050 = vunpack.c.l.b16 %v1011
        %v1051 = vunpack.c.h.b16 %v1011
        %v1052 = vunpack.c.l.b16 %v1012
        %v1053 = vunpack.c.h.b16 %v1012
        %v1054 = vunpack.c.l.b16 %v1013
        %v1055 = vunpack.c.h.b16 %v1013
        %v1056 = vunpack.c.l.b16 %v1014
        %v1057 = vunpack.c.h.b16 %v1014
        %v1058 = vunpack.c.l.b16 %v1015
        %v1059 = vunpack.c.h.b16 %v1015
        %v1060 = vunpack.c.l.b16 %v1016
        %v1061 = vunpack.c.h.b16 %v1016
        %v1062 = vunpack.c.l.b16 %v1017
        %v1063 = vunpack.c.h.b16 %v1017
        %v1064 = vunpack.c.l.b16 %v1018
        %v1065 = vunpack.c.h.b16 %v1018
        %v1066 = vunpack.c.l.b16 %v1019
        %v1067 = vunpack.c.h.b16 %v1019
        %v1068 = vpack.c.b16 %v1038, %v1036
        %v1069 = vpack.c.b16 %v1039, %v1037
        %v1070 = vpack.c.b16 %v1042, %v1040
        %v1071 = vpack.c.b16 %v1043, %v1041
        %v1072 = vpack.c.b16 %v1046, %v1044
        %v1073 = vpack.c.b16 %v1047, %v1045
        %v1074 = vpack.c.b16 %v1050, %v1048
        %v1075 = vpack.c.b16 %v1051, %v1049
        %v1076 = vpack.c.b16 %v1054, %v1052
        %v1077 = vpack.c.b16 %v1055, %v1053
        %v1078 = vpack.c.b16 %v1058, %v1056
        %v1079 = vpack.c.b16 %v1059, %v1057
        %v1080 = vpack.c.b16 %v1062, %v1060
        %v1081 = vpack.c.b16 %v1063, %v1061
        %v1082 = vpack.c.b16 %v1066, %v1064
        %v1083 = vpack.c.b16 %v1067, %v1065
        %1100 = vmatpush.bf16.msra.mxu0 %v1082
        %1101 = vmatpush.bf16.msra.mxu0 %v1080
        %1102 = vmatpush.bf16.msra.mxu0 %v1078
        %1103 = vmatpush.bf16.msra.mxu0 %v1076
        %1104 = vmatpush.bf16.msra.mxu0 %v1074
        %1105 = vmatpush.bf16.msra.mxu0 %v1072
        %1106 = vmatpush.bf16.msra.mxu0 %v1070
        %1107 = vmatpush.bf16.msra.mxu0 %v1068
        %1108 = vmatmul.bf16.gmra.mxu0 %v1001
        %v1109 = vpop.f32.mrf.mxu0
        %v1110 = vadd.f32 0.0, %v1109
        %v1111 = vpop.f32.mrf.mxu0
        %v1112 = vadd.f32 0.0, %v1111
        %1113 = vmatmul.bf16.gmra.mxu0 %v1002
        %v1114 = vpop.f32.mrf.mxu0
        %v1115 = vadd.f32 0.0, %v1114
        %v1116 = vpop.f32.mrf.mxu0
        %v1117 = vadd.f32 0.0, %v1116
        %1118 = vdwg.mxu0
        %1119 = vmatpush.bf16.msra.mxu0 %v1083
        %1120 = vmatpush.bf16.msra.mxu0 %v1081
        %1121 = vmatpush.bf16.msra.mxu0 %v1079
        %1122 = vmatpush.bf16.msra.mxu0 %v1077
        %1123 = vmatpush.bf16.msra.mxu0 %v1075
        %1124 = vmatpush.bf16.msra.mxu0 %v1073
        %1125 = vmatpush.bf16.msra.mxu0 %v1071
        %1126 = vmatpush.bf16.msra.mxu0 %v1069
        %1127 = vmatmul.bf16.gmra.mxu0 %v1001
        %v1128 = vpop.f32.mrf.mxu0
        %v1129 = vadd.f32 0.0, %v1128
        %v1130 = vpop.f32.mrf.mxu0
        %v1131 = vadd.f32 0.0, %v1130
        %1132 = vmatmul.bf16.gmra.mxu0 %v1002
        %v1133 = vpop.f32.mrf.mxu0
        %v1134 = vadd.f32 0.0, %v1133
        %v1135 = vpop.f32.mrf.mxu0
        %v1136 = vadd.f32 0.0, %v1135
        %1137 = vdwg.mxu0
        %v1138 = vadd.f32 %v989, %v1110
        %v1139 = vadd.f32 %v990, %v1129
        %v1140 = vadd.f32 %v991, %v1112
        %v1141 = vadd.f32 %v992, %v1131
        %v1142 = vadd.f32 %v993, %v1115
        %v1143 = vadd.f32 %v994, %v1134
        %v1144 = vadd.f32 %v995, %v1117
        %v1145 = vadd.f32 %v996, %v1136
        %v1146 = vld [vmem:[%s2] sm:$0x3]
        %v1148 = vperm.slane %v1146, 0
        %v1149 = vperm.slane %v1146, 1
        %v1152 = vadd.f32 %v1138, %v1148
        %v1153 = vadd.f32 %v1139, %v1149
        %v1154 = vadd.f32 %v1140, %v1148
        %v1155 = vadd.f32 %v1141, %v1149
        %v1156 = vadd.f32 %v1142, %v1148
        %v1157 = vadd.f32 %v1143, %v1149
        %v1158 = vadd.f32 %v1144, %v1148
        %v1159 = vadd.f32 %v1145, %v1149
        %vm1160 = vcmp.gt.f32.partialorder %v1152, 0.0
        %vm1161 = vcmp.gt.f32.partialorder %v1153, 0.0
        %vm1162 = vcmp.gt.f32.partialorder %v1154, 0.0
        %vm1163 = vcmp.gt.f32.partialorder %v1155, 0.0
        %vm1164 = vcmp.gt.f32.partialorder %v1156, 0.0
        %vm1165 = vcmp.gt.f32.partialorder %v1157, 0.0
        %vm1166 = vcmp.gt.f32.partialorder %v1158, 0.0
        %vm1167 = vcmp.gt.f32.partialorder %v1159, 0.0
        %v1168 = vmul.f32 %v1152, 0.01
        %v1169 = vmul.f32 %v1153, 0.01
        %v1170 = vmul.f32 %v1154, 0.01
        %v1171 = vmul.f32 %v1155, 0.01
        %v1172 = vmul.f32 %v1156, 0.01
        %v1173 = vmul.f32 %v1157, 0.01
        %v1174 = vmul.f32 %v1158, 0.01
        %v1175 = vmul.f32 %v1159, 0.01
        %v1176 = vsel %vm1160, %v1152, %v1168
        %v1177 = vsel %vm1161, %v1153, %v1169
        %v1178 = vsel %vm1162, %v1154, %v1170
        %v1179 = vsel %vm1163, %v1155, %v1171
        %v1180 = vsel %vm1164, %v1156, %v1172
        %v1181 = vsel %vm1165, %v1157, %v1173
        %v1182 = vsel %vm1166, %v1158, %v1174
        %v1183 = vsel %vm1167, %v1159, %v1175
        %v1192 = vrot.slane %v1177, 6
        %v1193 = vrot.slane %v1179, 6
        %v1194 = vrot.slane %v1181, 6
        %v1195 = vrot.slane %v1183, 6
        %vm1196 = vcmask 1041408
        %v1197 = vsel %vm1196, %v1176, %v1192
        %vm1198 = vcmask 1043458
        %v1199 = vsel %vm1198, %v1176, %v1192
        %v1200 = vrot.slane %v1199, 2
        %vm1201 = vcmask 1045508
        %v1202 = vsel %vm1201, %v1176, %v1192
        %v1203 = vrot.slane %v1202, 4
        %vm1204 = vcmask 1045504
        %v1205 = vsel %vm1204, %v1192, %v1176
        %v1206 = vrot.slane %v1205, 6
        %v1207 = vsel %vm1196, %v1178, %v1193
        %v1208 = vsel %vm1198, %v1178, %v1193
        %v1209 = vrot.slane %v1208, 2
        %v1210 = vsel %vm1201, %v1178, %v1193
        %v1211 = vrot.slane %v1210, 4
        %v1212 = vsel %vm1204, %v1193, %v1178
        %v1213 = vrot.slane %v1212, 6
        %v1214 = vsel %vm1196, %v1180, %v1194
        %v1215 = vsel %vm1198, %v1180, %v1194
        %v1216 = vrot.slane %v1215, 2
        %v1217 = vsel %vm1201, %v1180, %v1194
        %v1218 = vrot.slane %v1217, 4
        %v1219 = vsel %vm1204, %v1194, %v1180
        %v1220 = vrot.slane %v1219, 6
        %v1221 = vsel %vm1196, %v1182, %v1195
        %v1222 = vsel %vm1198, %v1182, %v1195
        %v1223 = vrot.slane %v1222, 2
        %1224 = vst [vmem:[#allocation1] ss:$4 sm:$0xff] %v1197
        %v1225 = vld.sshfl [vmem:[#allocation1] sm:$0xff pattern:$0x73625140]
        %v1226 = vld.sshfl [vmem:[#allocation1 + $0x8] sm:$0xff pattern:$0x73625140]
        %s1227 = scalar_lea.vmem [#allocation1], 32
        %1228 = vst [vmem:[%s1227] ss:$4 sm:$0xff] %v1200
        %v1229 = vld.sshfl [vmem:[#allocation1 + $0x20] sm:$0xff pattern:$0x73625140]
        %v1230 = vld.sshfl [vmem:[#allocation1 + $0x28] sm:$0xff pattern:$0x73625140]
        %1231 = vst [vmem:[#allocation1] ss:$4 sm:$0xff] %v1203
        %v1232 = vld.sshfl [vmem:[#allocation1] sm:$0xff pattern:$0x73625140]
        %v1233 = vld.sshfl [vmem:[#allocation1 + $0x8] sm:$0xff pattern:$0x73625140]
        %1234 = vst [vmem:[%s1227] ss:$4 sm:$0xff] %v1206
        %v1235 = vld.sshfl [vmem:[#allocation1 + $0x20] sm:$0xff pattern:$0x73625140]
        %v1236 = vld.sshfl [vmem:[#allocation1 + $0x28] sm:$0xff pattern:$0x73625140]
        %1237 = vst [vmem:[#allocation1] ss:$4 sm:$0xff] %v1207
        %v1238 = vld.sshfl [vmem:[#allocation1] sm:$0xff pattern:$0x73625140]
        %v1239 = vld.sshfl [vmem:[#allocation1 + $0x8] sm:$0xff pattern:$0x73625140]
        %1240 = vst [vmem:[%s1227] ss:$4 sm:$0xff] %v1209
        %v1241 = vld.sshfl [vmem:[#allocation1 + $0x20] sm:$0xff pattern:$0x73625140]
        %v1242 = vld.sshfl [vmem:[#allocation1 + $0x28] sm:$0xff pattern:$0x73625140]
        %1243 = vst [vmem:[#allocation1] ss:$4 sm:$0xff] %v1211
        %v1244 = vld.sshfl [vmem:[#allocation1] sm:$0xff pattern:$0x73625140]
        %v1245 = vld.sshfl [vmem:[#allocation1 + $0x8] sm:$0xff pattern:$0x73625140]
        %1246 = vst [vmem:[%s1227] ss:$4 sm:$0xff] %v1213
        %v1247 = vld.sshfl [vmem:[#allocation1 + $0x20] sm:$0xff pattern:$0x73625140]
        %v1248 = vld.sshfl [vmem:[#allocation1 + $0x28] sm:$0xff pattern:$0x73625140]
        %1249 = vst [vmem:[#allocation1] ss:$4 sm:$0xff] %v1214
        %v1250 = vld.sshfl [vmem:[#allocation1] sm:$0xff pattern:$0x73625140]
        %v1251 = vld.sshfl [vmem:[#allocation1 + $0x8] sm:$0xff pattern:$0x73625140]
        %1252 = vst [vmem:[%s1227] ss:$4 sm:$0xff] %v1216
        %v1253 = vld.sshfl [vmem:[#allocation1 + $0x20] sm:$0xff pattern:$0x73625140]
        %v1254 = vld.sshfl [vmem:[#allocation1 + $0x28] sm:$0xff pattern:$0x73625140]
        %1255 = vst [vmem:[#allocation1] ss:$4 sm:$0xff] %v1218
        %v1256 = vld.sshfl [vmem:[#allocation1] sm:$0xff pattern:$0x73625140]
        %v1257 = vld.sshfl [vmem:[#allocation1 + $0x8] sm:$0xff pattern:$0x73625140]
        %1258 = vst [vmem:[%s1227] ss:$4 sm:$0xff] %v1220
        %v1259 = vld.sshfl [vmem:[#allocation1 + $0x20] sm:$0xff pattern:$0x73625140]
        %v1260 = vld.sshfl [vmem:[#allocation1 + $0x28] sm:$0xff pattern:$0x73625140]
        %1261 = vst [vmem:[#allocation1] ss:$4 sm:$0xff] %v1221
        %v1262 = vld.sshfl [vmem:[#allocation1] sm:$0xff pattern:$0x73625140]
        %v1263 = vld.sshfl [vmem:[#allocation1 + $0x8] sm:$0xff pattern:$0x73625140]
        %1264 = vst [vmem:[%s1227] ss:$4 sm:$0xff] %v1223
        %v1265 = vld.sshfl [vmem:[#allocation1 + $0x20] sm:$0xff pattern:$0x73625140]
        %v1266 = vld.sshfl [vmem:[#allocation1 + $0x28] sm:$0xff pattern:$0x73625140]
        %v1295 = vsel %vm1196, %v1225, -inf
        %v1296 = vrot.slane %v1295, 4
        %v1297 = vmax.f32 %v1295, %v1296
        %v1298 = vrot.slane %v1297, 2
        %v1299 = vmax.f32 %v1297, %v1298
        %v1300 = vrot.slane %v1299, 1
        %v1301 = vmax.f32 %v1299, %v1300
        %v1302 = vsel %vm1196, %v1226, -inf
        %v1303 = vrot.slane %v1302, 4
        %v1304 = vmax.f32 %v1302, %v1303
        %v1305 = vrot.slane %v1304, 2
        %v1306 = vmax.f32 %v1304, %v1305
        %v1307 = vrot.slane %v1306, 1
        %v1308 = vmax.f32 %v1306, %v1307
        %v1309 = vsel %vm1196, %v1229, -inf
        %v1310 = vrot.slane %v1309, 4
        %v1311 = vmax.f32 %v1309, %v1310
        %v1312 = vrot.slane %v1311, 2
        %v1313 = vmax.f32 %v1311, %v1312
        %v1314 = vrot.slane %v1313, 1
        %v1315 = vmax.f32 %v1313, %v1314
        %v1316 = vsel %vm1196, %v1230, -inf
        %v1317 = vrot.slane %v1316, 4
        %v1318 = vmax.f32 %v1316, %v1317
        %v1319 = vrot.slane %v1318, 2
        %v1320 = vmax.f32 %v1318, %v1319
        %v1321 = vrot.slane %v1320, 1
        %v1322 = vmax.f32 %v1320, %v1321
        %v1323 = vsel %vm1196, %v1232, -inf
        %v1324 = vrot.slane %v1323, 4
        %v1325 = vmax.f32 %v1323, %v1324
        %v1326 = vrot.slane %v1325, 2
        %v1327 = vmax.f32 %v1325, %v1326
        %v1328 = vrot.slane %v1327, 1
        %v1329 = vmax.f32 %v1327, %v1328
        %v1330 = vsel %vm1196, %v1233, -inf
        %v1331 = vrot.slane %v1330, 4
        %v1332 = vmax.f32 %v1330, %v1331
        %v1333 = vrot.slane %v1332, 2
        %v1334 = vmax.f32 %v1332, %v1333
        %v1335 = vrot.slane %v1334, 1
        %v1336 = vmax.f32 %v1334, %v1335
        %v1337 = vsel %vm1196, %v1235, -inf
        %v1338 = vrot.slane %v1337, 4
        %v1339 = vmax.f32 %v1337, %v1338
        %v1340 = vrot.slane %v1339, 2
        %v1341 = vmax.f32 %v1339, %v1340
        %v1342 = vrot.slane %v1341, 1
        %v1343 = vmax.f32 %v1341, %v1342
        %v1344 = vsel %vm1196, %v1236, -inf
        %v1345 = vrot.slane %v1344, 4
        %v1346 = vmax.f32 %v1344, %v1345
        %v1347 = vrot.slane %v1346, 2
        %v1348 = vmax.f32 %v1346, %v1347
        %v1349 = vrot.slane %v1348, 1
        %v1350 = vmax.f32 %v1348, %v1349
        %v1351 = vsel %vm1196, %v1238, -inf
        %v1352 = vrot.slane %v1351, 4
        %v1353 = vmax.f32 %v1351, %v1352
        %v1354 = vrot.slane %v1353, 2
        %v1355 = vmax.f32 %v1353, %v1354
        %v1356 = vrot.slane %v1355, 1
        %v1357 = vmax.f32 %v1355, %v1356
        %v1358 = vsel %vm1196, %v1239, -inf
        %v1359 = vrot.slane %v1358, 4
        %v1360 = vmax.f32 %v1358, %v1359
        %v1361 = vrot.slane %v1360, 2
        %v1362 = vmax.f32 %v1360, %v1361
        %v1363 = vrot.slane %v1362, 1
        %v1364 = vmax.f32 %v1362, %v1363
        %v1365 = vsel %vm1196, %v1241, -inf
        %v1366 = vrot.slane %v1365, 4
        %v1367 = vmax.f32 %v1365, %v1366
        %v1368 = vrot.slane %v1367, 2
        %v1369 = vmax.f32 %v1367, %v1368
        %v1370 = vrot.slane %v1369, 1
        %v1371 = vmax.f32 %v1369, %v1370
        %v1372 = vsel %vm1196, %v1242, -inf
        %v1373 = vrot.slane %v1372, 4
        %v1374 = vmax.f32 %v1372, %v1373
        %v1375 = vrot.slane %v1374, 2
        %v1376 = vmax.f32 %v1374, %v1375
        %v1377 = vrot.slane %v1376, 1
        %v1378 = vmax.f32 %v1376, %v1377
        %v1379 = vsel %vm1196, %v1244, -inf
        %v1380 = vrot.slane %v1379, 4
        %v1381 = vmax.f32 %v1379, %v1380
        %v1382 = vrot.slane %v1381, 2
        %v1383 = vmax.f32 %v1381, %v1382
        %v1384 = vrot.slane %v1383, 1
        %v1385 = vmax.f32 %v1383, %v1384
        %v1386 = vsel %vm1196, %v1245, -inf
        %v1387 = vrot.slane %v1386, 4
        %v1388 = vmax.f32 %v1386, %v1387
        %v1389 = vrot.slane %v1388, 2
        %v1390 = vmax.f32 %v1388, %v1389
        %v1391 = vrot.slane %v1390, 1
        %v1392 = vmax.f32 %v1390, %v1391
        %v1393 = vsel %vm1196, %v1247, -inf
        %v1394 = vrot.slane %v1393, 4
        %v1395 = vmax.f32 %v1393, %v1394
        %v1396 = vrot.slane %v1395, 2
        %v1397 = vmax.f32 %v1395, %v1396
        %v1398 = vrot.slane %v1397, 1
        %v1399 = vmax.f32 %v1397, %v1398
        %v1400 = vsel %vm1196, %v1248, -inf
        %v1401 = vrot.slane %v1400, 4
        %v1402 = vmax.f32 %v1400, %v1401
        %v1403 = vrot.slane %v1402, 2
        %v1404 = vmax.f32 %v1402, %v1403
        %v1405 = vrot.slane %v1404, 1
        %v1406 = vmax.f32 %v1404, %v1405
        %v1407 = vsel %vm1196, %v1250, -inf
        %v1408 = vrot.slane %v1407, 4
        %v1409 = vmax.f32 %v1407, %v1408
        %v1410 = vrot.slane %v1409, 2
        %v1411 = vmax.f32 %v1409, %v1410
        %v1412 = vrot.slane %v1411, 1
        %v1413 = vmax.f32 %v1411, %v1412
        %v1414 = vsel %vm1196, %v1251, -inf
        %v1415 = vrot.slane %v1414, 4
        %v1416 = vmax.f32 %v1414, %v1415
        %v1417 = vrot.slane %v1416, 2
        %v1418 = vmax.f32 %v1416, %v1417
        %v1419 = vrot.slane %v1418, 1
        %v1420 = vmax.f32 %v1418, %v1419
        %v1421 = vsel %vm1196, %v1253, -inf
        %v1422 = vrot.slane %v1421, 4
        %v1423 = vmax.f32 %v1421, %v1422
        %v1424 = vrot.slane %v1423, 2
        %v1425 = vmax.f32 %v1423, %v1424
        %v1426 = vrot.slane %v1425, 1
        %v1427 = vmax.f32 %v1425, %v1426
        %v1428 = vsel %vm1196, %v1254, -inf
        %v1429 = vrot.slane %v1428, 4
        %v1430 = vmax.f32 %v1428, %v1429
        %v1431 = vrot.slane %v1430, 2
        %v1432 = vmax.f32 %v1430, %v1431
        %v1433 = vrot.slane %v1432, 1
        %v1434 = vmax.f32 %v1432, %v1433
        %v1435 = vsel %vm1196, %v1256, -inf
        %v1436 = vrot.slane %v1435, 4
        %v1437 = vmax.f32 %v1435, %v1436
        %v1438 = vrot.slane %v1437, 2
        %v1439 = vmax.f32 %v1437, %v1438
        %v1440 = vrot.slane %v1439, 1
        %v1441 = vmax.f32 %v1439, %v1440
        %v1442 = vsel %vm1196, %v1257, -inf
        %v1443 = vrot.slane %v1442, 4
        %v1444 = vmax.f32 %v1442, %v1443
        %v1445 = vrot.slane %v1444, 2
        %v1446 = vmax.f32 %v1444, %v1445
        %v1447 = vrot.slane %v1446, 1
        %v1448 = vmax.f32 %v1446, %v1447
        %v1449 = vsel %vm1196, %v1259, -inf
        %v1450 = vrot.slane %v1449, 4
        %v1451 = vmax.f32 %v1449, %v1450
        %v1452 = vrot.slane %v1451, 2
        %v1453 = vmax.f32 %v1451, %v1452
        %v1454 = vrot.slane %v1453, 1
        %v1455 = vmax.f32 %v1453, %v1454
        %v1456 = vsel %vm1196, %v1260, -inf
        %v1457 = vrot.slane %v1456, 4
        %v1458 = vmax.f32 %v1456, %v1457
        %v1459 = vrot.slane %v1458, 2
        %v1460 = vmax.f32 %v1458, %v1459
        %v1461 = vrot.slane %v1460, 1
        %v1462 = vmax.f32 %v1460, %v1461
        %v1463 = vsel %vm1196, %v1262, -inf
        %v1464 = vrot.slane %v1463, 4
        %v1465 = vmax.f32 %v1463, %v1464
        %v1466 = vrot.slane %v1465, 2
        %v1467 = vmax.f32 %v1465, %v1466
        %v1468 = vrot.slane %v1467, 1
        %v1469 = vmax.f32 %v1467, %v1468
        %v1470 = vsel %vm1196, %v1263, -inf
        %v1471 = vrot.slane %v1470, 4
        %v1472 = vmax.f32 %v1470, %v1471
        %v1473 = vrot.slane %v1472, 2
        %v1474 = vmax.f32 %v1472, %v1473
        %v1475 = vrot.slane %v1474, 1
        %v1476 = vmax.f32 %v1474, %v1475
        %v1477 = vsel %vm1196, %v1265, -inf
        %v1478 = vrot.slane %v1477, 4
        %v1479 = vmax.f32 %v1477, %v1478
        %v1480 = vrot.slane %v1479, 2
        %v1481 = vmax.f32 %v1479, %v1480
        %v1482 = vrot.slane %v1481, 1
        %v1483 = vmax.f32 %v1481, %v1482
        %v1484 = vsel %vm1196, %v1266, -inf
        %v1485 = vrot.slane %v1484, 4
        %v1486 = vmax.f32 %v1484, %v1485
        %v1487 = vrot.slane %v1486, 2
        %v1488 = vmax.f32 %v1486, %v1487
        %v1489 = vrot.slane %v1488, 1
        %v1490 = vmax.f32 %v1488, %v1489
        %v1491 = vmax.f32 %v1301, %v1308
        %v1492 = vmax.f32 %v1315, %v1322
        %v1493 = vmax.f32 %v1329, %v1336
        %v1494 = vmax.f32 %v1343, %v1350
        %v1495 = vmax.f32 %v1357, %v1364
        %v1496 = vmax.f32 %v1371, %v1378
        %v1497 = vmax.f32 %v1385, %v1392
        %v1498 = vmax.f32 %v1399, %v1406
        %v1499 = vmax.f32 %v1413, %v1420
        %v1500 = vmax.f32 %v1427, %v1434
        %v1501 = vmax.f32 %v1441, %v1448
        %v1502 = vmax.f32 %v1455, %v1462
        %v1503 = vmax.f32 %v1469, %v1476
        %v1504 = vmax.f32 %v1483, %v1490
        %vm1519 = vcmask 1041409
        %v1520 = vsel %vm1519, %v1492, %v1491
        %vm1521 = vcmask 1042434
        %v1522 = vsel %vm1521, %v1493, %v1520
        %vm1523 = vcmask 1043459
        %v1524 = vsel %vm1523, %v1494, %v1522
        %vm1525 = vcmask 1044484
        %v1526 = vsel %vm1525, %v1495, %v1524
        %vm1527 = vcmask 1045509
        %v1528 = vsel %vm1527, %v1496, %v1526
        %vm1529 = vcmask 1046534
        %v1530 = vsel %vm1529, %v1497, %v1528
        %vm1531 = vcmask 1047559
        %v1532 = vsel %vm1531, %v1498, %v1530
        %v1533 = vsel %vm1519, %v1500, %v1499
        %v1534 = vsel %vm1521, %v1501, %v1533
        %v1535 = vsel %vm1523, %v1502, %v1534
        %v1536 = vsel %vm1525, %v1503, %v1535
        %v1537 = vsel %vm1527, %v1504, %v1536
        %1540 = vst [vmem:[#allocation2] sm:$0xff] %v1532
        %1541 = vst [vmem:[#allocation2 + $0x8] sm:$0x3f] %v1537
        %v1542 = vld [vmem:[#allocation2] sm:$0xff]
        %v1543 = vld [vmem:[#allocation2 + $0x8] sm:$0x3]
        %v1544 = vpack.c.bf16 %v1543, %v1542
        %v1545 = vld [vmem:[#allocation4] sm:$0xff]
        %v1546 = vld [vmem:[#allocation4 + $0x8] sm:$0xff]
        %v1547 = vld [vmem:[#allocation4 + $0x10] sm:$0xff]
        %v1548 = vld [vmem:[#allocation4 + $0x18] sm:$0xff]
        %v1549 = vld [vmem:[#allocation4 + $0x20] sm:$0xff]
        %v1550 = vld [vmem:[#allocation4 + $0x28] sm:$0xff]
        %v1551 = vld [vmem:[#allocation4 + $0x30] sm:$0xff]
        %v1552 = vld [vmem:[#allocation4 + $0x38] sm:$0xff]
        %v1553 = vld [vmem:[#allocation4 + $0x40] sm:$0xff]
        %v1554 = vld [vmem:[#allocation4 + $0x48] sm:$0xff]
        %v1555 = vld [vmem:[#allocation4 + $0x50] sm:$0xff]
        %v1556 = vld [vmem:[#allocation4 + $0x58] sm:$0xff]
        %v1557 = vld [vmem:[#allocation4 + $0x60] sm:$0xff]
        %v1558 = vld [vmem:[#allocation4 + $0x68] sm:$0xff]
        %v1559 = vld [vmem:[#allocation4 + $0x70] sm:$0xff]
        %v1560 = vld [vmem:[#allocation4 + $0x78] sm:$0xff]
        %v1561 = vld [vmem:[#allocation2 + $0x1] sm:$0xff]
        %v1562 = vld [vmem:[#allocation2 + $0x9] sm:$0x3]
        %v1563 = vpack.c.bf16 %v1562, %v1561
        %s1564 = scalar_lea.vmem [#allocation4], 128
        %v1565 = vld [vmem:[%s1564] sm:$0xff]
        %v1566 = vld [vmem:[%s1564 + $0x8] sm:$0xff]
        %v1567 = vld [vmem:[%s1564 + $0x10] sm:$0xff]
        %v1568 = vld [vmem:[%s1564 + $0x18] sm:$0xff]
        %v1569 = vld [vmem:[%s1564 + $0x20] sm:$0xff]
        %v1570 = vld [vmem:[%s1564 + $0x28] sm:$0xff]
        %v1571 = vld [vmem:[%s1564 + $0x30] sm:$0xff]
        %v1572 = vld [vmem:[%s1564 + $0x38] sm:$0xff]
        %v1573 = vld [vmem:[%s1564 + $0x40] sm:$0xff]
        %v1574 = vld [vmem:[%s1564 + $0x48] sm:$0xff]
        %v1575 = vld [vmem:[%s1564 + $0x50] sm:$0xff]
        %v1576 = vld [vmem:[%s1564 + $0x58] sm:$0xff]
        %v1577 = vld [vmem:[%s1564 + $0x60] sm:$0xff]
        %v1578 = vld [vmem:[%s1564 + $0x68] sm:$0xff]
        %v1579 = vld [vmem:[%s1564 + $0x70] sm:$0xff]
        %v1580 = vld [vmem:[%s1564 + $0x78] sm:$0xff]
        %v1597 = vunpack.c.l.b16 %v1565
        %v1598 = vunpack.c.h.b16 %v1565
        %v1599 = vunpack.c.l.b16 %v1566
        %v1600 = vunpack.c.h.b16 %v1566
        %v1601 = vunpack.c.l.b16 %v1567
        %v1602 = vunpack.c.h.b16 %v1567
        %v1603 = vunpack.c.l.b16 %v1568
        %v1604 = vunpack.c.h.b16 %v1568
        %v1605 = vunpack.c.l.b16 %v1569
        %v1606 = vunpack.c.h.b16 %v1569
        %v1607 = vunpack.c.l.b16 %v1570
        %v1608 = vunpack.c.h.b16 %v1570
        %v1609 = vunpack.c.l.b16 %v1571
        %v1610 = vunpack.c.h.b16 %v1571
        %v1611 = vunpack.c.l.b16 %v1572
        %v1612 = vunpack.c.h.b16 %v1572
        %v1613 = vunpack.c.l.b16 %v1573
        %v1614 = vunpack.c.h.b16 %v1573
        %v1615 = vunpack.c.l.b16 %v1574
        %v1616 = vunpack.c.h.b16 %v1574
        %v1617 = vunpack.c.l.b16 %v1575
        %v1618 = vunpack.c.h.b16 %v1575
        %v1619 = vunpack.c.l.b16 %v1576
        %v1620 = vunpack.c.h.b16 %v1576
        %v1621 = vunpack.c.l.b16 %v1577
        %v1622 = vunpack.c.h.b16 %v1577
        %v1623 = vunpack.c.l.b16 %v1578
        %v1624 = vunpack.c.h.b16 %v1578
        %v1625 = vunpack.c.l.b16 %v1579
        %v1626 = vunpack.c.h.b16 %v1579
        %v1627 = vunpack.c.l.b16 %v1580
        %v1628 = vunpack.c.h.b16 %v1580
        %v1629 = vpack.c.b16 %v1599, %v1597
        %v1630 = vpack.c.b16 %v1600, %v1598
        %v1631 = vpack.c.b16 %v1603, %v1601
        %v1632 = vpack.c.b16 %v1604, %v1602
        %v1633 = vpack.c.b16 %v1607, %v1605
        %v1634 = vpack.c.b16 %v1608, %v1606
        %v1635 = vpack.c.b16 %v1611, %v1609
        %v1636 = vpack.c.b16 %v1612, %v1610
        %v1637 = vpack.c.b16 %v1615, %v1613
        %v1638 = vpack.c.b16 %v1616, %v1614
        %v1639 = vpack.c.b16 %v1619, %v1617
        %v1640 = vpack.c.b16 %v1620, %v1618
        %v1641 = vpack.c.b16 %v1623, %v1621
        %v1642 = vpack.c.b16 %v1624, %v1622
        %v1643 = vpack.c.b16 %v1627, %v1625
        %v1644 = vpack.c.b16 %v1628, %v1626
        %1661 = vmatpush.bf16.msra.mxu0 %v1643
        %1662 = vmatpush.bf16.msra.mxu0 %v1641
        %1663 = vmatpush.bf16.msra.mxu0 %v1639
        %1664 = vmatpush.bf16.msra.mxu0 %v1637
        %1665 = vmatpush.bf16.msra.mxu0 %v1635
        %1666 = vmatpush.bf16.msra.mxu0 %v1633
        %1667 = vmatpush.bf16.msra.mxu0 %v1631
        %1668 = vmatpush.bf16.msra.mxu0 %v1629
        %1669 = vmatmul.bf16.gmra.mxu0 %v1563
        %v1670 = vpop.f32.mrf.mxu0
        %v1671 = vadd.f32 0.0, %v1670
        %v1672 = vpop.f32.mrf.mxu0
        %v1673 = vadd.f32 0.0, %v1672
        %1674 = vdwg.mxu0
        %1675 = vmatpush.bf16.msra.mxu0 %v1644
        %1676 = vmatpush.bf16.msra.mxu0 %v1642
        %1677 = vmatpush.bf16.msra.mxu0 %v1640
        %1678 = vmatpush.bf16.msra.mxu0 %v1638
        %1679 = vmatpush.bf16.msra.mxu0 %v1636
        %1680 = vmatpush.bf16.msra.mxu0 %v1634
        %1681 = vmatpush.bf16.msra.mxu0 %v1632
        %1682 = vmatpush.bf16.msra.mxu0 %v1630
        %1683 = vmatmul.bf16.gmra.mxu0 %v1563
        %v1684 = vpop.f32.mrf.mxu0
        %v1685 = vadd.f32 0.0, %v1684
        %v1686 = vpop.f32.mrf.mxu0
        %v1687 = vadd.f32 0.0, %v1686
        %1688 = vdwg.mxu0
        %v1705 = vunpack.c.l.b16 %v1545
        %v1706 = vunpack.c.h.b16 %v1545
        %v1707 = vunpack.c.l.b16 %v1546
        %v1708 = vunpack.c.h.b16 %v1546
        %v1709 = vunpack.c.l.b16 %v1547
        %v1710 = vunpack.c.h.b16 %v1547
        %v1711 = vunpack.c.l.b16 %v1548
        %v1712 = vunpack.c.h.b16 %v1548
        %v1713 = vunpack.c.l.b16 %v1549
        %v1714 = vunpack.c.h.b16 %v1549
        %v1715 = vunpack.c.l.b16 %v1550
        %v1716 = vunpack.c.h.b16 %v1550
        %v1717 = vunpack.c.l.b16 %v1551
        %v1718 = vunpack.c.h.b16 %v1551
        %v1719 = vunpack.c.l.b16 %v1552
        %v1720 = vunpack.c.h.b16 %v1552
        %v1721 = vunpack.c.l.b16 %v1553
        %v1722 = vunpack.c.h.b16 %v1553
        %v1723 = vunpack.c.l.b16 %v1554
        %v1724 = vunpack.c.h.b16 %v1554
        %v1725 = vunpack.c.l.b16 %v1555
        %v1726 = vunpack.c.h.b16 %v1555
        %v1727 = vunpack.c.l.b16 %v1556
        %v1728 = vunpack.c.h.b16 %v1556
        %v1729 = vunpack.c.l.b16 %v1557
        %v1730 = vunpack.c.h.b16 %v1557
        %v1731 = vunpack.c.l.b16 %v1558
        %v1732 = vunpack.c.h.b16 %v1558
        %v1733 = vunpack.c.l.b16 %v1559
        %v1734 = vunpack.c.h.b16 %v1559
        %v1735 = vunpack.c.l.b16 %v1560
        %v1736 = vunpack.c.h.b16 %v1560
        %v1737 = vpack.c.b16 %v1707, %v1705
        %v1738 = vpack.c.b16 %v1708, %v1706
        %v1739 = vpack.c.b16 %v1711, %v1709
        %v1740 = vpack.c.b16 %v1712, %v1710
        %v1741 = vpack.c.b16 %v1715, %v1713
        %v1742 = vpack.c.b16 %v1716, %v1714
        %v1743 = vpack.c.b16 %v1719, %v1717
        %v1744 = vpack.c.b16 %v1720, %v1718
        %v1745 = vpack.c.b16 %v1723, %v1721
        %v1746 = vpack.c.b16 %v1724, %v1722
        %v1747 = vpack.c.b16 %v1727, %v1725
        %v1748 = vpack.c.b16 %v1728, %v1726
        %v1749 = vpack.c.b16 %v1731, %v1729
        %v1750 = vpack.c.b16 %v1732, %v1730
        %v1751 = vpack.c.b16 %v1735, %v1733
        %v1752 = vpack.c.b16 %v1736, %v1734
        %1769 = vmatpush.bf16.msra.mxu0 %v1751
        %1770 = vmatpush.bf16.msra.mxu0 %v1749
        %1771 = vmatpush.bf16.msra.mxu0 %v1747
        %1772 = vmatpush.bf16.msra.mxu0 %v1745
        %1773 = vmatpush.bf16.msra.mxu0 %v1743
        %1774 = vmatpush.bf16.msra.mxu0 %v1741
        %1775 = vmatpush.bf16.msra.mxu0 %v1739
        %1776 = vmatpush.bf16.msra.mxu0 %v1737
        %1777 = vmatmul.bf16.gmra.mxu0 %v1544
        %v1778 = vpop.f32.mrf.mxu0
        %v1779 = vadd.f32 %v1671, %v1778
        %v1780 = vpop.f32.mrf.mxu0
        %v1781 = vadd.f32 %v1673, %v1780
        %1782 = vdwg.mxu0
        %1783 = vmatpush.bf16.msra.mxu0 %v1752
        %1784 = vmatpush.bf16.msra.mxu0 %v1750
        %1785 = vmatpush.bf16.msra.mxu0 %v1748
        %1786 = vmatpush.bf16.msra.mxu0 %v1746
        %1787 = vmatpush.bf16.msra.mxu0 %v1744
        %1788 = vmatpush.bf16.msra.mxu0 %v1742
        %1789 = vmatpush.bf16.msra.mxu0 %v1740
        %1790 = vmatpush.bf16.msra.mxu0 %v1738
        %1791 = vmatmul.bf16.gmra.mxu0 %v1544
        %v1792 = vpop.f32.mrf.mxu0
        %v1793 = vadd.f32 %v1685, %v1792
        %v1794 = vpop.f32.mrf.mxu0
        %v1795 = vadd.f32 %v1687, %v1794
        %1796 = vdwg.mxu0
        %v1797 = vld [vmem:[#allocation2 + $0x2] sm:$0xff]
        %v1798 = vld [vmem:[#allocation2 + $0xa] sm:$0x3]
        %v1799 = vpack.c.bf16 %v1798, %v1797
        %s1800 = scalar_lea.vmem [#allocation4], 256
        %v1801 = vld [vmem:[%s1800] sm:$0xff]
        %v1802 = vld [vmem:[%s1800 + $0x8] sm:$0xff]
        %v1803 = vld [vmem:[%s1800 + $0x10] sm:$0xff]
        %v1804 = vld [vmem:[%s1800 + $0x18] sm:$0xff]
        %v1805 = vld [vmem:[%s1800 + $0x20] sm:$0xff]
        %v1806 = vld [vmem:[%s1800 + $0x28] sm:$0xff]
        %v1807 = vld [vmem:[%s1800 + $0x30] sm:$0xff]
        %v1808 = vld [vmem:[%s1800 + $0x38] sm:$0xff]
        %v1809 = vld [vmem:[%s1800 + $0x40] sm:$0xff]
        %v1810 = vld [vmem:[%s1800 + $0x48] sm:$0xff]
        %v1811 = vld [vmem:[%s1800 + $0x50] sm:$0xff]
        %v1812 = vld [vmem:[%s1800 + $0x58] sm:$0xff]
        %v1813 = vld [vmem:[%s1800 + $0x60] sm:$0xff]
        %v1814 = vld [vmem:[%s1800 + $0x68] sm:$0xff]
        %v1815 = vld [vmem:[%s1800 + $0x70] sm:$0xff]
        %v1816 = vld [vmem:[%s1800 + $0x78] sm:$0xff]
        %v1833 = vunpack.c.l.b16 %v1801
        %v1834 = vunpack.c.h.b16 %v1801
        %v1835 = vunpack.c.l.b16 %v1802
        %v1836 = vunpack.c.h.b16 %v1802
        %v1837 = vunpack.c.l.b16 %v1803
        %v1838 = vunpack.c.h.b16 %v1803
        %v1839 = vunpack.c.l.b16 %v1804
        %v1840 = vunpack.c.h.b16 %v1804
        %v1841 = vunpack.c.l.b16 %v1805
        %v1842 = vunpack.c.h.b16 %v1805
        %v1843 = vunpack.c.l.b16 %v1806
        %v1844 = vunpack.c.h.b16 %v1806
        %v1845 = vunpack.c.l.b16 %v1807
        %v1846 = vunpack.c.h.b16 %v1807
        %v1847 = vunpack.c.l.b16 %v1808
        %v1848 = vunpack.c.h.b16 %v1808
        %v1849 = vunpack.c.l.b16 %v1809
        %v1850 = vunpack.c.h.b16 %v1809
        %v1851 = vunpack.c.l.b16 %v1810
        %v1852 = vunpack.c.h.b16 %v1810
        %v1853 = vunpack.c.l.b16 %v1811
        %v1854 = vunpack.c.h.b16 %v1811
        %v1855 = vunpack.c.l.b16 %v1812
        %v1856 = vunpack.c.h.b16 %v1812
        %v1857 = vunpack.c.l.b16 %v1813
        %v1858 = vunpack.c.h.b16 %v1813
        %v1859 = vunpack.c.l.b16 %v1814
        %v1860 = vunpack.c.h.b16 %v1814
        %v1861 = vunpack.c.l.b16 %v1815
        %v1862 = vunpack.c.h.b16 %v1815
        %v1863 = vunpack.c.l.b16 %v1816
        %v1864 = vunpack.c.h.b16 %v1816
        %v1865 = vpack.c.b16 %v1835, %v1833
        %v1866 = vpack.c.b16 %v1836, %v1834
        %v1867 = vpack.c.b16 %v1839, %v1837
        %v1868 = vpack.c.b16 %v1840, %v1838
        %v1869 = vpack.c.b16 %v1843, %v1841
        %v1870 = vpack.c.b16 %v1844, %v1842
        %v1871 = vpack.c.b16 %v1847, %v1845
        %v1872 = vpack.c.b16 %v1848, %v1846
        %v1873 = vpack.c.b16 %v1851, %v1849
        %v1874 = vpack.c.b16 %v1852, %v1850
        %v1875 = vpack.c.b16 %v1855, %v1853
        %v1876 = vpack.c.b16 %v1856, %v1854
        %v1877 = vpack.c.b16 %v1859, %v1857
        %v1878 = vpack.c.b16 %v1860, %v1858
        %v1879 = vpack.c.b16 %v1863, %v1861
        %v1880 = vpack.c.b16 %v1864, %v1862
        %1897 = vmatpush.bf16.msra.mxu0 %v1879
        %1898 = vmatpush.bf16.msra.mxu0 %v1877
        %1899 = vmatpush.bf16.msra.mxu0 %v1875
        %1900 = vmatpush.bf16.msra.mxu0 %v1873
        %1901 = vmatpush.bf16.msra.mxu0 %v1871
        %1902 = vmatpush.bf16.msra.mxu0 %v1869
        %1903 = vmatpush.bf16.msra.mxu0 %v1867
        %1904 = vmatpush.bf16.msra.mxu0 %v1865
        %1905 = vmatmul.bf16.gmra.mxu0 %v1799
        %v1906 = vpop.f32.mrf.mxu0
        %v1907 = vadd.f32 0.0, %v1906
        %v1908 = vpop.f32.mrf.mxu0
        %v1909 = vadd.f32 0.0, %v1908
        %1910 = vdwg.mxu0
        %1911 = vmatpush.bf16.msra.mxu0 %v1880
        %1912 = vmatpush.bf16.msra.mxu0 %v1878
        %1913 = vmatpush.bf16.msra.mxu0 %v1876
        %1914 = vmatpush.bf16.msra.mxu0 %v1874
        %1915 = vmatpush.bf16.msra.mxu0 %v1872
        %1916 = vmatpush.bf16.msra.mxu0 %v1870
        %1917 = vmatpush.bf16.msra.mxu0 %v1868
        %1918 = vmatpush.bf16.msra.mxu0 %v1866
        %1919 = vmatmul.bf16.gmra.mxu0 %v1799
        %v1920 = vpop.f32.mrf.mxu0
        %v1921 = vadd.f32 0.0, %v1920
        %v1922 = vpop.f32.mrf.mxu0
        %v1923 = vadd.f32 0.0, %v1922
        %1924 = vdwg.mxu0
        %v1925 = vadd.f32 %v1779, %v1907
        %v1926 = vadd.f32 %v1793, %v1921
        %v1927 = vadd.f32 %v1781, %v1909
        %v1928 = vadd.f32 %v1795, %v1923
        %v1929 = vld [vmem:[#allocation2 + $0x3] sm:$0xff]
        %v1930 = vld [vmem:[#allocation2 + $0xb] sm:$0x3]
        %v1931 = vpack.c.bf16 %v1930, %v1929
        %s1932 = scalar_lea.vmem [#allocation4], 384
        %v1933 = vld [vmem:[%s1932] sm:$0xff]
        %v1934 = vld [vmem:[%s1932 + $0x8] sm:$0xff]
        %v1935 = vld [vmem:[%s1932 + $0x10] sm:$0xff]
        %v1936 = vld [vmem:[%s1932 + $0x18] sm:$0xff]
        %v1937 = vld [vmem:[%s1932 + $0x20] sm:$0xff]
        %v1938 = vld [vmem:[%s1932 + $0x28] sm:$0xff]
        %v1939 = vld [vmem:[%s1932 + $0x30] sm:$0xff]
        %v1940 = vld [vmem:[%s1932 + $0x38] sm:$0xff]
        %v1941 = vld [vmem:[%s1932 + $0x40] sm:$0xff]
        %v1942 = vld [vmem:[%s1932 + $0x48] sm:$0xff]
        %v1943 = vld [vmem:[%s1932 + $0x50] sm:$0xff]
        %v1944 = vld [vmem:[%s1932 + $0x58] sm:$0xff]
        %v1945 = vld [vmem:[%s1932 + $0x60] sm:$0xff]
        %v1946 = vld [vmem:[%s1932 + $0x68] sm:$0xff]
        %v1947 = vld [vmem:[%s1932 + $0x70] sm:$0xff]
        %v1948 = vld [vmem:[%s1932 + $0x78] sm:$0xff]
        %v1965 = vunpack.c.l.b16 %v1933
        %v1966 = vunpack.c.h.b16 %v1933
        %v1967 = vunpack.c.l.b16 %v1934
        %v1968 = vunpack.c.h.b16 %v1934
        %v1969 = vunpack.c.l.b16 %v1935
        %v1970 = vunpack.c.h.b16 %v1935
        %v1971 = vunpack.c.l.b16 %v1936
        %v1972 = vunpack.c.h.b16 %v1936
        %v1973 = vunpack.c.l.b16 %v1937
        %v1974 = vunpack.c.h.b16 %v1937
        %v1975 = vunpack.c.l.b16 %v1938
        %v1976 = vunpack.c.h.b16 %v1938
        %v1977 = vunpack.c.l.b16 %v1939
        %v1978 = vunpack.c.h.b16 %v1939
        %v1979 = vunpack.c.l.b16 %v1940
        %v1980 = vunpack.c.h.b16 %v1940
        %v1981 = vunpack.c.l.b16 %v1941
        %v1982 = vunpack.c.h.b16 %v1941
        %v1983 = vunpack.c.l.b16 %v1942
        %v1984 = vunpack.c.h.b16 %v1942
        %v1985 = vunpack.c.l.b16 %v1943
        %v1986 = vunpack.c.h.b16 %v1943
        %v1987 = vunpack.c.l.b16 %v1944
        %v1988 = vunpack.c.h.b16 %v1944
        %v1989 = vunpack.c.l.b16 %v1945
        %v1990 = vunpack.c.h.b16 %v1945
        %v1991 = vunpack.c.l.b16 %v1946
        %v1992 = vunpack.c.h.b16 %v1946
        %v1993 = vunpack.c.l.b16 %v1947
        %v1994 = vunpack.c.h.b16 %v1947
        %v1995 = vunpack.c.l.b16 %v1948
        %v1996 = vunpack.c.h.b16 %v1948
        %v1997 = vpack.c.b16 %v1967, %v1965
        %v1998 = vpack.c.b16 %v1968, %v1966
        %v1999 = vpack.c.b16 %v1971, %v1969
        %v2000 = vpack.c.b16 %v1972, %v1970
        %v2001 = vpack.c.b16 %v1975, %v1973
        %v2002 = vpack.c.b16 %v1976, %v1974
        %v2003 = vpack.c.b16 %v1979, %v1977
        %v2004 = vpack.c.b16 %v1980, %v1978
        %v2005 = vpack.c.b16 %v1983, %v1981
        %v2006 = vpack.c.b16 %v1984, %v1982
        %v2007 = vpack.c.b16 %v1987, %v1985
        %v2008 = vpack.c.b16 %v1988, %v1986
        %v2009 = vpack.c.b16 %v1991, %v1989
        %v2010 = vpack.c.b16 %v1992, %v1990
        %v2011 = vpack.c.b16 %v1995, %v1993
        %v2012 = vpack.c.b16 %v1996, %v1994
        %2029 = vmatpush.bf16.msra.mxu0 %v2011
        %2030 = vmatpush.bf16.msra.mxu0 %v2009
        %2031 = vmatpush.bf16.msra.mxu0 %v2007
        %2032 = vmatpush.bf16.msra.mxu0 %v2005
        %2033 = vmatpush.bf16.msra.mxu0 %v2003
        %2034 = vmatpush.bf16.msra.mxu0 %v2001
        %2035 = vmatpush.bf16.msra.mxu0 %v1999
        %2036 = vmatpush.bf16.msra.mxu0 %v1997
        %2037 = vmatmul.bf16.gmra.mxu0 %v1931
        %v2038 = vpop.f32.mrf.mxu0
        %v2039 = vadd.f32 0.0, %v2038
        %v2040 = vpop.f32.mrf.mxu0
        %v2041 = vadd.f32 0.0, %v2040
        %2042 = vdwg.mxu0
        %2043 = vmatpush.bf16.msra.mxu0 %v2012
        %2044 = vmatpush.bf16.msra.mxu0 %v2010
        %2045 = vmatpush.bf16.msra.mxu0 %v2008
        %2046 = vmatpush.bf16.msra.mxu0 %v2006
        %2047 = vmatpush.bf16.msra.mxu0 %v2004
        %2048 = vmatpush.bf16.msra.mxu0 %v2002
        %2049 = vmatpush.bf16.msra.mxu0 %v2000
        %2050 = vmatpush.bf16.msra.mxu0 %v1998
        %2051 = vmatmul.bf16.gmra.mxu0 %v1931
        %v2052 = vpop.f32.mrf.mxu0
        %v2053 = vadd.f32 0.0, %v2052
        %v2054 = vpop.f32.mrf.mxu0
        %v2055 = vadd.f32 0.0, %v2054
        %2056 = vdwg.mxu0
        %v2057 = vadd.f32 %v1925, %v2039
        %v2058 = vadd.f32 %v1926, %v2053
        %v2059 = vadd.f32 %v1927, %v2041
        %v2060 = vadd.f32 %v1928, %v2055
        %v2061 = vld [vmem:[#allocation2 + $0x4] sm:$0xff]
        %v2062 = vld [vmem:[#allocation2 + $0xc] sm:$0x3]
        %v2063 = vpack.c.bf16 %v2062, %v2061
        %s2064 = scalar_lea.vmem [#allocation4], 512
        %v2065 = vld [vmem:[%s2064] sm:$0xff]
        %v2066 = vld [vmem:[%s2064 + $0x8] sm:$0xff]
        %v2067 = vld [vmem:[%s2064 + $0x10] sm:$0xff]
        %v2068 = vld [vmem:[%s2064 + $0x18] sm:$0xff]
        %v2069 = vld [vmem:[%s2064 + $0x20] sm:$0xff]
        %v2070 = vld [vmem:[%s2064 + $0x28] sm:$0xff]
        %v2071 = vld [vmem:[%s2064 + $0x30] sm:$0xff]
        %v2072 = vld [vmem:[%s2064 + $0x38] sm:$0xff]
        %v2073 = vld [vmem:[%s2064 + $0x40] sm:$0xff]
        %v2074 = vld [vmem:[%s2064 + $0x48] sm:$0xff]
        %v2075 = vld [vmem:[%s2064 + $0x50] sm:$0xff]
        %v2076 = vld [vmem:[%s2064 + $0x58] sm:$0xff]
        %v2077 = vld [vmem:[%s2064 + $0x60] sm:$0xff]
        %v2078 = vld [vmem:[%s2064 + $0x68] sm:$0xff]
        %v2079 = vld [vmem:[%s2064 + $0x70] sm:$0xff]
        %v2080 = vld [vmem:[%s2064 + $0x78] sm:$0xff]
        %v2097 = vunpack.c.l.b16 %v2065
        %v2098 = vunpack.c.h.b16 %v2065
        %v2099 = vunpack.c.l.b16 %v2066
        %v2100 = vunpack.c.h.b16 %v2066
        %v2101 = vunpack.c.l.b16 %v2067
        %v2102 = vunpack.c.h.b16 %v2067
        %v2103 = vunpack.c.l.b16 %v2068
        %v2104 = vunpack.c.h.b16 %v2068
        %v2105 = vunpack.c.l.b16 %v2069
        %v2106 = vunpack.c.h.b16 %v2069
        %v2107 = vunpack.c.l.b16 %v2070
        %v2108 = vunpack.c.h.b16 %v2070
        %v2109 = vunpack.c.l.b16 %v2071
        %v2110 = vunpack.c.h.b16 %v2071
        %v2111 = vunpack.c.l.b16 %v2072
        %v2112 = vunpack.c.h.b16 %v2072
        %v2113 = vunpack.c.l.b16 %v2073
        %v2114 = vunpack.c.h.b16 %v2073
        %v2115 = vunpack.c.l.b16 %v2074
        %v2116 = vunpack.c.h.b16 %v2074
        %v2117 = vunpack.c.l.b16 %v2075
        %v2118 = vunpack.c.h.b16 %v2075
        %v2119 = vunpack.c.l.b16 %v2076
        %v2120 = vunpack.c.h.b16 %v2076
        %v2121 = vunpack.c.l.b16 %v2077
        %v2122 = vunpack.c.h.b16 %v2077
        %v2123 = vunpack.c.l.b16 %v2078
        %v2124 = vunpack.c.h.b16 %v2078
        %v2125 = vunpack.c.l.b16 %v2079
        %v2126 = vunpack.c.h.b16 %v2079
        %v2127 = vunpack.c.l.b16 %v2080
        %v2128 = vunpack.c.h.b16 %v2080
        %v2129 = vpack.c.b16 %v2099, %v2097
        %v2130 = vpack.c.b16 %v2100, %v2098
        %v2131 = vpack.c.b16 %v2103, %v2101
        %v2132 = vpack.c.b16 %v2104, %v2102
        %v2133 = vpack.c.b16 %v2107, %v2105
        %v2134 = vpack.c.b16 %v2108, %v2106
        %v2135 = vpack.c.b16 %v2111, %v2109
        %v2136 = vpack.c.b16 %v2112, %v2110
        %v2137 = vpack.c.b16 %v2115, %v2113
        %v2138 = vpack.c.b16 %v2116, %v2114
        %v2139 = vpack.c.b16 %v2119, %v2117
        %v2140 = vpack.c.b16 %v2120, %v2118
        %v2141 = vpack.c.b16 %v2123, %v2121
        %v2142 = vpack.c.b16 %v2124, %v2122
        %v2143 = vpack.c.b16 %v2127, %v2125
        %v2144 = vpack.c.b16 %v2128, %v2126
        %2161 = vmatpush.bf16.msra.mxu0 %v2143
        %2162 = vmatpush.bf16.msra.mxu0 %v2141
        %2163 = vmatpush.bf16.msra.mxu0 %v2139
        %2164 = vmatpush.bf16.msra.mxu0 %v2137
        %2165 = vmatpush.bf16.msra.mxu0 %v2135
        %2166 = vmatpush.bf16.msra.mxu0 %v2133
        %2167 = vmatpush.bf16.msra.mxu0 %v2131
        %2168 = vmatpush.bf16.msra.mxu0 %v2129
        %2169 = vmatmul.bf16.gmra.mxu0 %v2063
        %v2170 = vpop.f32.mrf.mxu0
        %v2171 = vadd.f32 0.0, %v2170
        %v2172 = vpop.f32.mrf.mxu0
        %v2173 = vadd.f32 0.0, %v2172
        %2174 = vdwg.mxu0
        %2175 = vmatpush.bf16.msra.mxu0 %v2144
        %2176 = vmatpush.bf16.msra.mxu0 %v2142
        %2177 = vmatpush.bf16.msra.mxu0 %v2140
        %2178 = vmatpush.bf16.msra.mxu0 %v2138
        %2179 = vmatpush.bf16.msra.mxu0 %v2136
        %2180 = vmatpush.bf16.msra.mxu0 %v2134
        %2181 = vmatpush.bf16.msra.mxu0 %v2132
        %2182 = vmatpush.bf16.msra.mxu0 %v2130
        %2183 = vmatmul.bf16.gmra.mxu0 %v2063
        %v2184 = vpop.f32.mrf.mxu0
        %v2185 = vadd.f32 0.0, %v2184
        %v2186 = vpop.f32.mrf.mxu0
        %v2187 = vadd.f32 0.0, %v2186
        %2188 = vdwg.mxu0
        %v2189 = vadd.f32 %v2057, %v2171
        %v2190 = vadd.f32 %v2058, %v2185
        %v2191 = vadd.f32 %v2059, %v2173
        %v2192 = vadd.f32 %v2060, %v2187
        %v2193 = vld [vmem:[%s4] sm:$0x3]
        %v2195 = vperm.slane %v2193, 0
        %v2196 = vperm.slane %v2193, 1
        %v2199 = vadd.f32 %v2189, %v2195
        %v2200 = vadd.f32 %v2190, %v2196
        %v2201 = vadd.f32 %v2191, %v2195
        %v2202 = vadd.f32 %v2192, %v2196
        %vm2203 = vcmp.gt.f32.partialorder %v2199, 0.0
        %vm2204 = vcmp.gt.f32.partialorder %v2200, 0.0
        %vm2205 = vcmp.gt.f32.partialorder %v2201, 0.0
        %vm2206 = vcmp.gt.f32.partialorder %v2202, 0.0
        %v2207 = vmul.f32 %v2199, 0.01
        %v2208 = vmul.f32 %v2200, 0.01
        %v2209 = vmul.f32 %v2201, 0.01
        %v2210 = vmul.f32 %v2202, 0.01
        %v2211 = vsel %vm2203, %v2199, %v2207
        %v2212 = vsel %vm2204, %v2200, %v2208
        %v2213 = vsel %vm2205, %v2201, %v2209
        %v2214 = vsel %vm2206, %v2202, %v2210
        %v2219 = vrot.slane %v2212, 6
        %v2220 = vrot.slane %v2214, 6
        %v2221 = vsel %vm1196, %v2211, %v2219
        %v2222 = vsel %vm1198, %v2211, %v2219
        %v2223 = vrot.slane %v2222, 2
        %v2224 = vsel %vm1201, %v2211, %v2219
        %v2225 = vrot.slane %v2224, 4
        %v2226 = vsel %vm1204, %v2219, %v2211
        %v2227 = vrot.slane %v2226, 6
        %v2228 = vsel %vm1196, %v2213, %v2220
        %2229 = vst [vmem:[#allocation1] ss:$4 sm:$0xff] %v2221
        %v2230 = vld.sshfl [vmem:[#allocation1] sm:$0xff pattern:$0x73625140]
        %v2231 = vld.sshfl [vmem:[#allocation1 + $0x8] sm:$0xff pattern:$0x73625140]
        %s2232 = scalar_lea.vmem [#allocation1], 32
        %2233 = vst [vmem:[%s2232] ss:$4 sm:$0xff] %v2223
        %v2234 = vld.sshfl [vmem:[#allocation1 + $0x20] sm:$0xff pattern:$0x73625140]
        %v2235 = vld.sshfl [vmem:[#allocation1 + $0x28] sm:$0xff pattern:$0x73625140]
        %2236 = vst [vmem:[#allocation1] ss:$4 sm:$0xff] %v2225
        %v2237 = vld.sshfl [vmem:[#allocation1] sm:$0xff pattern:$0x73625140]
        %v2238 = vld.sshfl [vmem:[#allocation1 + $0x8] sm:$0xff pattern:$0x73625140]
        %2239 = vst [vmem:[%s2232] ss:$4 sm:$0xff] %v2227
        %v2240 = vld.sshfl [vmem:[#allocation1 + $0x20] sm:$0xff pattern:$0x73625140]
        %v2241 = vld.sshfl [vmem:[#allocation1 + $0x28] sm:$0xff pattern:$0x73625140]
        %2242 = vst [vmem:[#allocation1] ss:$4 sm:$0xff] %v2228
        %v2243 = vld.sshfl [vmem:[#allocation1] sm:$0xff pattern:$0x73625140]
        %v2244 = vld.sshfl [vmem:[#allocation1 + $0x8] sm:$0xff pattern:$0x73625140]
        %v2255 = vsel %vm1196, %v2230, -inf
        %v2256 = vrot.slane %v2255, 4
        %v2257 = vmax.f32 %v2255, %v2256
        %v2258 = vrot.slane %v2257, 2
        %v2259 = vmax.f32 %v2257, %v2258
        %v2260 = vrot.slane %v2259, 1
        %v2261 = vmax.f32 %v2259, %v2260
        %v2262 = vsel %vm1196, %v2231, -inf
        %v2263 = vrot.slane %v2262, 4
        %v2264 = vmax.f32 %v2262, %v2263
        %v2265 = vrot.slane %v2264, 2
        %v2266 = vmax.f32 %v2264, %v2265
        %v2267 = vrot.slane %v2266, 1
        %v2268 = vmax.f32 %v2266, %v2267
        %v2269 = vsel %vm1196, %v2234, -inf
        %v2270 = vrot.slane %v2269, 4
        %v2271 = vmax.f32 %v2269, %v2270
        %v2272 = vrot.slane %v2271, 2
        %v2273 = vmax.f32 %v2271, %v2272
        %v2274 = vrot.slane %v2273, 1
        %v2275 = vmax.f32 %v2273, %v2274
        %v2276 = vsel %vm1196, %v2235, -inf
        %v2277 = vrot.slane %v2276, 4
        %v2278 = vmax.f32 %v2276, %v2277
        %v2279 = vrot.slane %v2278, 2
        %v2280 = vmax.f32 %v2278, %v2279
        %v2281 = vrot.slane %v2280, 1
        %v2282 = vmax.f32 %v2280, %v2281
        %v2283 = vsel %vm1196, %v2237, -inf
        %v2284 = vrot.slane %v2283, 4
        %v2285 = vmax.f32 %v2283, %v2284
        %v2286 = vrot.slane %v2285, 2
        %v2287 = vmax.f32 %v2285, %v2286
        %v2288 = vrot.slane %v2287, 1
        %v2289 = vmax.f32 %v2287, %v2288
        %v2290 = vsel %vm1196, %v2238, -inf
        %v2291 = vrot.slane %v2290, 4
        %v2292 = vmax.f32 %v2290, %v2291
        %v2293 = vrot.slane %v2292, 2
        %v2294 = vmax.f32 %v2292, %v2293
        %v2295 = vrot.slane %v2294, 1
        %v2296 = vmax.f32 %v2294, %v2295
        %v2297 = vsel %vm1196, %v2240, -inf
        %v2298 = vrot.slane %v2297, 4
        %v2299 = vmax.f32 %v2297, %v2298
        %v2300 = vrot.slane %v2299, 2
        %v2301 = vmax.f32 %v2299, %v2300
        %v2302 = vrot.slane %v2301, 1
        %v2303 = vmax.f32 %v2301, %v2302
        %v2304 = vsel %vm1196, %v2241, -inf
        %v2305 = vrot.slane %v2304, 4
        %v2306 = vmax.f32 %v2304, %v2305
        %v2307 = vrot.slane %v2306, 2
        %v2308 = vmax.f32 %v2306, %v2307
        %v2309 = vrot.slane %v2308, 1
        %v2310 = vmax.f32 %v2308, %v2309
        %v2311 = vsel %vm1196, %v2243, -inf
        %v2312 = vrot.slane %v2311, 4
        %v2313 = vmax.f32 %v2311, %v2312
        %v2314 = vrot.slane %v2313, 2
        %v2315 = vmax.f32 %v2313, %v2314
        %v2316 = vrot.slane %v2315, 1
        %v2317 = vmax.f32 %v2315, %v2316
        %v2318 = vsel %vm1196, %v2244, -inf
        %v2319 = vrot.slane %v2318, 4
        %v2320 = vmax.f32 %v2318, %v2319
        %v2321 = vrot.slane %v2320, 2
        %v2322 = vmax.f32 %v2320, %v2321
        %v2323 = vrot.slane %v2322, 1
        %v2324 = vmax.f32 %v2322, %v2323
        %v2325 = vmax.f32 %v2261, %v2268
        %v2326 = vmax.f32 %v2275, %v2282
        %v2327 = vmax.f32 %v2289, %v2296
        %v2328 = vmax.f32 %v2303, %v2310
        %v2329 = vmax.f32 %v2317, %v2324
        %v2335 = vsel %vm1519, %v2326, %v2325
        %v2336 = vsel %vm1521, %v2327, %v2335
        %v2337 = vsel %vm1523, %v2328, %v2336
        %v2338 = vsel %vm1525, %v2329, %v2337
        %2340 = vst [vmem:[#allocation3] sm:$0x1f] %v2338
        %v2341 = vld [vmem:[#allocation3] sm:$0x1]
        %v2342 = vpack.c.bf16 %v2341, %v2341
        %v2343 = vld [vmem:[#allocation7] sm:$0xf]
        %v2344 = vld [vmem:[#allocation7 + $0x4] sm:$0xf]
        %v2345 = vld [vmem:[#allocation7 + $0x8] sm:$0xf]
        %v2346 = vld [vmem:[#allocation7 + $0xc] sm:$0xf]
        %v2347 = vld [vmem:[#allocation7 + $0x10] sm:$0xf]
        %v2348 = vld [vmem:[#allocation7 + $0x14] sm:$0xf]
        %v2349 = vld [vmem:[#allocation7 + $0x18] sm:$0xf]
        %v2350 = vld [vmem:[#allocation7 + $0x1c] sm:$0xf]
        %v2351 = vld [vmem:[#allocation7 + $0x20] sm:$0xf]
        %v2352 = vld [vmem:[#allocation7 + $0x24] sm:$0xf]
        %v2353 = vld [vmem:[#allocation7 + $0x28] sm:$0xf]
        %v2354 = vld [vmem:[#allocation7 + $0x2c] sm:$0xf]
        %v2355 = vld [vmem:[#allocation7 + $0x30] sm:$0xf]
        %v2356 = vld [vmem:[#allocation7 + $0x34] sm:$0xf]
        %v2357 = vld [vmem:[#allocation7 + $0x38] sm:$0xf]
        %v2358 = vld [vmem:[#allocation7 + $0x3c] sm:$0xf]
        %v2359 = vld [vmem:[#allocation3 + $0x1] sm:$0x1]
        %v2360 = vpack.c.bf16 %v2359, %v2359
        %s2361 = scalar_lea.vmem [#allocation7], 64
        %v2362 = vld [vmem:[%s2361] sm:$0xf]
        %v2363 = vld [vmem:[%s2361 + $0x4] sm:$0xf]
        %v2364 = vld [vmem:[%s2361 + $0x8] sm:$0xf]
        %v2365 = vld [vmem:[%s2361 + $0xc] sm:$0xf]
        %v2366 = vld [vmem:[%s2361 + $0x10] sm:$0xf]
        %v2367 = vld [vmem:[%s2361 + $0x14] sm:$0xf]
        %v2368 = vld [vmem:[%s2361 + $0x18] sm:$0xf]
        %v2369 = vld [vmem:[%s2361 + $0x1c] sm:$0xf]
        %v2370 = vld [vmem:[%s2361 + $0x20] sm:$0xf]
        %v2371 = vld [vmem:[%s2361 + $0x24] sm:$0xf]
        %v2372 = vld [vmem:[%s2361 + $0x28] sm:$0xf]
        %v2373 = vld [vmem:[%s2361 + $0x2c] sm:$0xf]
        %v2374 = vld [vmem:[%s2361 + $0x30] sm:$0xf]
        %v2375 = vld [vmem:[%s2361 + $0x34] sm:$0xf]
        %v2376 = vld [vmem:[%s2361 + $0x38] sm:$0xf]
        %v2377 = vld [vmem:[%s2361 + $0x3c] sm:$0xf]
        %v2394 = vunpack.c.l.b16 %v2362
        %v2395 = vunpack.c.l.b16 %v2363
        %v2396 = vunpack.c.l.b16 %v2364
        %v2397 = vunpack.c.l.b16 %v2365
        %v2398 = vunpack.c.l.b16 %v2366
        %v2399 = vunpack.c.l.b16 %v2367
        %v2400 = vunpack.c.l.b16 %v2368
        %v2401 = vunpack.c.l.b16 %v2369
        %v2402 = vunpack.c.l.b16 %v2370
        %v2403 = vunpack.c.l.b16 %v2371
        %v2404 = vunpack.c.l.b16 %v2372
        %v2405 = vunpack.c.l.b16 %v2373
        %v2406 = vunpack.c.l.b16 %v2374
        %v2407 = vunpack.c.l.b16 %v2375
        %v2408 = vunpack.c.l.b16 %v2376
        %v2409 = vunpack.c.l.b16 %v2377
        %v2410 = vpack.c.b16 %v2395, %v2394
        %v2411 = vpack.c.b16 %v2397, %v2396
        %v2412 = vpack.c.b16 %v2399, %v2398
        %v2413 = vpack.c.b16 %v2401, %v2400
        %v2414 = vpack.c.b16 %v2403, %v2402
        %v2415 = vpack.c.b16 %v2405, %v2404
        %v2416 = vpack.c.b16 %v2407, %v2406
        %v2417 = vpack.c.b16 %v2409, %v2408
        %2426 = vmatpush.bf16.msra.mxu0 %v2417
        %2427 = vmatpush.bf16.msra.mxu0 %v2416
        %2428 = vmatpush.bf16.msra.mxu0 %v2415
        %2429 = vmatpush.bf16.msra.mxu0 %v2414
        %2430 = vmatpush.bf16.msra.mxu0 %v2413
        %2431 = vmatpush.bf16.msra.mxu0 %v2412
        %2432 = vmatpush.bf16.msra.mxu0 %v2411
        %2433 = vmatpush.bf16.msra.mxu0 %v2410
        %2434 = vmatmul.bf16.gmra.mxu0 %v2360
        %v2435 = vpop.f32.mrf.mxu0
        %v2436 = vadd.f32 0.0, %v2435
        %v2437 = vpop.f32.mrf.mxu0
        %2438 = vdwg.mxu0
        %v2455 = vunpack.c.l.b16 %v2343
        %v2456 = vunpack.c.l.b16 %v2344
        %v2457 = vunpack.c.l.b16 %v2345
        %v2458 = vunpack.c.l.b16 %v2346
        %v2459 = vunpack.c.l.b16 %v2347
        %v2460 = vunpack.c.l.b16 %v2348
        %v2461 = vunpack.c.l.b16 %v2349
        %v2462 = vunpack.c.l.b16 %v2350
        %v2463 = vunpack.c.l.b16 %v2351
        %v2464 = vunpack.c.l.b16 %v2352
        %v2465 = vunpack.c.l.b16 %v2353
        %v2466 = vunpack.c.l.b16 %v2354
        %v2467 = vunpack.c.l.b16 %v2355
        %v2468 = vunpack.c.l.b16 %v2356
        %v2469 = vunpack.c.l.b16 %v2357
        %v2470 = vunpack.c.l.b16 %v2358
        %v2471 = vpack.c.b16 %v2456, %v2455
        %v2472 = vpack.c.b16 %v2458, %v2457
        %v2473 = vpack.c.b16 %v2460, %v2459
        %v2474 = vpack.c.b16 %v2462, %v2461
        %v2475 = vpack.c.b16 %v2464, %v2463
        %v2476 = vpack.c.b16 %v2466, %v2465
        %v2477 = vpack.c.b16 %v2468, %v2467
        %v2478 = vpack.c.b16 %v2470, %v2469
        %2487 = vmatpush.bf16.msra.mxu0 %v2478
        %2488 = vmatpush.bf16.msra.mxu0 %v2477
        %2489 = vmatpush.bf16.msra.mxu0 %v2476
        %2490 = vmatpush.bf16.msra.mxu0 %v2475
        %2491 = vmatpush.bf16.msra.mxu0 %v2474
        %2492 = vmatpush.bf16.msra.mxu0 %v2473
        %2493 = vmatpush.bf16.msra.mxu0 %v2472
        %2494 = vmatpush.bf16.msra.mxu0 %v2471
        %2495 = vmatmul.bf16.gmra.mxu0 %v2342
        %v2496 = vpop.f32.mrf.mxu0
        %v2497 = vadd.f32 %v2436, %v2496
        %v2498 = vpop.f32.mrf.mxu0
        %2499 = vdwg.mxu0
        %v2500 = vld [vmem:[#allocation3 + $0x2] sm:$0x1]
        %v2501 = vpack.c.bf16 %v2500, %v2500
        %s2502 = scalar_lea.vmem [#allocation7], 128
        %v2503 = vld [vmem:[%s2502] sm:$0xf]
        %v2504 = vld [vmem:[%s2502 + $0x4] sm:$0xf]
        %v2505 = vld [vmem:[%s2502 + $0x8] sm:$0xf]
        %v2506 = vld [vmem:[%s2502 + $0xc] sm:$0xf]
        %v2507 = vld [vmem:[%s2502 + $0x10] sm:$0xf]
        %v2508 = vld [vmem:[%s2502 + $0x14] sm:$0xf]
        %v2509 = vld [vmem:[%s2502 + $0x18] sm:$0xf]
        %v2510 = vld [vmem:[%s2502 + $0x1c] sm:$0xf]
        %v2511 = vld [vmem:[%s2502 + $0x20] sm:$0xf]
        %v2512 = vld [vmem:[%s2502 + $0x24] sm:$0xf]
        %v2513 = vld [vmem:[%s2502 + $0x28] sm:$0xf]
        %v2514 = vld [vmem:[%s2502 + $0x2c] sm:$0xf]
        %v2515 = vld [vmem:[%s2502 + $0x30] sm:$0xf]
        %v2516 = vld [vmem:[%s2502 + $0x34] sm:$0xf]
        %v2517 = vld [vmem:[%s2502 + $0x38] sm:$0xf]
        %v2518 = vld [vmem:[%s2502 + $0x3c] sm:$0xf]
        %v2535 = vunpack.c.l.b16 %v2503
        %v2536 = vunpack.c.l.b16 %v2504
        %v2537 = vunpack.c.l.b16 %v2505
        %v2538 = vunpack.c.l.b16 %v2506
        %v2539 = vunpack.c.l.b16 %v2507
        %v2540 = vunpack.c.l.b16 %v2508
        %v2541 = vunpack.c.l.b16 %v2509
        %v2542 = vunpack.c.l.b16 %v2510
        %v2543 = vunpack.c.l.b16 %v2511
        %v2544 = vunpack.c.l.b16 %v2512
        %v2545 = vunpack.c.l.b16 %v2513
        %v2546 = vunpack.c.l.b16 %v2514
        %v2547 = vunpack.c.l.b16 %v2515
        %v2548 = vunpack.c.l.b16 %v2516
        %v2549 = vunpack.c.l.b16 %v2517
        %v2550 = vunpack.c.l.b16 %v2518
        %v2551 = vpack.c.b16 %v2536, %v2535
        %v2552 = vpack.c.b16 %v2538, %v2537
        %v2553 = vpack.c.b16 %v2540, %v2539
        %v2554 = vpack.c.b16 %v2542, %v2541
        %v2555 = vpack.c.b16 %v2544, %v2543
        %v2556 = vpack.c.b16 %v2546, %v2545
        %v2557 = vpack.c.b16 %v2548, %v2547
        %v2558 = vpack.c.b16 %v2550, %v2549
        %2567 = vmatpush.bf16.msra.mxu0 %v2558
        %2568 = vmatpush.bf16.msra.mxu0 %v2557
        %2569 = vmatpush.bf16.msra.mxu0 %v2556
        %2570 = vmatpush.bf16.msra.mxu0 %v2555
        %2571 = vmatpush.bf16.msra.mxu0 %v2554
        %2572 = vmatpush.bf16.msra.mxu0 %v2553
        %2573 = vmatpush.bf16.msra.mxu0 %v2552
        %2574 = vmatpush.bf16.msra.mxu0 %v2551
        %2575 = vmatmul.bf16.gmra.mxu0 %v2501
        %v2576 = vpop.f32.mrf.mxu0
        %v2577 = vadd.f32 0.0, %v2576
        %v2578 = vpop.f32.mrf.mxu0
        %2579 = vdwg.mxu0
        %v2580 = vadd.f32 %v2497, %v2577
        %v2581 = vld [vmem:[#allocation3 + $0x3] sm:$0x1]
        %v2582 = vpack.c.bf16 %v2581, %v2581
        %s2583 = scalar_lea.vmem [#allocation7], 192
        %v2584 = vld [vmem:[%s2583] sm:$0xf]
        %v2585 = vld [vmem:[%s2583 + $0x4] sm:$0xf]
        %v2586 = vld [vmem:[%s2583 + $0x8] sm:$0xf]
        %v2587 = vld [vmem:[%s2583 + $0xc] sm:$0xf]
        %v2588 = vld [vmem:[%s2583 + $0x10] sm:$0xf]
        %v2589 = vld [vmem:[%s2583 + $0x14] sm:$0xf]
        %v2590 = vld [vmem:[%s2583 + $0x18] sm:$0xf]
        %v2591 = vld [vmem:[%s2583 + $0x1c] sm:$0xf]
        %v2592 = vld [vmem:[%s2583 + $0x20] sm:$0xf]
        %v2593 = vld [vmem:[%s2583 + $0x24] sm:$0xf]
        %v2594 = vld [vmem:[%s2583 + $0x28] sm:$0xf]
        %v2595 = vld [vmem:[%s2583 + $0x2c] sm:$0xf]
        %v2596 = vld [vmem:[%s2583 + $0x30] sm:$0xf]
        %v2597 = vld [vmem:[%s2583 + $0x34] sm:$0xf]
        %v2598 = vld [vmem:[%s2583 + $0x38] sm:$0xf]
        %v2599 = vld [vmem:[%s2583 + $0x3c] sm:$0xf]
        %v2616 = vunpack.c.l.b16 %v2584
        %v2617 = vunpack.c.l.b16 %v2585
        %v2618 = vunpack.c.l.b16 %v2586
        %v2619 = vunpack.c.l.b16 %v2587
        %v2620 = vunpack.c.l.b16 %v2588
        %v2621 = vunpack.c.l.b16 %v2589
        %v2622 = vunpack.c.l.b16 %v2590
        %v2623 = vunpack.c.l.b16 %v2591
        %v2624 = vunpack.c.l.b16 %v2592
        %v2625 = vunpack.c.l.b16 %v2593
        %v2626 = vunpack.c.l.b16 %v2594
        %v2627 = vunpack.c.l.b16 %v2595
        %v2628 = vunpack.c.l.b16 %v2596
        %v2629 = vunpack.c.l.b16 %v2597
        %v2630 = vunpack.c.l.b16 %v2598
        %v2631 = vunpack.c.l.b16 %v2599
        %v2632 = vpack.c.b16 %v2617, %v2616
        %v2633 = vpack.c.b16 %v2619, %v2618
        %v2634 = vpack.c.b16 %v2621, %v2620
        %v2635 = vpack.c.b16 %v2623, %v2622
        %v2636 = vpack.c.b16 %v2625, %v2624
        %v2637 = vpack.c.b16 %v2627, %v2626
        %v2638 = vpack.c.b16 %v2629, %v2628
        %v2639 = vpack.c.b16 %v2631, %v2630
        %2648 = vmatpush.bf16.msra.mxu0 %v2639
        %2649 = vmatpush.bf16.msra.mxu0 %v2638
        %2650 = vmatpush.bf16.msra.mxu0 %v2637
        %2651 = vmatpush.bf16.msra.mxu0 %v2636
        %2652 = vmatpush.bf16.msra.mxu0 %v2635
        %2653 = vmatpush.bf16.msra.mxu0 %v2634
        %2654 = vmatpush.bf16.msra.mxu0 %v2633
        %2655 = vmatpush.bf16.msra.mxu0 %v2632
        %2656 = vmatmul.bf16.gmra.mxu0 %v2582
        %v2657 = vpop.f32.mrf.mxu0
        %v2658 = vadd.f32 0.0, %v2657
        %v2659 = vpop.f32.mrf.mxu0
        %2660 = vdwg.mxu0
        %v2661 = vadd.f32 %v2580, %v2658
        %v2662 = vld [vmem:[#allocation3 + $0x4] sm:$0x1]
        %v2663 = vpack.c.bf16 %v2662, %v2662
        %s2664 = scalar_lea.vmem [#allocation7], 256
        %v2665 = vld [vmem:[%s2664] sm:$0xf]
        %v2666 = vld [vmem:[%s2664 + $0x4] sm:$0xf]
        %v2667 = vld [vmem:[%s2664 + $0x8] sm:$0xf]
        %v2668 = vld [vmem:[%s2664 + $0xc] sm:$0xf]
        %v2669 = vld [vmem:[%s2664 + $0x10] sm:$0xf]
        %v2670 = vld [vmem:[%s2664 + $0x14] sm:$0xf]
        %v2671 = vld [vmem:[%s2664 + $0x18] sm:$0xf]
        %v2672 = vld [vmem:[%s2664 + $0x1c] sm:$0xf]
        %v2673 = vld [vmem:[%s2664 + $0x20] sm:$0xf]
        %v2674 = vld [vmem:[%s2664 + $0x24] sm:$0xf]
        %v2675 = vld [vmem:[%s2664 + $0x28] sm:$0xf]
        %v2676 = vld [vmem:[%s2664 + $0x2c] sm:$0xf]
        %v2677 = vld [vmem:[%s2664 + $0x30] sm:$0xf]
        %v2678 = vld [vmem:[%s2664 + $0x34] sm:$0xf]
        %v2679 = vld [vmem:[%s2664 + $0x38] sm:$0xf]
        %v2680 = vld [vmem:[%s2664 + $0x3c] sm:$0xf]
        %v2697 = vunpack.c.l.b16 %v2665
        %v2698 = vunpack.c.l.b16 %v2666
        %v2699 = vunpack.c.l.b16 %v2667
        %v2700 = vunpack.c.l.b16 %v2668
        %v2701 = vunpack.c.l.b16 %v2669
        %v2702 = vunpack.c.l.b16 %v2670
        %v2703 = vunpack.c.l.b16 %v2671
        %v2704 = vunpack.c.l.b16 %v2672
        %v2705 = vunpack.c.l.b16 %v2673
        %v2706 = vunpack.c.l.b16 %v2674
        %v2707 = vunpack.c.l.b16 %v2675
        %v2708 = vunpack.c.l.b16 %v2676
        %v2709 = vunpack.c.l.b16 %v2677
        %v2710 = vunpack.c.l.b16 %v2678
        %v2711 = vunpack.c.l.b16 %v2679
        %v2712 = vunpack.c.l.b16 %v2680
        %v2713 = vpack.c.b16 %v2698, %v2697
        %v2714 = vpack.c.b16 %v2700, %v2699
        %v2715 = vpack.c.b16 %v2702, %v2701
        %v2716 = vpack.c.b16 %v2704, %v2703
        %v2717 = vpack.c.b16 %v2706, %v2705
        %v2718 = vpack.c.b16 %v2708, %v2707
        %v2719 = vpack.c.b16 %v2710, %v2709
        %v2720 = vpack.c.b16 %v2712, %v2711
        %2729 = vmatpush.bf16.msra.mxu0 %v2720
        %2730 = vmatpush.bf16.msra.mxu0 %v2719
        %2731 = vmatpush.bf16.msra.mxu0 %v2718
        %2732 = vmatpush.bf16.msra.mxu0 %v2717
        %2733 = vmatpush.bf16.msra.mxu0 %v2716
        %2734 = vmatpush.bf16.msra.mxu0 %v2715
        %2735 = vmatpush.bf16.msra.mxu0 %v2714
        %2736 = vmatpush.bf16.msra.mxu0 %v2713
        %2737 = vmatmul.bf16.gmra.mxu0 %v2663
        %v2738 = vpop.f32.mrf.mxu0
        %v2739 = vadd.f32 0.0, %v2738
        %v2740 = vpop.f32.mrf.mxu0
        %2741 = vdwg.mxu0
        %v2742 = vadd.f32 %v2661, %v2739
        %v2743 = vld [vmem:[%s6] sm:$0x1]
        %v2744 = vadd.f32 %v2742, %v2743
        %vm2745 = vcmp.gt.f32.partialorder %v2744, 0.0
        %v2746 = vmul.f32 %v2744, 0.01
        %v2747 = vsel %vm2745, %v2744, %v2746
        %v2748 = vpack.c.bf16 %v2747, %v2747
        %v2749 = vld [vmem:[%s7] sm:$0xf]
        %v2750 = vld [vmem:[%s7 + $0x4] sm:$0xf]
        %v2751 = vld [vmem:[%s7 + $0x8] sm:$0xf]
        %v2752 = vld [vmem:[%s7 + $0xc] sm:$0xf]
        %v2753 = vld [vmem:[%s7 + $0x10] sm:$0xf]
        %v2754 = vld [vmem:[%s7 + $0x14] sm:$0xf]
        %v2755 = vld [vmem:[%s7 + $0x18] sm:$0xf]
        %v2756 = vld [vmem:[%s7 + $0x1c] sm:$0xf]
        %v2757 = vld [vmem:[%s7 + $0x20] sm:$0xf]
        %v2758 = vld [vmem:[%s7 + $0x24] sm:$0xf]
        %v2759 = vld [vmem:[%s7 + $0x28] sm:$0xf]
        %v2760 = vld [vmem:[%s7 + $0x2c] sm:$0xf]
        %v2761 = vld [vmem:[%s7 + $0x30] sm:$0xf]
        %v2762 = vld [vmem:[%s7 + $0x34] sm:$0xf]
        %v2763 = vld [vmem:[%s7 + $0x38] sm:$0xf]
        %v2764 = vld [vmem:[%s7 + $0x3c] sm:$0xf]
        %v2765 = vld [vmem:[%s8] sm:$0x1]
        %v2782 = vunpack.c.l.b16 %v2749
        %v2783 = vunpack.c.l.b16 %v2750
        %v2784 = vunpack.c.l.b16 %v2751
        %v2785 = vunpack.c.l.b16 %v2752
        %v2786 = vunpack.c.l.b16 %v2753
        %v2787 = vunpack.c.l.b16 %v2754
        %v2788 = vunpack.c.l.b16 %v2755
        %v2789 = vunpack.c.l.b16 %v2756
        %v2790 = vunpack.c.l.b16 %v2757
        %v2791 = vunpack.c.l.b16 %v2758
        %v2792 = vunpack.c.l.b16 %v2759
        %v2793 = vunpack.c.l.b16 %v2760
        %v2794 = vunpack.c.l.b16 %v2761
        %v2795 = vunpack.c.l.b16 %v2762
        %v2796 = vunpack.c.l.b16 %v2763
        %v2797 = vunpack.c.l.b16 %v2764
        %v2798 = vpack.c.b16 %v2783, %v2782
        %v2799 = vpack.c.b16 %v2785, %v2784
        %v2800 = vpack.c.b16 %v2787, %v2786
        %v2801 = vpack.c.b16 %v2789, %v2788
        %v2802 = vpack.c.b16 %v2791, %v2790
        %v2803 = vpack.c.b16 %v2793, %v2792
        %v2804 = vpack.c.b16 %v2795, %v2794
        %v2805 = vpack.c.b16 %v2797, %v2796
        %2814 = vmatpush.bf16.msra.mxu0 %v2805
        %2815 = vmatpush.bf16.msra.mxu0 %v2804
        %2816 = vmatpush.bf16.msra.mxu0 %v2803
        %2817 = vmatpush.bf16.msra.mxu0 %v2802
        %2818 = vmatpush.bf16.msra.mxu0 %v2801
        %2819 = vmatpush.bf16.msra.mxu0 %v2800
        %2820 = vmatpush.bf16.msra.mxu0 %v2799
        %2821 = vmatpush.bf16.msra.mxu0 %v2798
        %2822 = vmatmul.bf16.gmra.mxu0 %v2748
        %v2823 = vpop.f32.mrf.mxu0
        %v2824 = vadd.f32 %v2765, %v2823
        %v2825 = vpop.f32.mrf.mxu0
        %2826 = vdwg.mxu0
        %vm2827 = vcmp.gt.f32.partialorder %v2824, 0.0
        %v2828 = vmul.f32 %v2824, 0.01
        %v2829 = vsel %vm2827, %v2824, %v2828
        %v2830 = vpack.c.bf16 %v2829, %v2829
        %v2831 = vld [vmem:[%s9] sm:$0xf]
        %v2832 = vld [vmem:[%s9 + $0x4] sm:$0xf]
        %v2833 = vld [vmem:[%s9 + $0x8] sm:$0xf]
        %v2834 = vld [vmem:[%s9 + $0xc] sm:$0xf]
        %v2835 = vld [vmem:[%s9 + $0x10] sm:$0xf]
        %v2836 = vld [vmem:[%s9 + $0x14] sm:$0xf]
        %v2837 = vld [vmem:[%s9 + $0x18] sm:$0xf]
        %v2838 = vld [vmem:[%s9 + $0x1c] sm:$0xf]
        %v2839 = vld [vmem:[%s9 + $0x20] sm:$0xf]
        %v2840 = vld [vmem:[%s9 + $0x24] sm:$0xf]
        %v2841 = vld [vmem:[%s9 + $0x28] sm:$0xf]
        %v2842 = vld [vmem:[%s9 + $0x2c] sm:$0xf]
        %v2843 = vld [vmem:[%s9 + $0x30] sm:$0xf]
        %v2844 = vld [vmem:[%s9 + $0x34] sm:$0xf]
        %v2845 = vld [vmem:[%s9 + $0x38] sm:$0xf]
        %v2846 = vld [vmem:[%s9 + $0x3c] sm:$0xf]
        %v2847 = vld [vmem:[%s10] sm:$0x1]
        %v2864 = vunpack.c.l.b16 %v2831
        %v2865 = vunpack.c.l.b16 %v2832
        %v2866 = vunpack.c.l.b16 %v2833
        %v2867 = vunpack.c.l.b16 %v2834
        %v2868 = vunpack.c.l.b16 %v2835
        %v2869 = vunpack.c.l.b16 %v2836
        %v2870 = vunpack.c.l.b16 %v2837
        %v2871 = vunpack.c.l.b16 %v2838
        %v2872 = vunpack.c.l.b16 %v2839
        %v2873 = vunpack.c.l.b16 %v2840
        %v2874 = vunpack.c.l.b16 %v2841
        %v2875 = vunpack.c.l.b16 %v2842
        %v2876 = vunpack.c.l.b16 %v2843
        %v2877 = vunpack.c.l.b16 %v2844
        %v2878 = vunpack.c.l.b16 %v2845
        %v2879 = vunpack.c.l.b16 %v2846
        %v2880 = vpack.c.b16 %v2865, %v2864
        %v2881 = vpack.c.b16 %v2867, %v2866
        %v2882 = vpack.c.b16 %v2869, %v2868
        %v2883 = vpack.c.b16 %v2871, %v2870
        %v2884 = vpack.c.b16 %v2873, %v2872
        %v2885 = vpack.c.b16 %v2875, %v2874
        %v2886 = vpack.c.b16 %v2877, %v2876
        %v2887 = vpack.c.b16 %v2879, %v2878
        %2896 = vmatpush.bf16.msra.mxu0 %v2887
        %2897 = vmatpush.bf16.msra.mxu0 %v2886
        %2898 = vmatpush.bf16.msra.mxu0 %v2885
        %2899 = vmatpush.bf16.msra.mxu0 %v2884
        %2900 = vmatpush.bf16.msra.mxu0 %v2883
        %2901 = vmatpush.bf16.msra.mxu0 %v2882
        %2902 = vmatpush.bf16.msra.mxu0 %v2881
        %2903 = vmatpush.bf16.msra.mxu0 %v2880
        %2904 = vmatmul.bf16.gmra.mxu0 %v2830
        %v2905 = vpop.f32.mrf.mxu0
        %v2906 = vadd.f32 %v2847, %v2905
        %v2907 = vpop.f32.mrf.mxu0
        %2908 = vdwg.mxu0
        %2909 = vst [vmem:[%s412] sm:$0x1] %v2906
        %s2910 = sand.u32 %s271, 1
        %s2911 = scalar_lea.sflag [#allocation6], %s2910
        %s2912 = sand.u32 %s271, 1
        %s2913 = scalar_lea.vmem [#allocation9], %s2912
        // Predicated region
        $region73: #{cnn_lerelu_forward.1} parent=63 // pred_check
          %p2914 = pneg %p281
        $region74: #{cnn_lerelu_forward.1} parent=63 // pred_check_branch
          %2916 = sbr.rel (%p2914) target = $region76
        $region75: #{cnn_lerelu_forward.1} parent=63 // pred_region
          %2918 = vsyncadd %s2911, 0
          %s2919 = scalar_lea.hbm %s11, %s27
          %s2921 = sshll.u32 %s2913, 4
          %s2922 = int_to_ptr.vmem [resolvable:$true] %s2921
          %s2923 = sshll.u32 %s2919, 4
          %s2924 = int_to_ptr.hbm [resolvable:$true] %s2923
          %2926 = dma.vmem_to_hbm [thread:$0]  %s2922, 16, %s2924, %s2911
        $region76: #{cnn_lerelu_forward.1} parent=63 // pred_fallthru
          _
      $region64: #{cnn_lerelu_forward.1} parent=5 // pred_fallthru
        _
      %p2927 = scmp.le.s32.totalorder 2, %s22
      // Predicated region
      $region77: #{cnn_lerelu_forward.1} parent=5 // pred_check
        %p2928 = pneg %p2927
      $region78: #{cnn_lerelu_forward.1} parent=5 // pred_check_branch
        %2930 = sbr.rel (%p2928) target = $region80
      $region79: #{cnn_lerelu_forward.1} parent=5 // pred_region
        %s2931 = ssub.s32 %s22, 2
        // Predicated region
        $region81: #{cnn_lerelu_forward.1} parent=79 // pred_check
          %p2932 = pneg %p287
        $region82: #{cnn_lerelu_forward.1} parent=79 // pred_check_branch
          %2934 = sbr.rel (%p2932) target = $region84
        $region83: #{cnn_lerelu_forward.1} parent=79 // pred_region
          %s2935 = sand.u32 %s272, 1
          %s2936 = scalar_lea.sflag [#allocation6], %s2935
          %s2937 = sand.u32 %s272, 1
          %s2938 = scalar_lea.vmem [#allocation9], %s2937
          %2940 = dma.done %s2936, 16
        $region84: #{cnn_lerelu_forward.1} parent=79 // pred_fallthru
          _
      $region80: #{cnn_lerelu_forward.1} parent=5 // pred_fallthru
        _
    $region6: #{cnn_lerelu_forward.1} parent=1 // loop_footer
      %s26 = sadd.s32 1, %s22
    $region7: #{cnn_lerelu_forward.1} parent=1 // loop_footer_branch
      %21 = sbr.rel target = $region3
    $region8: #{cnn_lerelu_forward.1} parent=1 // loop_exit
      _
    %2941 = vsyncpa [#allocation5], 1
    %s2942 = scalar_lea.sflag [#allocation5], 1
    %2943 = vsyncpa %s2942, 1
    %2944 = vsyncpa [#allocation8], 1
    %2945 = vsyncpa [#allocation6], 1
    %s2946 = scalar_lea.sflag [#allocation6], 1
    %2947 = vsyncpa %s2946, 1

</llo_original>
